<compile_context>
chip_gen: v7x
topology: tpu7x:2x2x1
jax: 0.10.0
libtpu: 0.0.40
codegen_flags: <defaults>
</compile_context>

<pallas_src>
import numpy as np
import jax
import jax.numpy as jnp
from jax import lax
from jax.experimental import pallas as pl
from jax.experimental.pallas import tpu as pltpu


# ----------------------------------------------------------------------------
# Host-side: build the fixed part of the quantum circuit as a 16x16 unitary
# (complex128), and the constants describing the RX product-state embedding.
# ----------------------------------------------------------------------------
def _rx(t):
    c, s = np.cos(t / 2.0), np.sin(t / 2.0)
    return np.array([[c, -1j * s], [-1j * s, c]], dtype=np.complex128)


def _ry(t):
    c, s = np.cos(t / 2.0), np.sin(t / 2.0)
    return np.array([[c, -s], [s, c]], dtype=np.complex128)


def _rz(t):
    return np.array([[np.exp(-1j * t / 2.0), 0.0],
                     [0.0, np.exp(1j * t / 2.0)]], dtype=np.complex128)


def _rot(phi, theta, omega):
    # PennyLane Rot(phi, theta, omega) = RZ(omega) RY(theta) RZ(phi)
    return _rz(omega) @ _ry(theta) @ _rz(phi)


def _single_qubit(gate, wire, n):
    mats = [np.eye(2, dtype=np.complex128)] * n
    mats[wire] = gate
    out = mats[0]
    for m in mats[1:]:
        out = np.kron(out, m)   # wire 0 = most significant bit (PennyLane order)
    return out


def _cnot(control, target, n):
    dim = 2 ** n
    U = np.zeros((dim, dim), dtype=np.complex128)
    for b in range(dim):
        cbit = (b >> (n - 1 - control)) & 1
        j = b ^ (1 << (n - 1 - target)) if cbit else b
        U[j, b] = 1.0
    return U


def build_fixed_unitary(entangle_w, gate_w, n_qubits):
    """Everything after AngleEmbedding: SEL(1 layer) + RY gates + CNOT chain."""
    U = np.eye(2 ** n_qubits, dtype=np.complex128)

    def apply(G):
        nonlocal U
        U = G @ U

    # StronglyEntanglingLayers, layer 0: Rot per wire, then CNOT ring (range 1)
    for w in range(n_qubits):
        phi, theta, omega = entangle_w[0, w]
        apply(_single_qubit(_rot(phi, theta, omega), w, n_qubits))
    for i in range(n_qubits):
        apply(_cnot(i, (i + 1) % n_qubits, n_qubits))
    # Per-qubit RY(gate_weights[i])
    for w in range(n_qubits):
        apply(_single_qubit(_ry(gate_w[w]), w, n_qubits))
    # CNOT chain 0->1->2->3
    for i in range(n_qubits - 1):
        apply(_cnot(i, i + 1, n_qubits))
    return U


def quantum_constants(n_qubits):
    """bits (NQ, DIM) float32; phase (DIM,) complex128; zsign (DIM, NQ) float32."""
    dim = 2 ** n_qubits
    bits = np.zeros((n_qubits, dim), dtype=np.float32)
    for b in range(dim):
        for k in range(n_qubits):
            bits[k, b] = (b >> (n_qubits - 1 - k)) & 1
    pop = bits.sum(axis=0).astype(np.int64)
    phase = (-1j) ** pop                                  # RX embedding phase
    zsign = (1.0 - 2.0 * bits.T).astype(np.float32)       # (DIM, NQ)
    return bits, phase, zsign


# ----------------------------------------------------------------------------
# Fused Pallas kernel: all layers, full sequence, one call, batch on lanes.
# ----------------------------------------------------------------------------
_PER_LAYER = 3   # Wb (NQ, Din+H+1), Vcat (2*DIM, DIM), zsT (4*H, 2*DIM)
_LANE = 128      # batch tile mapped to the 128-lane axis


def make_qlstm_kernel(dins, H, NQ, DIM, T, BT, n_layers):
    half_pi = np.float32(np.pi * 0.5)
    n_in = 2 + _PER_LAYER * n_layers

    def kernel(*refs):
        x_ref = refs[0]                     # (T, Din0, BT)  batch on lanes
        bits_ref = refs[1]                  # (DIM, NQ)      shared constants
        layer_refs = refs[2:n_in]
        out_ref = refs[n_in]                # (H, BT)
        lin_scr = refs[n_in + 1]            # (T, NQ, BT)    VMEM scratch
        hseq_scr = refs[n_in + 2] if n_layers > 1 else None  # (T, H, BT)

        # Basis-state bit masks, broadcast ONCE to full lane width; shared by
        # every layer and timestep (mul-add select, no per-step re-broadcast).
        bitsT = bits_ref[...]
        masks = [jnp.broadcast_to(bitsT[:, k:k + 1], (DIM, BT)) for k in range(NQ)]
        nmasks = [1.0 - m for m in masks]

        h = None
        for l in range(n_layers):
            wb_ref, vcat_ref, zs_ref = \
                layer_refs[l * _PER_LAYER:(l + 1) * _PER_LAYER]
            din = dins[l]
            Wb = wb_ref[...]                              # (NQ, din+H+1)
            wxT = Wb[:, :din]                             # (NQ, din)
            whT = Wb[:, din:din + H]                      # (NQ, H)
            bias = jnp.broadcast_to(Wb[:, din + H:din + H + 1], (NQ, BT))
            vcat = vcat_ref[...]                          # (2*DIM, DIM)
            zsT = zs_ref[...]                             # (4*H, 2*DIM)

            # Recurrent weights as hoisted lane-broadcast vregs: the tiny
            # (H x NQ) h·Wh projection runs on the VPU as H fused mul-adds
            # instead of a dependent MXU push/pop on the h->h critical path.
            whT_b = [jnp.broadcast_to(whT[:, j:j + 1], (NQ, BT)) for j in range(H)]

            # ---- input projections hoisted OFF the recurrence chain --------
            # (independent small matmuls, written to a bounded VMEM scratch).
            if l == 0:
                for t in range(T):
                    lin_scr[t] = jnp.dot(
                        wxT, x_ref[t], preferred_element_type=jnp.float32) + bias
            else:
                for t in range(T):
                    lin_scr[t] = jnp.dot(
                        wxT, hseq_scr[t], preferred_element_type=jnp.float32) + bias

            write_seq = (l + 1 < n_layers)

            def step(t, carry):
                h, c = carry                               # (H, BT) each
                lin = lin_scr[t]                           # (NQ, BT)
                # h·Wh on the VPU (lane-dense broadcast FMA chain).
                rec = whT_b[0] * h[0:1, :]
                for j in range(1, H):
                    rec = rec + whT_b[j] * h[j:j + 1, :]
                lin = lin + rec
                half = jnp.tanh(lin) * half_pi             # (NQ, BT)
                cosv = jnp.cos(half)
                sinv = jnp.sin(half)
                # Product-state magnitudes over the 2^NQ basis states.
                mag = sinv[0:1, :] * masks[0] + cosv[0:1, :] * nmasks[0]
                for k in range(1, NQ):
                    mag = mag * (sinv[k:k + 1, :] * masks[k]
                                 + cosv[k:k + 1, :] * nmasks[k])   # (DIM, BT)
                # [Re(U psi); Im(U psi)] in one MXU push (phase folded into V).
                f_all = jnp.dot(vcat, mag,
                                preferred_element_type=jnp.float32)  # (2DIM, BT)
                # probs -> all four gates at once, lane-dense over batch.
                q = jnp.dot(zsT, f_all * f_all,
                            preferred_element_type=jnp.float32)      # (4H, BT)
                s = jax.nn.sigmoid(q)                      # single EUP pass
                i_g = s[0:H]
                f_g = s[H:2 * H]
                o_g = s[2 * H:3 * H]
                g_g = 2.0 * s[3 * H:4 * H] - 1.0           # tanh(q3)=2*sig(2q3)-1
                c = f_g * c + i_g * g_g
                h = o_g * jnp.tanh(c)
                if write_seq:
                    hseq_scr[t] = h                        # feed next layer
                return (h, c)

            h0 = jnp.zeros((H, BT), jnp.float32)
            c0 = jnp.zeros((H, BT), jnp.float32)
            h, _ = lax.fori_loop(0, T, step, (h0, c0), unroll=True)

        out_ref[...] = h                    # (H, BT): lane-dense unmasked store
    return kernel


def qlstm_forward(x, layer_params):
    """x: (B, T, Din) as in PyTorch. Returns last layer's h at final t, (B, H)."""
    B, T, DIN = x.shape
    n_layers = len(layer_params)
    H = layer_params[-1]["H"]
    NQ = layer_params[0]["NQ"]
    DIM = layer_params[0]["DIM"]
    dins = [p["Din"] for p in layer_params]

    # Batch on lanes: pad B up to a multiple of 128. Padded columns compute
    # bias-only garbage and are discarded by the [:B] slice (wasted lanes only).
    Bp = ((B + _LANE - 1) // _LANE) * _LANE
    xp = jnp.zeros((Bp, T, DIN), jnp.float32).at[:B].set(x.astype(jnp.float32))
    x_k = jnp.transpose(xp, (1, 2, 0))                 # (T, Din, Bp)

    bitsT = layer_params[0]["bitsT"]                   # (DIM, NQ), shared
    flat = []
    for p in layer_params:
        flat.extend(p["kernel"])                       # Wb, Vcat, zsT per layer

    # Parallel batch-tile grid: on v7x independent batch tiles can be sharded
    # across both TensorCores; on v5e/v6e it simply pipelines the x DMA.
    grid = (Bp // _LANE,)
    in_specs = [
        pl.BlockSpec((T, DIN, _LANE), lambda b: (0, 0, b)),
        pl.BlockSpec(bitsT.shape, lambda b: (0, 0)),
    ]
    for arr in flat:
        in_specs.append(pl.BlockSpec(arr.shape, lambda b: (0, 0)))
    out_specs = pl.BlockSpec((H, _LANE), lambda b: (0, b))

    scratch = [pltpu.VMEM((T, NQ, _LANE), jnp.float32)]       # hoisted projections
    if n_layers > 1:
        scratch.append(pltpu.VMEM((T, H, _LANE), jnp.float32))  # h-seq for next layer

    # TODO(synk): optional bf16 pre-cast of Vcat/zsT for v6e/v7x MXU (needs the
    # 1e-4 tolerance re-validated since amplitudes are squared); kept f32 here.
    out = pl.pallas_call(
        make_qlstm_kernel(dins, H, NQ, DIM, T, _LANE, n_layers),
        out_shape=jax.ShapeDtypeStruct((H, Bp), jnp.float32),
        grid=grid,
        in_specs=in_specs,
        out_specs=out_specs,
        scratch_shapes=scratch,
        compiler_params=pltpu.CompilerParams(
            dimension_semantics=("parallel",),
            vmem_limit_bytes=32 * 1024 * 1024),
    )(x_k, bitsT, *flat)
    return out[:, :B].T


# ----------------------------------------------------------------------------
# Deterministic parameter initialization (synthetic; no checkpoint loading).
# ----------------------------------------------------------------------------
def init_layer(key, in_dim, hidden_dim, n_qubits):
    k1, k2, k3, k4 = jax.random.split(key, 4)
    fan_in = in_dim + hidden_dim
    bound = 1.0 / np.sqrt(fan_in)
    W = np.asarray(jax.random.uniform(k1, (n_qubits, fan_in), jnp.float32,
                                      -bound, bound))
    b = np.asarray(jax.random.uniform(k2, (n_qubits,), jnp.float32,
                                      -bound, bound))
    entangle_w = np.asarray(
        jax.random.uniform(k3, (1, n_qubits, 3), jnp.float32, 0.0, 2 * np.pi),
        dtype=np.float64)
    gate_w = np.asarray(
        jax.random.uniform(k4, (n_qubits,), jnp.float32, 0.0, 2 * np.pi),
        dtype=np.float64)

    U = build_fixed_unitary(entangle_w, gate_w, n_qubits)      # complex128
    bits, phase, zsign = quantum_constants(n_qubits)
    dim = 2 ** n_qubits
    H = hidden_dim

    # --- kernel-side folded constants (complex128 math, cast once) ---------
    V = U @ np.diag(phase)                                     # fold RX phase
    vcat = np.concatenate([np.real(V), np.imag(V)],
                          axis=0).astype(np.float32)           # (2*DIM, DIM)
    zsign_exp = np.concatenate(
        [np.repeat(zsign[:, 0:1], H, axis=1),          # i  -> sigmoid
         np.repeat(zsign[:, 1:2], H, axis=1),          # f  -> sigmoid
         np.repeat(zsign[:, 2:3], H, axis=1),          # o  -> sigmoid
         2.0 * np.repeat(zsign[:, 3:4], H, axis=1)],   # g  -> tanh via 2x trick
        axis=1).astype(np.float32)                             # (DIM, 4H)
    zsT = np.concatenate([zsign_exp, zsign_exp],
                         axis=0).T.astype(np.float32)          # (4H, 2*DIM)
    Wb = np.concatenate([W, b[:, None]], axis=1).astype(np.float32)  # (NQ, in+H+1)
    bitsT = bits.T.astype(np.float32)                          # (DIM, NQ)

    kernel_params = (jnp.asarray(Wb), jnp.asarray(vcat), jnp.asarray(zsT))

    # --- reference-side (unfolded, original-style) constants ---------------
    phr = np.real(phase).astype(np.float32)[None, :]           # (1, DIM)
    phim = np.imag(phase).astype(np.float32)[None, :]
    ref_params = (jnp.asarray(W, jnp.float32), jnp.asarray(b, jnp.float32),
                  jnp.asarray(np.real(U).astype(np.float32)),
                  jnp.asarray(np.imag(U).astype(np.float32)),
                  jnp.asarray(bits), jnp.asarray(phr), jnp.asarray(phim),
                  jnp.asarray(zsign))

    return {"kernel": kernel_params, "ref": ref_params,
            "bitsT": jnp.asarray(bitsT), "Din": in_dim, "H": H,
            "NQ": n_qubits, "DIM": dim}


# ----------------------------------------------------------------------------
# Pure-JAX reference (original, unfolded formulation) for a sanity check.
# ----------------------------------------------------------------------------
def reference_forward(x, layer_params):
    inp = jnp.transpose(x.astype(jnp.float32), (1, 0, 2))      # (T, B, Din)
    T, B, _ = inp.shape
    for p in layer_params:
        W, b, Ur, Ui, bits, phr, phim, zsign = p["ref"]
        H, NQ, DIM = p["H"], p["NQ"], p["DIM"]
        h = jnp.zeros((B, H), jnp.float32)
        c = jnp.zeros((B, H), jnp.float32)
        hs = []
        for t in range(T):
            comb = jnp.concatenate([inp[t], h], axis=1)
            lin = comb @ W.T + b
            half = jnp.tanh(lin) * np.float32(np.pi) * 0.5
            cosv, sinv = jnp.cos(half), jnp.sin(half)
            mag = jnp.ones((B, DIM), jnp.float32)
            for k in range(NQ):
                mag = mag * jnp.where(bits[k][None, :] > 0.5,
                                      sinv[:, k:k + 1], cosv[:, k:k + 1])
            pr, pim = mag * phr, mag * phim
            fr = pr @ Ur.T - pim @ Ui.T
            fi = pr @ Ui.T + pim @ Ur.T
            q = (fr * fr + fi * fi) @ zsign
            i_g = jax.nn.sigmoid(q[:, 0:1]); f_g = jax.nn.sigmoid(q[:, 1:2])
            o_g = jax.nn.sigmoid(q[:, 2:3]); g_g = jnp.tanh(q[:, 3:4])
            c = f_g * c + i_g * g_g
            h = o_g * jnp.tanh(c)
            hs.append(h)
        inp = jnp.stack(hs, axis=0)
    return inp[-1]


if __name__ == "__main__":
    # Shapes implied by the module: batch=5, seq=7, input_dim=10,
    # hidden_dim=8, n_qubits=4, n_layers=1.
    B, T, DIN, HID, NQ, NL = 5, 7, 10, 8, 4, 1

    key = jax.random.PRNGKey(0)
    kx, kp = jax.random.split(key)
    x = jax.random.normal(kx, (B, T, DIN), dtype=jnp.float32)

    layer_keys = jax.random.split(kp, NL)
    layer_params = []
    for i in range(NL):
        in_dim = DIN if i == 0 else HID
        layer_params.append(init_layer(layer_keys[i], in_dim, HID, NQ))

    out = jax.block_until_ready(qlstm_forward(x, layer_params))
    assert out.shape == (B, HID), out.shape

    ref = jax.block_until_ready(reference_forward(x, layer_params))
    np.testing.assert_allclose(np.asarray(out), np.asarray(ref),
                               rtol=2e-4, atol=2e-5)
    print("KERNEL_OK")
</pallas_src>

<mosaic_0001>
module attributes {stable_mosaic.version = 11 : i64} {
  func.func @kernel(%arg0: i32, %arg1: memref<7x10x128xf32, #tpu.memory_space<vmem>>, %arg2: memref<16x4xf32, #tpu.memory_space<vmem>>, %arg3: memref<4x19xf32, #tpu.memory_space<vmem>>, %arg4: memref<32x16xf32, #tpu.memory_space<vmem>>, %arg5: memref<32x32xf32, #tpu.memory_space<vmem>>, %arg6: memref<8x128xf32, #tpu.memory_space<vmem>>, %arg7: memref<7x4x128xf32, #tpu.memory_space<vmem>>) attributes {dimension_semantics = [#tpu.dimension_semantics<parallel>], iteration_bounds = array<i64: 1>, scalar_prefetch = 0 : i64, scratch_operands = 1 : i64, tpu.core_type = #tpu.core_type<tc>, window_params = [{transform_indices = @transform_0, window_bounds = array<i64: 7, 10, 128>}, {pipeline_mode = #tpu.pipeline_mode<synchronous>, transform_indices = @transform_1, window_bounds = array<i64: 16, 4>}, {pipeline_mode = #tpu.pipeline_mode<synchronous>, transform_indices = @transform_2, window_bounds = array<i64: 4, 19>}, {pipeline_mode = #tpu.pipeline_mode<synchronous>, transform_indices = @transform_3, window_bounds = array<i64: 32, 16>}, {pipeline_mode = #tpu.pipeline_mode<synchronous>, transform_indices = @transform_4, window_bounds = array<i64: 32, 32>}, {transform_indices = @transform_5, window_bounds = array<i64: 8, 128>}]} {
    %c0 = arith.constant 0 : index
    %c0_0 = arith.constant 0 : index
    %0 = vector.load %arg2[%c0, %c0_0] : memref<16x4xf32, #tpu.memory_space<vmem>>, vector<16x4xf32>
    %1 = vector.extract_strided_slice %0 {offsets = [0, 0], sizes = [16, 1], strides = [1, 1]} : vector<16x4xf32> to vector<16x1xf32>
    %2 = vector.shape_cast %1 : vector<16x1xf32> to vector<16x1xf32>
    %3 = vector.broadcast %2 : vector<16x1xf32> to vector<16x128xf32>
    %4 = vector.extract_strided_slice %0 {offsets = [0, 1], sizes = [16, 1], strides = [1, 1]} : vector<16x4xf32> to vector<16x1xf32>
    %5 = vector.shape_cast %4 : vector<16x1xf32> to vector<16x1xf32>
    %6 = vector.broadcast %5 : vector<16x1xf32> to vector<16x128xf32>
    %7 = vector.extract_strided_slice %0 {offsets = [0, 2], sizes = [16, 1], strides = [1, 1]} : vector<16x4xf32> to vector<16x1xf32>
    %8 = vector.shape_cast %7 : vector<16x1xf32> to vector<16x1xf32>
    %9 = vector.broadcast %8 : vector<16x1xf32> to vector<16x128xf32>
    %10 = vector.extract_strided_slice %0 {offsets = [0, 3], sizes = [16, 1], strides = [1, 1]} : vector<16x4xf32> to vector<16x1xf32>
    %11 = vector.shape_cast %10 : vector<16x1xf32> to vector<16x1xf32>
    %12 = vector.broadcast %11 : vector<16x1xf32> to vector<16x128xf32>
    %cst = arith.constant 1.000000e+00 : f32
    %13 = vector.broadcast %cst : f32 to vector<16x128xf32>
    %14 = arith.subf %13, %3 : vector<16x128xf32>
    %cst_1 = arith.constant 1.000000e+00 : f32
    %15 = vector.broadcast %cst_1 : f32 to vector<16x128xf32>
    %16 = arith.subf %15, %6 : vector<16x128xf32>
    %cst_2 = arith.constant 1.000000e+00 : f32
    %17 = vector.broadcast %cst_2 : f32 to vector<16x128xf32>
    %18 = arith.subf %17, %9 : vector<16x128xf32>
    %cst_3 = arith.constant 1.000000e+00 : f32
    %19 = vector.broadcast %cst_3 : f32 to vector<16x128xf32>
    %20 = arith.subf %19, %12 : vector<16x128xf32>
    %c0_4 = arith.constant 0 : index
    %c0_5 = arith.constant 0 : index
    %21 = vector.load %arg3[%c0_4, %c0_5] : memref<4x19xf32, #tpu.memory_space<vmem>>, vector<4x19xf32>
    %22 = vector.extract_strided_slice %21 {offsets = [0, 0], sizes = [4, 10], strides = [1, 1]} : vector<4x19xf32> to vector<4x10xf32>
    %23 = vector.extract_strided_slice %21 {offsets = [0, 10], sizes = [4, 8], strides = [1, 1]} : vector<4x19xf32> to vector<4x8xf32>
    %24 = vector.extract_strided_slice %21 {offsets = [0, 18], sizes = [4, 1], strides = [1, 1]} : vector<4x19xf32> to vector<4x1xf32>
    %25 = vector.shape_cast %24 : vector<4x1xf32> to vector<4x1xf32>
    %26 = vector.broadcast %25 : vector<4x1xf32> to vector<4x128xf32>
    %c0_6 = arith.constant 0 : index
    %c0_7 = arith.constant 0 : index
    %27 = vector.load %arg4[%c0_6, %c0_7] : memref<32x16xf32, #tpu.memory_space<vmem>>, vector<32x16xf32>
    %c0_8 = arith.constant 0 : index
    %c0_9 = arith.constant 0 : index
    %28 = vector.load %arg5[%c0_8, %c0_9] : memref<32x32xf32, #tpu.memory_space<vmem>>, vector<32x32xf32>
    %29 = vector.extract_strided_slice %23 {offsets = [0, 0], sizes = [4, 1], strides = [1, 1]} : vector<4x8xf32> to vector<4x1xf32>
    %30 = vector.shape_cast %29 : vector<4x1xf32> to vector<4x1xf32>
    %31 = vector.broadcast %30 : vector<4x1xf32> to vector<4x128xf32>
    %32 = vector.extract_strided_slice %23 {offsets = [0, 1], sizes = [4, 1], strides = [1, 1]} : vector<4x8xf32> to vector<4x1xf32>
    %33 = vector.shape_cast %32 : vector<4x1xf32> to vector<4x1xf32>
    %34 = vector.broadcast %33 : vector<4x1xf32> to vector<4x128xf32>
    %35 = vector.extract_strided_slice %23 {offsets = [0, 2], sizes = [4, 1], strides = [1, 1]} : vector<4x8xf32> to vector<4x1xf32>
    %36 = vector.shape_cast %35 : vector<4x1xf32> to vector<4x1xf32>
    %37 = vector.broadcast %36 : vector<4x1xf32> to vector<4x128xf32>
    %38 = vector.extract_strided_slice %23 {offsets = [0, 3], sizes = [4, 1], strides = [1, 1]} : vector<4x8xf32> to vector<4x1xf32>
    %39 = vector.shape_cast %38 : vector<4x1xf32> to vector<4x1xf32>
    %40 = vector.broadcast %39 : vector<4x1xf32> to vector<4x128xf32>
    %41 = vector.extract_strided_slice %23 {offsets = [0, 4], sizes = [4, 1], strides = [1, 1]} : vector<4x8xf32> to vector<4x1xf32>
    %42 = vector.shape_cast %41 : vector<4x1xf32> to vector<4x1xf32>
    %43 = vector.broadcast %42 : vector<4x1xf32> to vector<4x128xf32>
    %44 = vector.extract_strided_slice %23 {offsets = [0, 5], sizes = [4, 1], strides = [1, 1]} : vector<4x8xf32> to vector<4x1xf32>
    %45 = vector.shape_cast %44 : vector<4x1xf32> to vector<4x1xf32>
    %46 = vector.broadcast %45 : vector<4x1xf32> to vector<4x128xf32>
    %47 = vector.extract_strided_slice %23 {offsets = [0, 6], sizes = [4, 1], strides = [1, 1]} : vector<4x8xf32> to vector<4x1xf32>
    %48 = vector.shape_cast %47 : vector<4x1xf32> to vector<4x1xf32>
    %49 = vector.broadcast %48 : vector<4x1xf32> to vector<4x128xf32>
    %50 = vector.extract_strided_slice %23 {offsets = [0, 7], sizes = [4, 1], strides = [1, 1]} : vector<4x8xf32> to vector<4x1xf32>
    %51 = vector.shape_cast %50 : vector<4x1xf32> to vector<4x1xf32>
    %52 = vector.broadcast %51 : vector<4x1xf32> to vector<4x128xf32>
    %c0_10 = arith.constant 0 : index
    %c0_11 = arith.constant 0 : index
    %c0_12 = arith.constant 0 : index
    %53 = vector.load %arg1[%c0_10, %c0_11, %c0_12] : memref<7x10x128xf32, #tpu.memory_space<vmem>>, vector<1x10x128xf32>
    %54 = vector.shape_cast %53 : vector<1x10x128xf32> to vector<10x128xf32>
    %cst_13 = arith.constant dense<0.000000e+00> : vector<4x128xf32>
    %55 = tpu.matmul %22, %54, %cst_13 {dimension_numbers = #tpu.dot_dimension_numbers<[1], [0], [0], [1], [0, 0, 1, 1], [], []>} : vector<4x10xf32>, vector<10x128xf32>, vector<4x128xf32> -> vector<4x128xf32>
    %56 = arith.addf %55, %26 : vector<4x128xf32>
    %c0_14 = arith.constant 0 : index
    %c0_15 = arith.constant 0 : index
    %c0_16 = arith.constant 0 : index
    %57 = vector.load %arg7[%c0_14, %c0_15, %c0_16] : memref<7x4x128xf32, #tpu.memory_space<vmem>>, vector<1x4x128xf32>
    %58 = vector.shape_cast %57 : vector<1x4x128xf32> to vector<4x128xf32>
    %59 = vector.shape_cast %56 : vector<4x128xf32> to vector<1x4x128xf32>
    tpu.vector_store %arg7[%c0_14, %c0_15, %c0_16], %59 {strides = array<i32>} : memref<7x4x128xf32, #tpu.memory_space<vmem>>, vector<1x4x128xf32>,
    %c1 = arith.constant 1 : index
    %c0_17 = arith.constant 0 : index
    %c0_18 = arith.constant 0 : index
    %60 = vector.load %arg1[%c1, %c0_17, %c0_18] : memref<7x10x128xf32, #tpu.memory_space<vmem>>, vector<1x10x128xf32>
    %61 = vector.shape_cast %60 : vector<1x10x128xf32> to vector<10x128xf32>
    %cst_19 = arith.constant dense<0.000000e+00> : vector<4x128xf32>
    %62 = tpu.matmul %22, %61, %cst_19 {dimension_numbers = #tpu.dot_dimension_numbers<[1], [0], [0], [1], [0, 0, 1, 1], [], []>} : vector<4x10xf32>, vector<10x128xf32>, vector<4x128xf32> -> vector<4x128xf32>
    %63 = arith.addf %62, %26 : vector<4x128xf32>
    %c1_20 = arith.constant 1 : index
    %c0_21 = arith.constant 0 : index
    %c0_22 = arith.constant 0 : index
    %64 = vector.load %arg7[%c1_20, %c0_21, %c0_22] : memref<7x4x128xf32, #tpu.memory_space<vmem>>, vector<1x4x128xf32>
    %65 = vector.shape_cast %64 : vector<1x4x128xf32> to vector<4x128xf32>
    %66 = vector.shape_cast %63 : vector<4x128xf32> to vector<1x4x128xf32>
    tpu.vector_store %arg7[%c1_20, %c0_21, %c0_22], %66 {strides = array<i32>} : memref<7x4x128xf32, #tpu.memory_space<vmem>>, vector<1x4x128xf32>,
    %c2 = arith.constant 2 : index
    %c0_23 = arith.constant 0 : index
    %c0_24 = arith.constant 0 : index
    %67 = vector.load %arg1[%c2, %c0_23, %c0_24] : memref<7x10x128xf32, #tpu.memory_space<vmem>>, vector<1x10x128xf32>
    %68 = vector.shape_cast %67 : vector<1x10x128xf32> to vector<10x128xf32>
    %cst_25 = arith.constant dense<0.000000e+00> : vector<4x128xf32>
    %69 = tpu.matmul %22, %68, %cst_25 {dimension_numbers = #tpu.dot_dimension_numbers<[1], [0], [0], [1], [0, 0, 1, 1], [], []>} : vector<4x10xf32>, vector<10x128xf32>, vector<4x128xf32> -> vector<4x128xf32>
    %70 = arith.addf %69, %26 : vector<4x128xf32>
    %c2_26 = arith.constant 2 : index
    %c0_27 = arith.constant 0 : index
    %c0_28 = arith.constant 0 : index
    %71 = vector.load %arg7[%c2_26, %c0_27, %c0_28] : memref<7x4x128xf32, #tpu.memory_space<vmem>>, vector<1x4x128xf32>
    %72 = vector.shape_cast %71 : vector<1x4x128xf32> to vector<4x128xf32>
    %73 = vector.shape_cast %70 : vector<4x128xf32> to vector<1x4x128xf32>
    tpu.vector_store %arg7[%c2_26, %c0_27, %c0_28], %73 {strides = array<i32>} : memref<7x4x128xf32, #tpu.memory_space<vmem>>, vector<1x4x128xf32>,
    %c3 = arith.constant 3 : index
    %c0_29 = arith.constant 0 : index
    %c0_30 = arith.constant 0 : index
    %74 = vector.load %arg1[%c3, %c0_29, %c0_30] : memref<7x10x128xf32, #tpu.memory_space<vmem>>, vector<1x10x128xf32>
    %75 = vector.shape_cast %74 : vector<1x10x128xf32> to vector<10x128xf32>
    %cst_31 = arith.constant dense<0.000000e+00> : vector<4x128xf32>
    %76 = tpu.matmul %22, %75, %cst_31 {dimension_numbers = #tpu.dot_dimension_numbers<[1], [0], [0], [1], [0, 0, 1, 1], [], []>} : vector<4x10xf32>, vector<10x128xf32>, vector<4x128xf32> -> vector<4x128xf32>
    %77 = arith.addf %76, %26 : vector<4x128xf32>
    %c3_32 = arith.constant 3 : index
    %c0_33 = arith.constant 0 : index
    %c0_34 = arith.constant 0 : index
    %78 = vector.load %arg7[%c3_32, %c0_33, %c0_34] : memref<7x4x128xf32, #tpu.memory_space<vmem>>, vector<1x4x128xf32>
    %79 = vector.shape_cast %78 : vector<1x4x128xf32> to vector<4x128xf32>
    %80 = vector.shape_cast %77 : vector<4x128xf32> to vector<1x4x128xf32>
    tpu.vector_store %arg7[%c3_32, %c0_33, %c0_34], %80 {strides = array<i32>} : memref<7x4x128xf32, #tpu.memory_space<vmem>>, vector<1x4x128xf32>,
    %c4 = arith.constant 4 : index
    %c0_35 = arith.constant 0 : index
    %c0_36 = arith.constant 0 : index
    %81 = vector.load %arg1[%c4, %c0_35, %c0_36] : memref<7x10x128xf32, #tpu.memory_space<vmem>>, vector<1x10x128xf32>
    %82 = vector.shape_cast %81 : vector<1x10x128xf32> to vector<10x128xf32>
    %cst_37 = arith.constant dense<0.000000e+00> : vector<4x128xf32>
    %83 = tpu.matmul %22, %82, %cst_37 {dimension_numbers = #tpu.dot_dimension_numbers<[1], [0], [0], [1], [0, 0, 1, 1], [], []>} : vector<4x10xf32>, vector<10x128xf32>, vector<4x128xf32> -> vector<4x128xf32>
    %84 = arith.addf %83, %26 : vector<4x128xf32>
    %c4_38 = arith.constant 4 : index
    %c0_39 = arith.constant 0 : index
    %c0_40 = arith.constant 0 : index
    %85 = vector.load %arg7[%c4_38, %c0_39, %c0_40] : memref<7x4x128xf32, #tpu.memory_space<vmem>>, vector<1x4x128xf32>
    %86 = vector.shape_cast %85 : vector<1x4x128xf32> to vector<4x128xf32>
    %87 = vector.shape_cast %84 : vector<4x128xf32> to vector<1x4x128xf32>
    tpu.vector_store %arg7[%c4_38, %c0_39, %c0_40], %87 {strides = array<i32>} : memref<7x4x128xf32, #tpu.memory_space<vmem>>, vector<1x4x128xf32>,
    %c5 = arith.constant 5 : index
    %c0_41 = arith.constant 0 : index
    %c0_42 = arith.constant 0 : index
    %88 = vector.load %arg1[%c5, %c0_41, %c0_42] : memref<7x10x128xf32, #tpu.memory_space<vmem>>, vector<1x10x128xf32>
    %89 = vector.shape_cast %88 : vector<1x10x128xf32> to vector<10x128xf32>
    %cst_43 = arith.constant dense<0.000000e+00> : vector<4x128xf32>
    %90 = tpu.matmul %22, %89, %cst_43 {dimension_numbers = #tpu.dot_dimension_numbers<[1], [0], [0], [1], [0, 0, 1, 1], [], []>} : vector<4x10xf32>, vector<10x128xf32>, vector<4x128xf32> -> vector<4x128xf32>
    %91 = arith.addf %90, %26 : vector<4x128xf32>
    %c5_44 = arith.constant 5 : index
    %c0_45 = arith.constant 0 : index
    %c0_46 = arith.constant 0 : index
    %92 = vector.load %arg7[%c5_44, %c0_45, %c0_46] : memref<7x4x128xf32, #tpu.memory_space<vmem>>, vector<1x4x128xf32>
    %93 = vector.shape_cast %92 : vector<1x4x128xf32> to vector<4x128xf32>
    %94 = vector.shape_cast %91 : vector<4x128xf32> to vector<1x4x128xf32>
    tpu.vector_store %arg7[%c5_44, %c0_45, %c0_46], %94 {strides = array<i32>} : memref<7x4x128xf32, #tpu.memory_space<vmem>>, vector<1x4x128xf32>,
    %c6 = arith.constant 6 : index
    %c0_47 = arith.constant 0 : index
    %c0_48 = arith.constant 0 : index
    %95 = vector.load %arg1[%c6, %c0_47, %c0_48] : memref<7x10x128xf32, #tpu.memory_space<vmem>>, vector<1x10x128xf32>
    %96 = vector.shape_cast %95 : vector<1x10x128xf32> to vector<10x128xf32>
    %cst_49 = arith.constant dense<0.000000e+00> : vector<4x128xf32>
    %97 = tpu.matmul %22, %96, %cst_49 {dimension_numbers = #tpu.dot_dimension_numbers<[1], [0], [0], [1], [0, 0, 1, 1], [], []>} : vector<4x10xf32>, vector<10x128xf32>, vector<4x128xf32> -> vector<4x128xf32>
    %98 = arith.addf %97, %26 : vector<4x128xf32>
    %c6_50 = arith.constant 6 : index
    %c0_51 = arith.constant 0 : index
    %c0_52 = arith.constant 0 : index
    %99 = vector.load %arg7[%c6_50, %c0_51, %c0_52] : memref<7x4x128xf32, #tpu.memory_space<vmem>>, vector<1x4x128xf32>
    %100 = vector.shape_cast %99 : vector<1x4x128xf32> to vector<4x128xf32>
    %101 = vector.shape_cast %98 : vector<4x128xf32> to vector<1x4x128xf32>
    tpu.vector_store %arg7[%c6_50, %c0_51, %c0_52], %101 {strides = array<i32>} : memref<7x4x128xf32, #tpu.memory_space<vmem>>, vector<1x4x128xf32>,
    %cst_53 = arith.constant 0.000000e+00 : f32
    %102 = vector.broadcast %cst_53 : f32 to vector<8x128xf32>
    %cst_54 = arith.constant 0.000000e+00 : f32
    %103 = vector.broadcast %cst_54 : f32 to vector<8x128xf32>
    %c0_i32 = arith.constant 0 : i32
    %104 = arith.index_cast %c0_i32 : i32 to index
    %c0_55 = arith.constant 0 : index
    %c0_56 = arith.constant 0 : index
    %105 = vector.load %arg7[%104, %c0_55, %c0_56] : memref<7x4x128xf32, #tpu.memory_space<vmem>>, vector<1x4x128xf32>
    %106 = vector.shape_cast %105 : vector<1x4x128xf32> to vector<4x128xf32>
    %107 = vector.extract_strided_slice %102 {offsets = [0, 0], sizes = [1, 128], strides = [1, 1]} : vector<8x128xf32> to vector<1x128xf32>
    %108 = vector.broadcast %107 : vector<1x128xf32> to vector<4x128xf32>
    %109 = arith.mulf %31, %108 : vector<4x128xf32>
    %110 = vector.extract_strided_slice %102 {offsets = [1, 0], sizes = [1, 128], strides = [1, 1]} : vector<8x128xf32> to vector<1x128xf32>
    %111 = vector.broadcast %110 : vector<1x128xf32> to vector<4x128xf32>
    %112 = arith.mulf %34, %111 : vector<4x128xf32>
    %113 = arith.addf %109, %112 : vector<4x128xf32>
    %114 = vector.extract_strided_slice %102 {offsets = [2, 0], sizes = [1, 128], strides = [1, 1]} : vector<8x128xf32> to vector<1x128xf32>
    %115 = vector.broadcast %114 : vector<1x128xf32> to vector<4x128xf32>
    %116 = arith.mulf %37, %115 : vector<4x128xf32>
    %117 = arith.addf %113, %116 : vector<4x128xf32>
    %118 = vector.extract_strided_slice %102 {offsets = [3, 0], sizes = [1, 128], strides = [1, 1]} : vector<8x128xf32> to vector<1x128xf32>
    %119 = vector.broadcast %118 : vector<1x128xf32> to vector<4x128xf32>
    %120 = arith.mulf %40, %119 : vector<4x128xf32>
    %121 = arith.addf %117, %120 : vector<4x128xf32>
    %122 = vector.extract_strided_slice %102 {offsets = [4, 0], sizes = [1, 128], strides = [1, 1]} : vector<8x128xf32> to vector<1x128xf32>
    %123 = vector.broadcast %122 : vector<1x128xf32> to vector<4x128xf32>
    %124 = arith.mulf %43, %123 : vector<4x128xf32>
    %125 = arith.addf %121, %124 : vector<4x128xf32>
    %126 = vector.extract_strided_slice %102 {offsets = [5, 0], sizes = [1, 128], strides = [1, 1]} : vector<8x128xf32> to vector<1x128xf32>
    %127 = vector.broadcast %126 : vector<1x128xf32> to vector<4x128xf32>
    %128 = arith.mulf %46, %127 : vector<4x128xf32>
    %129 = arith.addf %125, %128 : vector<4x128xf32>
    %130 = vector.extract_strided_slice %102 {offsets = [6, 0], sizes = [1, 128], strides = [1, 1]} : vector<8x128xf32> to vector<1x128xf32>
    %131 = vector.broadcast %130 : vector<1x128xf32> to vector<4x128xf32>
    %132 = arith.mulf %49, %131 : vector<4x128xf32>
    %133 = arith.addf %129, %132 : vector<4x128xf32>
    %134 = vector.extract_strided_slice %102 {offsets = [7, 0], sizes = [1, 128], strides = [1, 1]} : vector<8x128xf32> to vector<1x128xf32>
    %135 = vector.broadcast %134 : vector<1x128xf32> to vector<4x128xf32>
    %136 = arith.mulf %52, %135 : vector<4x128xf32>
    %137 = arith.addf %133, %136 : vector<4x128xf32>
    %138 = arith.addf %106, %137 : vector<4x128xf32>
    %139 = math.tanh %138 : vector<4x128xf32>
    %cst_57 = arith.constant 1.57079637 : f32
    %140 = vector.broadcast %cst_57 : f32 to vector<4x128xf32>
    %141 = arith.mulf %139, %140 : vector<4x128xf32>
    %142 = math.cos %141 : vector<4x128xf32>
    %143 = math.sin %141 : vector<4x128xf32>
    %144 = vector.extract_strided_slice %143 {offsets = [0, 0], sizes = [1, 128], strides = [1, 1]} : vector<4x128xf32> to vector<1x128xf32>
    %145 = vector.broadcast %144 : vector<1x128xf32> to vector<16x128xf32>
    %146 = arith.mulf %145, %3 : vector<16x128xf32>
    %147 = vector.extract_strided_slice %142 {offsets = [0, 0], sizes = [1, 128], strides = [1, 1]} : vector<4x128xf32> to vector<1x128xf32>
    %148 = vector.broadcast %147 : vector<1x128xf32> to vector<16x128xf32>
    %149 = arith.mulf %148, %14 : vector<16x128xf32>
    %150 = arith.addf %146, %149 : vector<16x128xf32>
    %151 = vector.extract_strided_slice %143 {offsets = [1, 0], sizes = [1, 128], strides = [1, 1]} : vector<4x128xf32> to vector<1x128xf32>
    %152 = vector.broadcast %151 : vector<1x128xf32> to vector<16x128xf32>
    %153 = arith.mulf %152, %6 : vector<16x128xf32>
    %154 = vector.extract_strided_slice %142 {offsets = [1, 0], sizes = [1, 128], strides = [1, 1]} : vector<4x128xf32> to vector<1x128xf32>
    %155 = vector.broadcast %154 : vector<1x128xf32> to vector<16x128xf32>
    %156 = arith.mulf %155, %16 : vector<16x128xf32>
    %157 = arith.addf %153, %156 : vector<16x128xf32>
    %158 = arith.mulf %150, %157 : vector<16x128xf32>
    %159 = vector.extract_strided_slice %143 {offsets = [2, 0], sizes = [1, 128], strides = [1, 1]} : vector<4x128xf32> to vector<1x128xf32>
    %160 = vector.broadcast %159 : vector<1x128xf32> to vector<16x128xf32>
    %161 = arith.mulf %160, %9 : vector<16x128xf32>
    %162 = vector.extract_strided_slice %142 {offsets = [2, 0], sizes = [1, 128], strides = [1, 1]} : vector<4x128xf32> to vector<1x128xf32>
    %163 = vector.broadcast %162 : vector<1x128xf32> to vector<16x128xf32>
    %164 = arith.mulf %163, %18 : vector<16x128xf32>
    %165 = arith.addf %161, %164 : vector<16x128xf32>
    %166 = arith.mulf %158, %165 : vector<16x128xf32>
    %167 = vector.extract_strided_slice %143 {offsets = [3, 0], sizes = [1, 128], strides = [1, 1]} : vector<4x128xf32> to vector<1x128xf32>
    %168 = vector.broadcast %167 : vector<1x128xf32> to vector<16x128xf32>
    %169 = arith.mulf %168, %12 : vector<16x128xf32>
    %170 = vector.extract_strided_slice %142 {offsets = [3, 0], sizes = [1, 128], strides = [1, 1]} : vector<4x128xf32> to vector<1x128xf32>
    %171 = vector.broadcast %170 : vector<1x128xf32> to vector<16x128xf32>
    %172 = arith.mulf %171, %20 : vector<16x128xf32>
    %173 = arith.addf %169, %172 : vector<16x128xf32>
    %174 = arith.mulf %166, %173 : vector<16x128xf32>
    %cst_58 = arith.constant dense<0.000000e+00> : vector<32x128xf32>
    %175 = tpu.matmul %27, %174, %cst_58 {dimension_numbers = #tpu.dot_dimension_numbers<[1], [0], [0], [1], [0, 0, 1, 1], [], []>} : vector<32x16xf32>, vector<16x128xf32>, vector<32x128xf32> -> vector<32x128xf32>
    %176 = arith.mulf %175, %175 : vector<32x128xf32>
    %cst_59 = arith.constant dense<0.000000e+00> : vector<32x128xf32>
    %177 = tpu.matmul %28, %176, %cst_59 {dimension_numbers = #tpu.dot_dimension_numbers<[1], [0], [0], [1], [0, 0, 1, 1], [], []>} : vector<32x32xf32>, vector<32x128xf32>, vector<32x128xf32> -> vector<32x128xf32>
    %178 = arith.negf %177 : vector<32x128xf32>
    %179 = math.exp %178 : vector<32x128xf32>
    %cst_60 = arith.constant 1.000000e+00 : f32
    %180 = vector.broadcast %cst_60 : f32 to vector<32x128xf32>
    %181 = arith.addf %180, %179 : vector<32x128xf32>
    %182 = arith.divf %180, %181 : vector<32x128xf32>
    %183 = vector.extract_strided_slice %182 {offsets = [0, 0], sizes = [8, 128], strides = [1, 1]} : vector<32x128xf32> to vector<8x128xf32>
    %184 = vector.extract_strided_slice %182 {offsets = [8, 0], sizes = [8, 128], strides = [1, 1]} : vector<32x128xf32> to vector<8x128xf32>
    %185 = vector.extract_strided_slice %182 {offsets = [16, 0], sizes = [8, 128], strides = [1, 1]} : vector<32x128xf32> to vector<8x128xf32>
    %186 = vector.extract_strided_slice %182 {offsets = [24, 0], sizes = [8, 128], strides = [1, 1]} : vector<32x128xf32> to vector<8x128xf32>
    %cst_61 = arith.constant 2.000000e+00 : f32
    %187 = vector.broadcast %cst_61 : f32 to vector<8x128xf32>
    %188 = arith.mulf %187, %186 : vector<8x128xf32>
    %cst_62 = arith.constant 1.000000e+00 : f32
    %189 = vector.broadcast %cst_62 : f32 to vector<8x128xf32>
    %190 = arith.subf %188, %189 : vector<8x128xf32>
    %191 = arith.mulf %184, %103 : vector<8x128xf32>
    %192 = arith.mulf %183, %190 : vector<8x128xf32>
    %193 = arith.addf %191, %192 : vector<8x128xf32>
    %194 = math.tanh %193 : vector<8x128xf32>
    %195 = arith.mulf %185, %194 : vector<8x128xf32>
    %c1_i32 = arith.constant 1 : i32
    %196 = arith.index_cast %c1_i32 : i32 to index
    %c0_63 = arith.constant 0 : index
    %c0_64 = arith.constant 0 : index
    %197 = vector.load %arg7[%196, %c0_63, %c0_64] : memref<7x4x128xf32, #tpu.memory_space<vmem>>, vector<1x4x128xf32>
    %198 = vector.shape_cast %197 : vector<1x4x128xf32> to vector<4x128xf32>
    %199 = vector.extract_strided_slice %195 {offsets = [0, 0], sizes = [1, 128], strides = [1, 1]} : vector<8x128xf32> to vector<1x128xf32>
    %200 = vector.broadcast %199 : vector<1x128xf32> to vector<4x128xf32>
    %201 = arith.mulf %31, %200 : vector<4x128xf32>
    %202 = vector.extract_strided_slice %195 {offsets = [1, 0], sizes = [1, 128], strides = [1, 1]} : vector<8x128xf32> to vector<1x128xf32>
    %203 = vector.broadcast %202 : vector<1x128xf32> to vector<4x128xf32>
    %204 = arith.mulf %34, %203 : vector<4x128xf32>
    %205 = arith.addf %201, %204 : vector<4x128xf32>
    %206 = vector.extract_strided_slice %195 {offsets = [2, 0], sizes = [1, 128], strides = [1, 1]} : vector<8x128xf32> to vector<1x128xf32>
    %207 = vector.broadcast %206 : vector<1x128xf32> to vector<4x128xf32>
    %208 = arith.mulf %37, %207 : vector<4x128xf32>
    %209 = arith.addf %205, %208 : vector<4x128xf32>
    %210 = vector.extract_strided_slice %195 {offsets = [3, 0], sizes = [1, 128], strides = [1, 1]} : vector<8x128xf32> to vector<1x128xf32>
    %211 = vector.broadcast %210 : vector<1x128xf32> to vector<4x128xf32>
    %212 = arith.mulf %40, %211 : vector<4x128xf32>
    %213 = arith.addf %209, %212 : vector<4x128xf32>
    %214 = vector.extract_strided_slice %195 {offsets = [4, 0], sizes = [1, 128], strides = [1, 1]} : vector<8x128xf32> to vector<1x128xf32>
    %215 = vector.broadcast %214 : vector<1x128xf32> to vector<4x128xf32>
    %216 = arith.mulf %43, %215 : vector<4x128xf32>
    %217 = arith.addf %213, %216 : vector<4x128xf32>
    %218 = vector.extract_strided_slice %195 {offsets = [5, 0], sizes = [1, 128], strides = [1, 1]} : vector<8x128xf32> to vector<1x128xf32>
    %219 = vector.broadcast %218 : vector<1x128xf32> to vector<4x128xf32>
    %220 = arith.mulf %46, %219 : vector<4x128xf32>
    %221 = arith.addf %217, %220 : vector<4x128xf32>
    %222 = vector.extract_strided_slice %195 {offsets = [6, 0], sizes = [1, 128], strides = [1, 1]} : vector<8x128xf32> to vector<1x128xf32>
    %223 = vector.broadcast %222 : vector<1x128xf32> to vector<4x128xf32>
    %224 = arith.mulf %49, %223 : vector<4x128xf32>
    %225 = arith.addf %221, %224 : vector<4x128xf32>
    %226 = vector.extract_strided_slice %195 {offsets = [7, 0], sizes = [1, 128], strides = [1, 1]} : vector<8x128xf32> to vector<1x128xf32>
    %227 = vector.broadcast %226 : vector<1x128xf32> to vector<4x128xf32>
    %228 = arith.mulf %52, %227 : vector<4x128xf32>
    %229 = arith.addf %225, %228 : vector<4x128xf32>
    %230 = arith.addf %198, %229 : vector<4x128xf32>
    %231 = math.tanh %230 : vector<4x128xf32>
    %cst_65 = arith.constant 1.57079637 : f32
    %232 = vector.broadcast %cst_65 : f32 to vector<4x128xf32>
    %233 = arith.mulf %231, %232 : vector<4x128xf32>
    %234 = math.cos %233 : vector<4x128xf32>
    %235 = math.sin %233 : vector<4x128xf32>
    %236 = vector.extract_strided_slice %235 {offsets = [0, 0], sizes = [1, 128], strides = [1, 1]} : vector<4x128xf32> to vector<1x128xf32>
    %237 = vector.broadcast %236 : vector<1x128xf32> to vector<16x128xf32>
    %238 = arith.mulf %237, %3 : vector<16x128xf32>
    %239 = vector.extract_strided_slice %234 {offsets = [0, 0], sizes = [1, 128], strides = [1, 1]} : vector<4x128xf32> to vector<1x128xf32>
    %240 = vector.broadcast %239 : vector<1x128xf32> to vector<16x128xf32>
    %241 = arith.mulf %240, %14 : vector<16x128xf32>
    %242 = arith.addf %238, %241 : vector<16x128xf32>
    %243 = vector.extract_strided_slice %235 {offsets = [1, 0], sizes = [1, 128], strides = [1, 1]} : vector<4x128xf32> to vector<1x128xf32>
    %244 = vector.broadcast %243 : vector<1x128xf32> to vector<16x128xf32>
    %245 = arith.mulf %244, %6 : vector<16x128xf32>
    %246 = vector.extract_strided_slice %234 {offsets = [1, 0], sizes = [1, 128], strides = [1, 1]} : vector<4x128xf32> to vector<1x128xf32>
    %247 = vector.broadcast %246 : vector<1x128xf32> to vector<16x128xf32>
    %248 = arith.mulf %247, %16 : vector<16x128xf32>
    %249 = arith.addf %245, %248 : vector<16x128xf32>
    %250 = arith.mulf %242, %249 : vector<16x128xf32>
    %251 = vector.extract_strided_slice %235 {offsets = [2, 0], sizes = [1, 128], strides = [1, 1]} : vector<4x128xf32> to vector<1x128xf32>
    %252 = vector.broadcast %251 : vector<1x128xf32> to vector<16x128xf32>
    %253 = arith.mulf %252, %9 : vector<16x128xf32>
    %254 = vector.extract_strided_slice %234 {offsets = [2, 0], sizes = [1, 128], strides = [1, 1]} : vector<4x128xf32> to vector<1x128xf32>
    %255 = vector.broadcast %254 : vector<1x128xf32> to vector<16x128xf32>
    %256 = arith.mulf %255, %18 : vector<16x128xf32>
    %257 = arith.addf %253, %256 : vector<16x128xf32>
    %258 = arith.mulf %250, %257 : vector<16x128xf32>
    %259 = vector.extract_strided_slice %235 {offsets = [3, 0], sizes = [1, 128], strides = [1, 1]} : vector<4x128xf32> to vector<1x128xf32>
    %260 = vector.broadcast %259 : vector<1x128xf32> to vector<16x128xf32>
    %261 = arith.mulf %260, %12 : vector<16x128xf32>
    %262 = vector.extract_strided_slice %234 {offsets = [3, 0], sizes = [1, 128], strides = [1, 1]} : vector<4x128xf32> to vector<1x128xf32>
    %263 = vector.broadcast %262 : vector<1x128xf32> to vector<16x128xf32>
    %264 = arith.mulf %263, %20 : vector<16x128xf32>
    %265 = arith.addf %261, %264 : vector<16x128xf32>
    %266 = arith.mulf %258, %265 : vector<16x128xf32>
    %cst_66 = arith.constant dense<0.000000e+00> : vector<32x128xf32>
    %267 = tpu.matmul %27, %266, %cst_66 {dimension_numbers = #tpu.dot_dimension_numbers<[1], [0], [0], [1], [0, 0, 1, 1], [], []>} : vector<32x16xf32>, vector<16x128xf32>, vector<32x128xf32> -> vector<32x128xf32>
    %268 = arith.mulf %267, %267 : vector<32x128xf32>
    %cst_67 = arith.constant dense<0.000000e+00> : vector<32x128xf32>
    %269 = tpu.matmul %28, %268, %cst_67 {dimension_numbers = #tpu.dot_dimension_numbers<[1], [0], [0], [1], [0, 0, 1, 1], [], []>} : vector<32x32xf32>, vector<32x128xf32>, vector<32x128xf32> -> vector<32x128xf32>
    %270 = arith.negf %269 : vector<32x128xf32>
    %271 = math.exp %270 : vector<32x128xf32>
    %cst_68 = arith.constant 1.000000e+00 : f32
    %272 = vector.broadcast %cst_68 : f32 to vector<32x128xf32>
    %273 = arith.addf %272, %271 : vector<32x128xf32>
    %274 = arith.divf %272, %273 : vector<32x128xf32>
    %275 = vector.extract_strided_slice %274 {offsets = [0, 0], sizes = [8, 128], strides = [1, 1]} : vector<32x128xf32> to vector<8x128xf32>
    %276 = vector.extract_strided_slice %274 {offsets = [8, 0], sizes = [8, 128], strides = [1, 1]} : vector<32x128xf32> to vector<8x128xf32>
    %277 = vector.extract_strided_slice %274 {offsets = [16, 0], sizes = [8, 128], strides = [1, 1]} : vector<32x128xf32> to vector<8x128xf32>
    %278 = vector.extract_strided_slice %274 {offsets = [24, 0], sizes = [8, 128], strides = [1, 1]} : vector<32x128xf32> to vector<8x128xf32>
    %cst_69 = arith.constant 2.000000e+00 : f32
    %279 = vector.broadcast %cst_69 : f32 to vector<8x128xf32>
    %280 = arith.mulf %279, %278 : vector<8x128xf32>
    %cst_70 = arith.constant 1.000000e+00 : f32
    %281 = vector.broadcast %cst_70 : f32 to vector<8x128xf32>
    %282 = arith.subf %280, %281 : vector<8x128xf32>
    %283 = arith.mulf %276, %193 : vector<8x128xf32>
    %284 = arith.mulf %275, %282 : vector<8x128xf32>
    %285 = arith.addf %283, %284 : vector<8x128xf32>
    %286 = math.tanh %285 : vector<8x128xf32>
    %287 = arith.mulf %277, %286 : vector<8x128xf32>
    %c2_i32 = arith.constant 2 : i32
    %288 = arith.index_cast %c2_i32 : i32 to index
    %c0_71 = arith.constant 0 : index
    %c0_72 = arith.constant 0 : index
    %289 = vector.load %arg7[%288, %c0_71, %c0_72] : memref<7x4x128xf32, #tpu.memory_space<vmem>>, vector<1x4x128xf32>
    %290 = vector.shape_cast %289 : vector<1x4x128xf32> to vector<4x128xf32>
    %291 = vector.extract_strided_slice %287 {offsets = [0, 0], sizes = [1, 128], strides = [1, 1]} : vector<8x128xf32> to vector<1x128xf32>
    %292 = vector.broadcast %291 : vector<1x128xf32> to vector<4x128xf32>
    %293 = arith.mulf %31, %292 : vector<4x128xf32>
    %294 = vector.extract_strided_slice %287 {offsets = [1, 0], sizes = [1, 128], strides = [1, 1]} : vector<8x128xf32> to vector<1x128xf32>
    %295 = vector.broadcast %294 : vector<1x128xf32> to vector<4x128xf32>
    %296 = arith.mulf %34, %295 : vector<4x128xf32>
    %297 = arith.addf %293, %296 : vector<4x128xf32>
    %298 = vector.extract_strided_slice %287 {offsets = [2, 0], sizes = [1, 128], strides = [1, 1]} : vector<8x128xf32> to vector<1x128xf32>
    %299 = vector.broadcast %298 : vector<1x128xf32> to vector<4x128xf32>
    %300 = arith.mulf %37, %299 : vector<4x128xf32>
    %301 = arith.addf %297, %300 : vector<4x128xf32>
    %302 = vector.extract_strided_slice %287 {offsets = [3, 0], sizes = [1, 128], strides = [1, 1]} : vector<8x128xf32> to vector<1x128xf32>
    %303 = vector.broadcast %302 : vector<1x128xf32> to vector<4x128xf32>
    %304 = arith.mulf %40, %303 : vector<4x128xf32>
    %305 = arith.addf %301, %304 : vector<4x128xf32>
    %306 = vector.extract_strided_slice %287 {offsets = [4, 0], sizes = [1, 128], strides = [1, 1]} : vector<8x128xf32> to vector<1x128xf32>
    %307 = vector.broadcast %306 : vector<1x128xf32> to vector<4x128xf32>
    %308 = arith.mulf %43, %307 : vector<4x128xf32>
    %309 = arith.addf %305, %308 : vector<4x128xf32>
    %310 = vector.extract_strided_slice %287 {offsets = [5, 0], sizes = [1, 128], strides = [1, 1]} : vector<8x128xf32> to vector<1x128xf32>
    %311 = vector.broadcast %310 : vector<1x128xf32> to vector<4x128xf32>
    %312 = arith.mulf %46, %311 : vector<4x128xf32>
    %313 = arith.addf %309, %312 : vector<4x128xf32>
    %314 = vector.extract_strided_slice %287 {offsets = [6, 0], sizes = [1, 128], strides = [1, 1]} : vector<8x128xf32> to vector<1x128xf32>
    %315 = vector.broadcast %314 : vector<1x128xf32> to vector<4x128xf32>
    %316 = arith.mulf %49, %315 : vector<4x128xf32>
    %317 = arith.addf %313, %316 : vector<4x128xf32>
    %318 = vector.extract_strided_slice %287 {offsets = [7, 0], sizes = [1, 128], strides = [1, 1]} : vector<8x128xf32> to vector<1x128xf32>
    %319 = vector.broadcast %318 : vector<1x128xf32> to vector<4x128xf32>
    %320 = arith.mulf %52, %319 : vector<4x128xf32>
    %321 = arith.addf %317, %320 : vector<4x128xf32>
    %322 = arith.addf %290, %321 : vector<4x128xf32>
    %323 = math.tanh %322 : vector<4x128xf32>
    %cst_73 = arith.constant 1.57079637 : f32
    %324 = vector.broadcast %cst_73 : f32 to vector<4x128xf32>
    %325 = arith.mulf %323, %324 : vector<4x128xf32>
    %326 = math.cos %325 : vector<4x128xf32>
    %327 = math.sin %325 : vector<4x128xf32>
    %328 = vector.extract_strided_slice %327 {offsets = [0, 0], sizes = [1, 128], strides = [1, 1]} : vector<4x128xf32> to vector<1x128xf32>
    %329 = vector.broadcast %328 : vector<1x128xf32> to vector<16x128xf32>
    %330 = arith.mulf %329, %3 : vector<16x128xf32>
    %331 = vector.extract_strided_slice %326 {offsets = [0, 0], sizes = [1, 128], strides = [1, 1]} : vector<4x128xf32> to vector<1x128xf32>
    %332 = vector.broadcast %331 : vector<1x128xf32> to vector<16x128xf32>
    %333 = arith.mulf %332, %14 : vector<16x128xf32>
    %334 = arith.addf %330, %333 : vector<16x128xf32>
    %335 = vector.extract_strided_slice %327 {offsets = [1, 0], sizes = [1, 128], strides = [1, 1]} : vector<4x128xf32> to vector<1x128xf32>
    %336 = vector.broadcast %335 : vector<1x128xf32> to vector<16x128xf32>
    %337 = arith.mulf %336, %6 : vector<16x128xf32>
    %338 = vector.extract_strided_slice %326 {offsets = [1, 0], sizes = [1, 128], strides = [1, 1]} : vector<4x128xf32> to vector<1x128xf32>
    %339 = vector.broadcast %338 : vector<1x128xf32> to vector<16x128xf32>
    %340 = arith.mulf %339, %16 : vector<16x128xf32>
    %341 = arith.addf %337, %340 : vector<16x128xf32>
    %342 = arith.mulf %334, %341 : vector<16x128xf32>
    %343 = vector.extract_strided_slice %327 {offsets = [2, 0], sizes = [1, 128], strides = [1, 1]} : vector<4x128xf32> to vector<1x128xf32>
    %344 = vector.broadcast %343 : vector<1x128xf32> to vector<16x128xf32>
    %345 = arith.mulf %344, %9 : vector<16x128xf32>
    %346 = vector.extract_strided_slice %326 {offsets = [2, 0], sizes = [1, 128], strides = [1, 1]} : vector<4x128xf32> to vector<1x128xf32>
    %347 = vector.broadcast %346 : vector<1x128xf32> to vector<16x128xf32>
    %348 = arith.mulf %347, %18 : vector<16x128xf32>
    %349 = arith.addf %345, %348 : vector<16x128xf32>
    %350 = arith.mulf %342, %349 : vector<16x128xf32>
    %351 = vector.extract_strided_slice %327 {offsets = [3, 0], sizes = [1, 128], strides = [1, 1]} : vector<4x128xf32> to vector<1x128xf32>
    %352 = vector.broadcast %351 : vector<1x128xf32> to vector<16x128xf32>
    %353 = arith.mulf %352, %12 : vector<16x128xf32>
    %354 = vector.extract_strided_slice %326 {offsets = [3, 0], sizes = [1, 128], strides = [1, 1]} : vector<4x128xf32> to vector<1x128xf32>
    %355 = vector.broadcast %354 : vector<1x128xf32> to vector<16x128xf32>
    %356 = arith.mulf %355, %20 : vector<16x128xf32>
    %357 = arith.addf %353, %356 : vector<16x128xf32>
    %358 = arith.mulf %350, %357 : vector<16x128xf32>
    %cst_74 = arith.constant dense<0.000000e+00> : vector<32x128xf32>
    %359 = tpu.matmul %27, %358, %cst_74 {dimension_numbers = #tpu.dot_dimension_numbers<[1], [0], [0], [1], [0, 0, 1, 1], [], []>} : vector<32x16xf32>, vector<16x128xf32>, vector<32x128xf32> -> vector<32x128xf32>
    %360 = arith.mulf %359, %359 : vector<32x128xf32>
    %cst_75 = arith.constant dense<0.000000e+00> : vector<32x128xf32>
    %361 = tpu.matmul %28, %360, %cst_75 {dimension_numbers = #tpu.dot_dimension_numbers<[1], [0], [0], [1], [0, 0, 1, 1], [], []>} : vector<32x32xf32>, vector<32x128xf32>, vector<32x128xf32> -> vector<32x128xf32>
    %362 = arith.negf %361 : vector<32x128xf32>
    %363 = math.exp %362 : vector<32x128xf32>
    %cst_76 = arith.constant 1.000000e+00 : f32
    %364 = vector.broadcast %cst_76 : f32 to vector<32x128xf32>
    %365 = arith.addf %364, %363 : vector<32x128xf32>
    %366 = arith.divf %364, %365 : vector<32x128xf32>
    %367 = vector.extract_strided_slice %366 {offsets = [0, 0], sizes = [8, 128], strides = [1, 1]} : vector<32x128xf32> to vector<8x128xf32>
    %368 = vector.extract_strided_slice %366 {offsets = [8, 0], sizes = [8, 128], strides = [1, 1]} : vector<32x128xf32> to vector<8x128xf32>
    %369 = vector.extract_strided_slice %366 {offsets = [16, 0], sizes = [8, 128], strides = [1, 1]} : vector<32x128xf32> to vector<8x128xf32>
    %370 = vector.extract_strided_slice %366 {offsets = [24, 0], sizes = [8, 128], strides = [1, 1]} : vector<32x128xf32> to vector<8x128xf32>
    %cst_77 = arith.constant 2.000000e+00 : f32
    %371 = vector.broadcast %cst_77 : f32 to vector<8x128xf32>
    %372 = arith.mulf %371, %370 : vector<8x128xf32>
    %cst_78 = arith.constant 1.000000e+00 : f32
    %373 = vector.broadcast %cst_78 : f32 to vector<8x128xf32>
    %374 = arith.subf %372, %373 : vector<8x128xf32>
    %375 = arith.mulf %368, %285 : vector<8x128xf32>
    %376 = arith.mulf %367, %374 : vector<8x128xf32>
    %377 = arith.addf %375, %376 : vector<8x128xf32>
    %378 = math.tanh %377 : vector<8x128xf32>
    %379 = arith.mulf %369, %378 : vector<8x128xf32>
    %c3_i32 = arith.constant 3 : i32
    %380 = arith.index_cast %c3_i32 : i32 to index
    %c0_79 = arith.constant 0 : index
    %c0_80 = arith.constant 0 : index
    %381 = vector.load %arg7[%380, %c0_79, %c0_80] : memref<7x4x128xf32, #tpu.memory_space<vmem>>, vector<1x4x128xf32>
    %382 = vector.shape_cast %381 : vector<1x4x128xf32> to vector<4x128xf32>
    %383 = vector.extract_strided_slice %379 {offsets = [0, 0], sizes = [1, 128], strides = [1, 1]} : vector<8x128xf32> to vector<1x128xf32>
    %384 = vector.broadcast %383 : vector<1x128xf32> to vector<4x128xf32>
    %385 = arith.mulf %31, %384 : vector<4x128xf32>
    %386 = vector.extract_strided_slice %379 {offsets = [1, 0], sizes = [1, 128], strides = [1, 1]} : vector<8x128xf32> to vector<1x128xf32>
    %387 = vector.broadcast %386 : vector<1x128xf32> to vector<4x128xf32>
    %388 = arith.mulf %34, %387 : vector<4x128xf32>
    %389 = arith.addf %385, %388 : vector<4x128xf32>
    %390 = vector.extract_strided_slice %379 {offsets = [2, 0], sizes = [1, 128], strides = [1, 1]} : vector<8x128xf32> to vector<1x128xf32>
    %391 = vector.broadcast %390 : vector<1x128xf32> to vector<4x128xf32>
    %392 = arith.mulf %37, %391 : vector<4x128xf32>
    %393 = arith.addf %389, %392 : vector<4x128xf32>
    %394 = vector.extract_strided_slice %379 {offsets = [3, 0], sizes = [1, 128], strides = [1, 1]} : vector<8x128xf32> to vector<1x128xf32>
    %395 = vector.broadcast %394 : vector<1x128xf32> to vector<4x128xf32>
    %396 = arith.mulf %40, %395 : vector<4x128xf32>
    %397 = arith.addf %393, %396 : vector<4x128xf32>
    %398 = vector.extract_strided_slice %379 {offsets = [4, 0], sizes = [1, 128], strides = [1, 1]} : vector<8x128xf32> to vector<1x128xf32>
    %399 = vector.broadcast %398 : vector<1x128xf32> to vector<4x128xf32>
    %400 = arith.mulf %43, %399 : vector<4x128xf32>
    %401 = arith.addf %397, %400 : vector<4x128xf32>
    %402 = vector.extract_strided_slice %379 {offsets = [5, 0], sizes = [1, 128], strides = [1, 1]} : vector<8x128xf32> to vector<1x128xf32>
    %403 = vector.broadcast %402 : vector<1x128xf32> to vector<4x128xf32>
    %404 = arith.mulf %46, %403 : vector<4x128xf32>
    %405 = arith.addf %401, %404 : vector<4x128xf32>
    %406 = vector.extract_strided_slice %379 {offsets = [6, 0], sizes = [1, 128], strides = [1, 1]} : vector<8x128xf32> to vector<1x128xf32>
    %407 = vector.broadcast %406 : vector<1x128xf32> to vector<4x128xf32>
    %408 = arith.mulf %49, %407 : vector<4x128xf32>
    %409 = arith.addf %405, %408 : vector<4x128xf32>
    %410 = vector.extract_strided_slice %379 {offsets = [7, 0], sizes = [1, 128], strides = [1, 1]} : vector<8x128xf32> to vector<1x128xf32>
    %411 = vector.broadcast %410 : vector<1x128xf32> to vector<4x128xf32>
    %412 = arith.mulf %52, %411 : vector<4x128xf32>
    %413 = arith.addf %409, %412 : vector<4x128xf32>
    %414 = arith.addf %382, %413 : vector<4x128xf32>
    %415 = math.tanh %414 : vector<4x128xf32>
    %cst_81 = arith.constant 1.57079637 : f32
    %416 = vector.broadcast %cst_81 : f32 to vector<4x128xf32>
    %417 = arith.mulf %415, %416 : vector<4x128xf32>
    %418 = math.cos %417 : vector<4x128xf32>
    %419 = math.sin %417 : vector<4x128xf32>
    %420 = vector.extract_strided_slice %419 {offsets = [0, 0], sizes = [1, 128], strides = [1, 1]} : vector<4x128xf32> to vector<1x128xf32>
    %421 = vector.broadcast %420 : vector<1x128xf32> to vector<16x128xf32>
    %422 = arith.mulf %421, %3 : vector<16x128xf32>
    %423 = vector.extract_strided_slice %418 {offsets = [0, 0], sizes = [1, 128], strides = [1, 1]} : vector<4x128xf32> to vector<1x128xf32>
    %424 = vector.broadcast %423 : vector<1x128xf32> to vector<16x128xf32>
    %425 = arith.mulf %424, %14 : vector<16x128xf32>
    %426 = arith.addf %422, %425 : vector<16x128xf32>
    %427 = vector.extract_strided_slice %419 {offsets = [1, 0], sizes = [1, 128], strides = [1, 1]} : vector<4x128xf32> to vector<1x128xf32>
    %428 = vector.broadcast %427 : vector<1x128xf32> to vector<16x128xf32>
    %429 = arith.mulf %428, %6 : vector<16x128xf32>
    %430 = vector.extract_strided_slice %418 {offsets = [1, 0], sizes = [1, 128], strides = [1, 1]} : vector<4x128xf32> to vector<1x128xf32>
    %431 = vector.broadcast %430 : vector<1x128xf32> to vector<16x128xf32>
    %432 = arith.mulf %431, %16 : vector<16x128xf32>
    %433 = arith.addf %429, %432 : vector<16x128xf32>
    %434 = arith.mulf %426, %433 : vector<16x128xf32>
    %435 = vector.extract_strided_slice %419 {offsets = [2, 0], sizes = [1, 128], strides = [1, 1]} : vector<4x128xf32> to vector<1x128xf32>
    %436 = vector.broadcast %435 : vector<1x128xf32> to vector<16x128xf32>
    %437 = arith.mulf %436, %9 : vector<16x128xf32>
    %438 = vector.extract_strided_slice %418 {offsets = [2, 0], sizes = [1, 128], strides = [1, 1]} : vector<4x128xf32> to vector<1x128xf32>
    %439 = vector.broadcast %438 : vector<1x128xf32> to vector<16x128xf32>
    %440 = arith.mulf %439, %18 : vector<16x128xf32>
    %441 = arith.addf %437, %440 : vector<16x128xf32>
    %442 = arith.mulf %434, %441 : vector<16x128xf32>
    %443 = vector.extract_strided_slice %419 {offsets = [3, 0], sizes = [1, 128], strides = [1, 1]} : vector<4x128xf32> to vector<1x128xf32>
    %444 = vector.broadcast %443 : vector<1x128xf32> to vector<16x128xf32>
    %445 = arith.mulf %444, %12 : vector<16x128xf32>
    %446 = vector.extract_strided_slice %418 {offsets = [3, 0], sizes = [1, 128], strides = [1, 1]} : vector<4x128xf32> to vector<1x128xf32>
    %447 = vector.broadcast %446 : vector<1x128xf32> to vector<16x128xf32>
    %448 = arith.mulf %447, %20 : vector<16x128xf32>
    %449 = arith.addf %445, %448 : vector<16x128xf32>
    %450 = arith.mulf %442, %449 : vector<16x128xf32>
    %cst_82 = arith.constant dense<0.000000e+00> : vector<32x128xf32>
    %451 = tpu.matmul %27, %450, %cst_82 {dimension_numbers = #tpu.dot_dimension_numbers<[1], [0], [0], [1], [0, 0, 1, 1], [], []>} : vector<32x16xf32>, vector<16x128xf32>, vector<32x128xf32> -> vector<32x128xf32>
    %452 = arith.mulf %451, %451 : vector<32x128xf32>
    %cst_83 = arith.constant dense<0.000000e+00> : vector<32x128xf32>
    %453 = tpu.matmul %28, %452, %cst_83 {dimension_numbers = #tpu.dot_dimension_numbers<[1], [0], [0], [1], [0, 0, 1, 1], [], []>} : vector<32x32xf32>, vector<32x128xf32>, vector<32x128xf32> -> vector<32x128xf32>
    %454 = arith.negf %453 : vector<32x128xf32>
    %455 = math.exp %454 : vector<32x128xf32>
    %cst_84 = arith.constant 1.000000e+00 : f32
    %456 = vector.broadcast %cst_84 : f32 to vector<32x128xf32>
    %457 = arith.addf %456, %455 : vector<32x128xf32>
    %458 = arith.divf %456, %457 : vector<32x128xf32>
    %459 = vector.extract_strided_slice %458 {offsets = [0, 0], sizes = [8, 128], strides = [1, 1]} : vector<32x128xf32> to vector<8x128xf32>
    %460 = vector.extract_strided_slice %458 {offsets = [8, 0], sizes = [8, 128], strides = [1, 1]} : vector<32x128xf32> to vector<8x128xf32>
    %461 = vector.extract_strided_slice %458 {offsets = [16, 0], sizes = [8, 128], strides = [1, 1]} : vector<32x128xf32> to vector<8x128xf32>
    %462 = vector.extract_strided_slice %458 {offsets = [24, 0], sizes = [8, 128], strides = [1, 1]} : vector<32x128xf32> to vector<8x128xf32>
    %cst_85 = arith.constant 2.000000e+00 : f32
    %463 = vector.broadcast %cst_85 : f32 to vector<8x128xf32>
    %464 = arith.mulf %463, %462 : vector<8x128xf32>
    %cst_86 = arith.constant 1.000000e+00 : f32
    %465 = vector.broadcast %cst_86 : f32 to vector<8x128xf32>
    %466 = arith.subf %464, %465 : vector<8x128xf32>
    %467 = arith.mulf %460, %377 : vector<8x128xf32>
    %468 = arith.mulf %459, %466 : vector<8x128xf32>
    %469 = arith.addf %467, %468 : vector<8x128xf32>
    %470 = math.tanh %469 : vector<8x128xf32>
    %471 = arith.mulf %461, %470 : vector<8x128xf32>
    %c4_i32 = arith.constant 4 : i32
    %472 = arith.index_cast %c4_i32 : i32 to index
    %c0_87 = arith.constant 0 : index
    %c0_88 = arith.constant 0 : index
    %473 = vector.load %arg7[%472, %c0_87, %c0_88] : memref<7x4x128xf32, #tpu.memory_space<vmem>>, vector<1x4x128xf32>
    %474 = vector.shape_cast %473 : vector<1x4x128xf32> to vector<4x128xf32>
    %475 = vector.extract_strided_slice %471 {offsets = [0, 0], sizes = [1, 128], strides = [1, 1]} : vector<8x128xf32> to vector<1x128xf32>
    %476 = vector.broadcast %475 : vector<1x128xf32> to vector<4x128xf32>
    %477 = arith.mulf %31, %476 : vector<4x128xf32>
    %478 = vector.extract_strided_slice %471 {offsets = [1, 0], sizes = [1, 128], strides = [1, 1]} : vector<8x128xf32> to vector<1x128xf32>
    %479 = vector.broadcast %478 : vector<1x128xf32> to vector<4x128xf32>
    %480 = arith.mulf %34, %479 : vector<4x128xf32>
    %481 = arith.addf %477, %480 : vector<4x128xf32>
    %482 = vector.extract_strided_slice %471 {offsets = [2, 0], sizes = [1, 128], strides = [1, 1]} : vector<8x128xf32> to vector<1x128xf32>
    %483 = vector.broadcast %482 : vector<1x128xf32> to vector<4x128xf32>
    %484 = arith.mulf %37, %483 : vector<4x128xf32>
    %485 = arith.addf %481, %484 : vector<4x128xf32>
    %486 = vector.extract_strided_slice %471 {offsets = [3, 0], sizes = [1, 128], strides = [1, 1]} : vector<8x128xf32> to vector<1x128xf32>
    %487 = vector.broadcast %486 : vector<1x128xf32> to vector<4x128xf32>
    %488 = arith.mulf %40, %487 : vector<4x128xf32>
    %489 = arith.addf %485, %488 : vector<4x128xf32>
    %490 = vector.extract_strided_slice %471 {offsets = [4, 0], sizes = [1, 128], strides = [1, 1]} : vector<8x128xf32> to vector<1x128xf32>
    %491 = vector.broadcast %490 : vector<1x128xf32> to vector<4x128xf32>
    %492 = arith.mulf %43, %491 : vector<4x128xf32>
    %493 = arith.addf %489, %492 : vector<4x128xf32>
    %494 = vector.extract_strided_slice %471 {offsets = [5, 0], sizes = [1, 128], strides = [1, 1]} : vector<8x128xf32> to vector<1x128xf32>
    %495 = vector.broadcast %494 : vector<1x128xf32> to vector<4x128xf32>
    %496 = arith.mulf %46, %495 : vector<4x128xf32>
    %497 = arith.addf %493, %496 : vector<4x128xf32>
    %498 = vector.extract_strided_slice %471 {offsets = [6, 0], sizes = [1, 128], strides = [1, 1]} : vector<8x128xf32> to vector<1x128xf32>
    %499 = vector.broadcast %498 : vector<1x128xf32> to vector<4x128xf32>
    %500 = arith.mulf %49, %499 : vector<4x128xf32>
    %501 = arith.addf %497, %500 : vector<4x128xf32>
    %502 = vector.extract_strided_slice %471 {offsets = [7, 0], sizes = [1, 128], strides = [1, 1]} : vector<8x128xf32> to vector<1x128xf32>
    %503 = vector.broadcast %502 : vector<1x128xf32> to vector<4x128xf32>
    %504 = arith.mulf %52, %503 : vector<4x128xf32>
    %505 = arith.addf %501, %504 : vector<4x128xf32>
    %506 = arith.addf %474, %505 : vector<4x128xf32>
    %507 = math.tanh %506 : vector<4x128xf32>
    %cst_89 = arith.constant 1.57079637 : f32
    %508 = vector.broadcast %cst_89 : f32 to vector<4x128xf32>
    %509 = arith.mulf %507, %508 : vector<4x128xf32>
    %510 = math.cos %509 : vector<4x128xf32>
    %511 = math.sin %509 : vector<4x128xf32>
    %512 = vector.extract_strided_slice %511 {offsets = [0, 0], sizes = [1, 128], strides = [1, 1]} : vector<4x128xf32> to vector<1x128xf32>
    %513 = vector.broadcast %512 : vector<1x128xf32> to vector<16x128xf32>
    %514 = arith.mulf %513, %3 : vector<16x128xf32>
    %515 = vector.extract_strided_slice %510 {offsets = [0, 0], sizes = [1, 128], strides = [1, 1]} : vector<4x128xf32> to vector<1x128xf32>
    %516 = vector.broadcast %515 : vector<1x128xf32> to vector<16x128xf32>
    %517 = arith.mulf %516, %14 : vector<16x128xf32>
    %518 = arith.addf %514, %517 : vector<16x128xf32>
    %519 = vector.extract_strided_slice %511 {offsets = [1, 0], sizes = [1, 128], strides = [1, 1]} : vector<4x128xf32> to vector<1x128xf32>
    %520 = vector.broadcast %519 : vector<1x128xf32> to vector<16x128xf32>
    %521 = arith.mulf %520, %6 : vector<16x128xf32>
    %522 = vector.extract_strided_slice %510 {offsets = [1, 0], sizes = [1, 128], strides = [1, 1]} : vector<4x128xf32> to vector<1x128xf32>
    %523 = vector.broadcast %522 : vector<1x128xf32> to vector<16x128xf32>
    %524 = arith.mulf %523, %16 : vector<16x128xf32>
    %525 = arith.addf %521, %524 : vector<16x128xf32>
    %526 = arith.mulf %518, %525 : vector<16x128xf32>
    %527 = vector.extract_strided_slice %511 {offsets = [2, 0], sizes = [1, 128], strides = [1, 1]} : vector<4x128xf32> to vector<1x128xf32>
    %528 = vector.broadcast %527 : vector<1x128xf32> to vector<16x128xf32>
    %529 = arith.mulf %528, %9 : vector<16x128xf32>
    %530 = vector.extract_strided_slice %510 {offsets = [2, 0], sizes = [1, 128], strides = [1, 1]} : vector<4x128xf32> to vector<1x128xf32>
    %531 = vector.broadcast %530 : vector<1x128xf32> to vector<16x128xf32>
    %532 = arith.mulf %531, %18 : vector<16x128xf32>
    %533 = arith.addf %529, %532 : vector<16x128xf32>
    %534 = arith.mulf %526, %533 : vector<16x128xf32>
    %535 = vector.extract_strided_slice %511 {offsets = [3, 0], sizes = [1, 128], strides = [1, 1]} : vector<4x128xf32> to vector<1x128xf32>
    %536 = vector.broadcast %535 : vector<1x128xf32> to vector<16x128xf32>
    %537 = arith.mulf %536, %12 : vector<16x128xf32>
    %538 = vector.extract_strided_slice %510 {offsets = [3, 0], sizes = [1, 128], strides = [1, 1]} : vector<4x128xf32> to vector<1x128xf32>
    %539 = vector.broadcast %538 : vector<1x128xf32> to vector<16x128xf32>
    %540 = arith.mulf %539, %20 : vector<16x128xf32>
    %541 = arith.addf %537, %540 : vector<16x128xf32>
    %542 = arith.mulf %534, %541 : vector<16x128xf32>
    %cst_90 = arith.constant dense<0.000000e+00> : vector<32x128xf32>
    %543 = tpu.matmul %27, %542, %cst_90 {dimension_numbers = #tpu.dot_dimension_numbers<[1], [0], [0], [1], [0, 0, 1, 1], [], []>} : vector<32x16xf32>, vector<16x128xf32>, vector<32x128xf32> -> vector<32x128xf32>
    %544 = arith.mulf %543, %543 : vector<32x128xf32>
    %cst_91 = arith.constant dense<0.000000e+00> : vector<32x128xf32>
    %545 = tpu.matmul %28, %544, %cst_91 {dimension_numbers = #tpu.dot_dimension_numbers<[1], [0], [0], [1], [0, 0, 1, 1], [], []>} : vector<32x32xf32>, vector<32x128xf32>, vector<32x128xf32> -> vector<32x128xf32>
    %546 = arith.negf %545 : vector<32x128xf32>
    %547 = math.exp %546 : vector<32x128xf32>
    %cst_92 = arith.constant 1.000000e+00 : f32
    %548 = vector.broadcast %cst_92 : f32 to vector<32x128xf32>
    %549 = arith.addf %548, %547 : vector<32x128xf32>
    %550 = arith.divf %548, %549 : vector<32x128xf32>
    %551 = vector.extract_strided_slice %550 {offsets = [0, 0], sizes = [8, 128], strides = [1, 1]} : vector<32x128xf32> to vector<8x128xf32>
    %552 = vector.extract_strided_slice %550 {offsets = [8, 0], sizes = [8, 128], strides = [1, 1]} : vector<32x128xf32> to vector<8x128xf32>
    %553 = vector.extract_strided_slice %550 {offsets = [16, 0], sizes = [8, 128], strides = [1, 1]} : vector<32x128xf32> to vector<8x128xf32>
    %554 = vector.extract_strided_slice %550 {offsets = [24, 0], sizes = [8, 128], strides = [1, 1]} : vector<32x128xf32> to vector<8x128xf32>
    %cst_93 = arith.constant 2.000000e+00 : f32
    %555 = vector.broadcast %cst_93 : f32 to vector<8x128xf32>
    %556 = arith.mulf %555, %554 : vector<8x128xf32>
    %cst_94 = arith.constant 1.000000e+00 : f32
    %557 = vector.broadcast %cst_94 : f32 to vector<8x128xf32>
    %558 = arith.subf %556, %557 : vector<8x128xf32>
    %559 = arith.mulf %552, %469 : vector<8x128xf32>
    %560 = arith.mulf %551, %558 : vector<8x128xf32>
    %561 = arith.addf %559, %560 : vector<8x128xf32>
    %562 = math.tanh %561 : vector<8x128xf32>
    %563 = arith.mulf %553, %562 : vector<8x128xf32>
    %c5_i32 = arith.constant 5 : i32
    %564 = arith.index_cast %c5_i32 : i32 to index
    %c0_95 = arith.constant 0 : index
    %c0_96 = arith.constant 0 : index
    %565 = vector.load %arg7[%564, %c0_95, %c0_96] : memref<7x4x128xf32, #tpu.memory_space<vmem>>, vector<1x4x128xf32>
    %566 = vector.shape_cast %565 : vector<1x4x128xf32> to vector<4x128xf32>
    %567 = vector.extract_strided_slice %563 {offsets = [0, 0], sizes = [1, 128], strides = [1, 1]} : vector<8x128xf32> to vector<1x128xf32>
    %568 = vector.broadcast %567 : vector<1x128xf32> to vector<4x128xf32>
    %569 = arith.mulf %31, %568 : vector<4x128xf32>
    %570 = vector.extract_strided_slice %563 {offsets = [1, 0], sizes = [1, 128], strides = [1, 1]} : vector<8x128xf32> to vector<1x128xf32>
    %571 = vector.broadcast %570 : vector<1x128xf32> to vector<4x128xf32>
    %572 = arith.mulf %34, %571 : vector<4x128xf32>
    %573 = arith.addf %569, %572 : vector<4x128xf32>
    %574 = vector.extract_strided_slice %563 {offsets = [2, 0], sizes = [1, 128], strides = [1, 1]} : vector<8x128xf32> to vector<1x128xf32>
    %575 = vector.broadcast %574 : vector<1x128xf32> to vector<4x128xf32>
    %576 = arith.mulf %37, %575 : vector<4x128xf32>
    %577 = arith.addf %573, %576 : vector<4x128xf32>
    %578 = vector.extract_strided_slice %563 {offsets = [3, 0], sizes = [1, 128], strides = [1, 1]} : vector<8x128xf32> to vector<1x128xf32>
    %579 = vector.broadcast %578 : vector<1x128xf32> to vector<4x128xf32>
    %580 = arith.mulf %40, %579 : vector<4x128xf32>
    %581 = arith.addf %577, %580 : vector<4x128xf32>
    %582 = vector.extract_strided_slice %563 {offsets = [4, 0], sizes = [1, 128], strides = [1, 1]} : vector<8x128xf32> to vector<1x128xf32>
    %583 = vector.broadcast %582 : vector<1x128xf32> to vector<4x128xf32>
    %584 = arith.mulf %43, %583 : vector<4x128xf32>
    %585 = arith.addf %581, %584 : vector<4x128xf32>
    %586 = vector.extract_strided_slice %563 {offsets = [5, 0], sizes = [1, 128], strides = [1, 1]} : vector<8x128xf32> to vector<1x128xf32>
    %587 = vector.broadcast %586 : vector<1x128xf32> to vector<4x128xf32>
    %588 = arith.mulf %46, %587 : vector<4x128xf32>
    %589 = arith.addf %585, %588 : vector<4x128xf32>
    %590 = vector.extract_strided_slice %563 {offsets = [6, 0], sizes = [1, 128], strides = [1, 1]} : vector<8x128xf32> to vector<1x128xf32>
    %591 = vector.broadcast %590 : vector<1x128xf32> to vector<4x128xf32>
    %592 = arith.mulf %49, %591 : vector<4x128xf32>
    %593 = arith.addf %589, %592 : vector<4x128xf32>
    %594 = vector.extract_strided_slice %563 {offsets = [7, 0], sizes = [1, 128], strides = [1, 1]} : vector<8x128xf32> to vector<1x128xf32>
    %595 = vector.broadcast %594 : vector<1x128xf32> to vector<4x128xf32>
    %596 = arith.mulf %52, %595 : vector<4x128xf32>
    %597 = arith.addf %593, %596 : vector<4x128xf32>
    %598 = arith.addf %566, %597 : vector<4x128xf32>
    %599 = math.tanh %598 : vector<4x128xf32>
    %cst_97 = arith.constant 1.57079637 : f32
    %600 = vector.broadcast %cst_97 : f32 to vector<4x128xf32>
    %601 = arith.mulf %599, %600 : vector<4x128xf32>
    %602 = math.cos %601 : vector<4x128xf32>
    %603 = math.sin %601 : vector<4x128xf32>
    %604 = vector.extract_strided_slice %603 {offsets = [0, 0], sizes = [1, 128], strides = [1, 1]} : vector<4x128xf32> to vector<1x128xf32>
    %605 = vector.broadcast %604 : vector<1x128xf32> to vector<16x128xf32>
    %606 = arith.mulf %605, %3 : vector<16x128xf32>
    %607 = vector.extract_strided_slice %602 {offsets = [0, 0], sizes = [1, 128], strides = [1, 1]} : vector<4x128xf32> to vector<1x128xf32>
    %608 = vector.broadcast %607 : vector<1x128xf32> to vector<16x128xf32>
    %609 = arith.mulf %608, %14 : vector<16x128xf32>
    %610 = arith.addf %606, %609 : vector<16x128xf32>
    %611 = vector.extract_strided_slice %603 {offsets = [1, 0], sizes = [1, 128], strides = [1, 1]} : vector<4x128xf32> to vector<1x128xf32>
    %612 = vector.broadcast %611 : vector<1x128xf32> to vector<16x128xf32>
    %613 = arith.mulf %612, %6 : vector<16x128xf32>
    %614 = vector.extract_strided_slice %602 {offsets = [1, 0], sizes = [1, 128], strides = [1, 1]} : vector<4x128xf32> to vector<1x128xf32>
    %615 = vector.broadcast %614 : vector<1x128xf32> to vector<16x128xf32>
    %616 = arith.mulf %615, %16 : vector<16x128xf32>
    %617 = arith.addf %613, %616 : vector<16x128xf32>
    %618 = arith.mulf %610, %617 : vector<16x128xf32>
    %619 = vector.extract_strided_slice %603 {offsets = [2, 0], sizes = [1, 128], strides = [1, 1]} : vector<4x128xf32> to vector<1x128xf32>
    %620 = vector.broadcast %619 : vector<1x128xf32> to vector<16x128xf32>
    %621 = arith.mulf %620, %9 : vector<16x128xf32>
    %622 = vector.extract_strided_slice %602 {offsets = [2, 0], sizes = [1, 128], strides = [1, 1]} : vector<4x128xf32> to vector<1x128xf32>
    %623 = vector.broadcast %622 : vector<1x128xf32> to vector<16x128xf32>
    %624 = arith.mulf %623, %18 : vector<16x128xf32>
    %625 = arith.addf %621, %624 : vector<16x128xf32>
    %626 = arith.mulf %618, %625 : vector<16x128xf32>
    %627 = vector.extract_strided_slice %603 {offsets = [3, 0], sizes = [1, 128], strides = [1, 1]} : vector<4x128xf32> to vector<1x128xf32>
    %628 = vector.broadcast %627 : vector<1x128xf32> to vector<16x128xf32>
    %629 = arith.mulf %628, %12 : vector<16x128xf32>
    %630 = vector.extract_strided_slice %602 {offsets = [3, 0], sizes = [1, 128], strides = [1, 1]} : vector<4x128xf32> to vector<1x128xf32>
    %631 = vector.broadcast %630 : vector<1x128xf32> to vector<16x128xf32>
    %632 = arith.mulf %631, %20 : vector<16x128xf32>
    %633 = arith.addf %629, %632 : vector<16x128xf32>
    %634 = arith.mulf %626, %633 : vector<16x128xf32>
    %cst_98 = arith.constant dense<0.000000e+00> : vector<32x128xf32>
    %635 = tpu.matmul %27, %634, %cst_98 {dimension_numbers = #tpu.dot_dimension_numbers<[1], [0], [0], [1], [0, 0, 1, 1], [], []>} : vector<32x16xf32>, vector<16x128xf32>, vector<32x128xf32> -> vector<32x128xf32>
    %636 = arith.mulf %635, %635 : vector<32x128xf32>
    %cst_99 = arith.constant dense<0.000000e+00> : vector<32x128xf32>
    %637 = tpu.matmul %28, %636, %cst_99 {dimension_numbers = #tpu.dot_dimension_numbers<[1], [0], [0], [1], [0, 0, 1, 1], [], []>} : vector<32x32xf32>, vector<32x128xf32>, vector<32x128xf32> -> vector<32x128xf32>
    %638 = arith.negf %637 : vector<32x128xf32>
    %639 = math.exp %638 : vector<32x128xf32>
    %cst_100 = arith.constant 1.000000e+00 : f32
    %640 = vector.broadcast %cst_100 : f32 to vector<32x128xf32>
    %641 = arith.addf %640, %639 : vector<32x128xf32>
    %642 = arith.divf %640, %641 : vector<32x128xf32>
    %643 = vector.extract_strided_slice %642 {offsets = [0, 0], sizes = [8, 128], strides = [1, 1]} : vector<32x128xf32> to vector<8x128xf32>
    %644 = vector.extract_strided_slice %642 {offsets = [8, 0], sizes = [8, 128], strides = [1, 1]} : vector<32x128xf32> to vector<8x128xf32>
    %645 = vector.extract_strided_slice %642 {offsets = [16, 0], sizes = [8, 128], strides = [1, 1]} : vector<32x128xf32> to vector<8x128xf32>
    %646 = vector.extract_strided_slice %642 {offsets = [24, 0], sizes = [8, 128], strides = [1, 1]} : vector<32x128xf32> to vector<8x128xf32>
    %cst_101 = arith.constant 2.000000e+00 : f32
    %647 = vector.broadcast %cst_101 : f32 to vector<8x128xf32>
    %648 = arith.mulf %647, %646 : vector<8x128xf32>
    %cst_102 = arith.constant 1.000000e+00 : f32
    %649 = vector.broadcast %cst_102 : f32 to vector<8x128xf32>
    %650 = arith.subf %648, %649 : vector<8x128xf32>
    %651 = arith.mulf %644, %561 : vector<8x128xf32>
    %652 = arith.mulf %643, %650 : vector<8x128xf32>
    %653 = arith.addf %651, %652 : vector<8x128xf32>
    %654 = math.tanh %653 : vector<8x128xf32>
    %655 = arith.mulf %645, %654 : vector<8x128xf32>
    %c6_i32 = arith.constant 6 : i32
    %656 = arith.index_cast %c6_i32 : i32 to index
    %c0_103 = arith.constant 0 : index
    %c0_104 = arith.constant 0 : index
    %657 = vector.load %arg7[%656, %c0_103, %c0_104] : memref<7x4x128xf32, #tpu.memory_space<vmem>>, vector<1x4x128xf32>
    %658 = vector.shape_cast %657 : vector<1x4x128xf32> to vector<4x128xf32>
    %659 = vector.extract_strided_slice %655 {offsets = [0, 0], sizes = [1, 128], strides = [1, 1]} : vector<8x128xf32> to vector<1x128xf32>
    %660 = vector.broadcast %659 : vector<1x128xf32> to vector<4x128xf32>
    %661 = arith.mulf %31, %660 : vector<4x128xf32>
    %662 = vector.extract_strided_slice %655 {offsets = [1, 0], sizes = [1, 128], strides = [1, 1]} : vector<8x128xf32> to vector<1x128xf32>
    %663 = vector.broadcast %662 : vector<1x128xf32> to vector<4x128xf32>
    %664 = arith.mulf %34, %663 : vector<4x128xf32>
    %665 = arith.addf %661, %664 : vector<4x128xf32>
    %666 = vector.extract_strided_slice %655 {offsets = [2, 0], sizes = [1, 128], strides = [1, 1]} : vector<8x128xf32> to vector<1x128xf32>
    %667 = vector.broadcast %666 : vector<1x128xf32> to vector<4x128xf32>
    %668 = arith.mulf %37, %667 : vector<4x128xf32>
    %669 = arith.addf %665, %668 : vector<4x128xf32>
    %670 = vector.extract_strided_slice %655 {offsets = [3, 0], sizes = [1, 128], strides = [1, 1]} : vector<8x128xf32> to vector<1x128xf32>
    %671 = vector.broadcast %670 : vector<1x128xf32> to vector<4x128xf32>
    %672 = arith.mulf %40, %671 : vector<4x128xf32>
    %673 = arith.addf %669, %672 : vector<4x128xf32>
    %674 = vector.extract_strided_slice %655 {offsets = [4, 0], sizes = [1, 128], strides = [1, 1]} : vector<8x128xf32> to vector<1x128xf32>
    %675 = vector.broadcast %674 : vector<1x128xf32> to vector<4x128xf32>
    %676 = arith.mulf %43, %675 : vector<4x128xf32>
    %677 = arith.addf %673, %676 : vector<4x128xf32>
    %678 = vector.extract_strided_slice %655 {offsets = [5, 0], sizes = [1, 128], strides = [1, 1]} : vector<8x128xf32> to vector<1x128xf32>
    %679 = vector.broadcast %678 : vector<1x128xf32> to vector<4x128xf32>
    %680 = arith.mulf %46, %679 : vector<4x128xf32>
    %681 = arith.addf %677, %680 : vector<4x128xf32>
    %682 = vector.extract_strided_slice %655 {offsets = [6, 0], sizes = [1, 128], strides = [1, 1]} : vector<8x128xf32> to vector<1x128xf32>
    %683 = vector.broadcast %682 : vector<1x128xf32> to vector<4x128xf32>
    %684 = arith.mulf %49, %683 : vector<4x128xf32>
    %685 = arith.addf %681, %684 : vector<4x128xf32>
    %686 = vector.extract_strided_slice %655 {offsets = [7, 0], sizes = [1, 128], strides = [1, 1]} : vector<8x128xf32> to vector<1x128xf32>
    %687 = vector.broadcast %686 : vector<1x128xf32> to vector<4x128xf32>
    %688 = arith.mulf %52, %687 : vector<4x128xf32>
    %689 = arith.addf %685, %688 : vector<4x128xf32>
    %690 = arith.addf %658, %689 : vector<4x128xf32>
    %691 = math.tanh %690 : vector<4x128xf32>
    %cst_105 = arith.constant 1.57079637 : f32
    %692 = vector.broadcast %cst_105 : f32 to vector<4x128xf32>
    %693 = arith.mulf %691, %692 : vector<4x128xf32>
    %694 = math.cos %693 : vector<4x128xf32>
    %695 = math.sin %693 : vector<4x128xf32>
    %696 = vector.extract_strided_slice %695 {offsets = [0, 0], sizes = [1, 128], strides = [1, 1]} : vector<4x128xf32> to vector<1x128xf32>
    %697 = vector.broadcast %696 : vector<1x128xf32> to vector<16x128xf32>
    %698 = arith.mulf %697, %3 : vector<16x128xf32>
    %699 = vector.extract_strided_slice %694 {offsets = [0, 0], sizes = [1, 128], strides = [1, 1]} : vector<4x128xf32> to vector<1x128xf32>
    %700 = vector.broadcast %699 : vector<1x128xf32> to vector<16x128xf32>
    %701 = arith.mulf %700, %14 : vector<16x128xf32>
    %702 = arith.addf %698, %701 : vector<16x128xf32>
    %703 = vector.extract_strided_slice %695 {offsets = [1, 0], sizes = [1, 128], strides = [1, 1]} : vector<4x128xf32> to vector<1x128xf32>
    %704 = vector.broadcast %703 : vector<1x128xf32> to vector<16x128xf32>
    %705 = arith.mulf %704, %6 : vector<16x128xf32>
    %706 = vector.extract_strided_slice %694 {offsets = [1, 0], sizes = [1, 128], strides = [1, 1]} : vector<4x128xf32> to vector<1x128xf32>
    %707 = vector.broadcast %706 : vector<1x128xf32> to vector<16x128xf32>
    %708 = arith.mulf %707, %16 : vector<16x128xf32>
    %709 = arith.addf %705, %708 : vector<16x128xf32>
    %710 = arith.mulf %702, %709 : vector<16x128xf32>
    %711 = vector.extract_strided_slice %695 {offsets = [2, 0], sizes = [1, 128], strides = [1, 1]} : vector<4x128xf32> to vector<1x128xf32>
    %712 = vector.broadcast %711 : vector<1x128xf32> to vector<16x128xf32>
    %713 = arith.mulf %712, %9 : vector<16x128xf32>
    %714 = vector.extract_strided_slice %694 {offsets = [2, 0], sizes = [1, 128], strides = [1, 1]} : vector<4x128xf32> to vector<1x128xf32>
    %715 = vector.broadcast %714 : vector<1x128xf32> to vector<16x128xf32>
    %716 = arith.mulf %715, %18 : vector<16x128xf32>
    %717 = arith.addf %713, %716 : vector<16x128xf32>
    %718 = arith.mulf %710, %717 : vector<16x128xf32>
    %719 = vector.extract_strided_slice %695 {offsets = [3, 0], sizes = [1, 128], strides = [1, 1]} : vector<4x128xf32> to vector<1x128xf32>
    %720 = vector.broadcast %719 : vector<1x128xf32> to vector<16x128xf32>
    %721 = arith.mulf %720, %12 : vector<16x128xf32>
    %722 = vector.extract_strided_slice %694 {offsets = [3, 0], sizes = [1, 128], strides = [1, 1]} : vector<4x128xf32> to vector<1x128xf32>
    %723 = vector.broadcast %722 : vector<1x128xf32> to vector<16x128xf32>
    %724 = arith.mulf %723, %20 : vector<16x128xf32>
    %725 = arith.addf %721, %724 : vector<16x128xf32>
    %726 = arith.mulf %718, %725 : vector<16x128xf32>
    %cst_106 = arith.constant dense<0.000000e+00> : vector<32x128xf32>
    %727 = tpu.matmul %27, %726, %cst_106 {dimension_numbers = #tpu.dot_dimension_numbers<[1], [0], [0], [1], [0, 0, 1, 1], [], []>} : vector<32x16xf32>, vector<16x128xf32>, vector<32x128xf32> -> vector<32x128xf32>
    %728 = arith.mulf %727, %727 : vector<32x128xf32>
    %cst_107 = arith.constant dense<0.000000e+00> : vector<32x128xf32>
    %729 = tpu.matmul %28, %728, %cst_107 {dimension_numbers = #tpu.dot_dimension_numbers<[1], [0], [0], [1], [0, 0, 1, 1], [], []>} : vector<32x32xf32>, vector<32x128xf32>, vector<32x128xf32> -> vector<32x128xf32>
    %730 = arith.negf %729 : vector<32x128xf32>
    %731 = math.exp %730 : vector<32x128xf32>
    %cst_108 = arith.constant 1.000000e+00 : f32
    %732 = vector.broadcast %cst_108 : f32 to vector<32x128xf32>
    %733 = arith.addf %732, %731 : vector<32x128xf32>
    %734 = arith.divf %732, %733 : vector<32x128xf32>
    %735 = vector.extract_strided_slice %734 {offsets = [0, 0], sizes = [8, 128], strides = [1, 1]} : vector<32x128xf32> to vector<8x128xf32>
    %736 = vector.extract_strided_slice %734 {offsets = [8, 0], sizes = [8, 128], strides = [1, 1]} : vector<32x128xf32> to vector<8x128xf32>
    %737 = vector.extract_strided_slice %734 {offsets = [16, 0], sizes = [8, 128], strides = [1, 1]} : vector<32x128xf32> to vector<8x128xf32>
    %738 = vector.extract_strided_slice %734 {offsets = [24, 0], sizes = [8, 128], strides = [1, 1]} : vector<32x128xf32> to vector<8x128xf32>
    %cst_109 = arith.constant 2.000000e+00 : f32
    %739 = vector.broadcast %cst_109 : f32 to vector<8x128xf32>
    %740 = arith.mulf %739, %738 : vector<8x128xf32>
    %cst_110 = arith.constant 1.000000e+00 : f32
    %741 = vector.broadcast %cst_110 : f32 to vector<8x128xf32>
    %742 = arith.subf %740, %741 : vector<8x128xf32>
    %743 = arith.mulf %736, %653 : vector<8x128xf32>
    %744 = arith.mulf %735, %742 : vector<8x128xf32>
    %745 = arith.addf %743, %744 : vector<8x128xf32>
    %746 = math.tanh %745 : vector<8x128xf32>
    %747 = arith.mulf %737, %746 : vector<8x128xf32>
    %c7_i32 = arith.constant 7 : i32
    %c0_111 = arith.constant 0 : index
    %c0_112 = arith.constant 0 : index
    %748 = vector.load %arg6[%c0_111, %c0_112] : memref<8x128xf32, #tpu.memory_space<vmem>>, vector<8x128xf32>
    tpu.vector_store %arg6[%c0_111, %c0_112], %747 {strides = array<i32>} : memref<8x128xf32, #tpu.memory_space<vmem>>, vector<8x128xf32>,
    return
  }
  func.func @transform_0(%arg0: i32) -> (i32, i32, i32) {
    %c0_i32 = arith.constant 0 : i32
    %c0_i32_0 = arith.constant 0 : i32
    %c0_i32_1 = arith.constant 0 : i32
    return %c0_i32, %c0_i32_0, %arg0 : i32, i32, i32
  }
  func.func @transform_1(%arg0: i32) -> (i32, i32) {
    %c0_i32 = arith.constant 0 : i32
    %c0_i32_0 = arith.constant 0 : i32
    %c0_i32_1 = arith.constant 0 : i32
    return %c0_i32, %c0_i32_0 : i32, i32
  }
  func.func @transform_2(%arg0: i32) -> (i32, i32) {
    %c0_i32 = arith.constant 0 : i32
    %c0_i32_0 = arith.constant 0 : i32
    %c0_i32_1 = arith.constant 0 : i32
    return %c0_i32, %c0_i32_0 : i32, i32
  }
  func.func @transform_3(%arg0: i32) -> (i32, i32) {
    %c0_i32 = arith.constant 0 : i32
    %c0_i32_0 = arith.constant 0 : i32
    %c0_i32_1 = arith.constant 0 : i32
    return %c0_i32, %c0_i32_0 : i32, i32
  }
  func.func @transform_4(%arg0: i32) -> (i32, i32) {
    %c0_i32 = arith.constant 0 : i32
    %c0_i32_0 = arith.constant 0 : i32
    %c0_i32_1 = arith.constant 0 : i32
    return %c0_i32, %c0_i32_0 : i32, i32
  }
  func.func @transform_5(%arg0: i32) -> (i32, i32) {
    %c0_i32 = arith.constant 0 : i32
    %c0_i32_0 = arith.constant 0 : i32
    return %c0_i32, %arg0 : i32, i32
  }
}

</mosaic_0001>

<llo_original>
// kernel: tpu_custom_call.1
$region0: #{tpu_custom_call.1}
  #allocation0 [shape = 'u32[]', space=smem, size = 0x4, offset = 0x4, fixed_abs, tag = 'smem constant byte address 0x4 - core index']
  #allocation1 [shape = 'u32[144,128]{1,0:T(1,128)}', space=vmem, size = 0x12000, scoped, tag = 'internal scratch']
  #allocation2 [shape = 'f32[7,4,128]{2,1,0:T(4,128)}', space=vmem, size = 0x3800, scoped, tag = 'scratch operand']
  %s0 = inlined_call_operand.vmem [shape: f32[7,10,128], index: 0, kind: input, shape index: {}]
  %s1 = inlined_call_operand.vmem [shape: f32[16,4], index: 1, kind: input, shape index: {}]
  %s2 = inlined_call_operand.vmem [shape: f32[4,19], index: 2, kind: input, shape index: {}]
  %s3 = inlined_call_operand.vmem [shape: f32[32,16], index: 3, kind: input, shape index: {}]
  %s4 = inlined_call_operand.vmem [shape: f32[32,32], index: 4, kind: input, shape index: {}]
  %s5 = inlined_call_operand.hbm [shape: f32[8,128], index: 5, kind: output, shape index: {}]
  %s6 = sld [smem:[#allocation0]]
  $region30: #{tpu_custom_call.1} parent=0
    _
  %s8 = ssub.s32 1, %s6
  %s9 = scalar_select 0, %s8, %s6
  $region1: #{tpu_custom_call.1} parent=0
    #allocation3 [shape = 'u8[4096]{0}', space=vmem, size = 0x1000, scoped, tag = 'output window, operand 0, single buffered']
    #allocation4 [shape = 's32[1]{0}', space=sflag, size = 0x4, scoped, tag = 'scoped memory for tpu_custom_call.1']
    %10 = vsyncpa [#allocation4], 0
    // Predicated region
    $region2: #{tpu_custom_call.1} parent=1 // pred_check
      _
    $region3: #{tpu_custom_call.1} parent=1 // pred_check_branch
      %12 = sbr.rel (0) target = $region5
    $region4: #{tpu_custom_call.1} parent=1 // pred_region
      _
    $region5: #{tpu_custom_call.1} parent=1 // pred_fallthru
      _
    // Predicated region
    $region6: #{tpu_custom_call.1} parent=1 // pred_check
      _
    $region7: #{tpu_custom_call.1} parent=1 // pred_check_branch
      %14 = sbr.rel (0) target = $region9
    $region8: #{tpu_custom_call.1} parent=1 // pred_region
      _
    $region9: #{tpu_custom_call.1} parent=1 // pred_fallthru
      _
    // Predicated region
    $region10: #{tpu_custom_call.1} parent=1 // pred_check
      _
    $region11: #{tpu_custom_call.1} parent=1 // pred_check_branch
      %16 = sbr.rel (0) target = $region13
    $region12: #{tpu_custom_call.1} parent=1 // pred_region
      _
    $region13: #{tpu_custom_call.1} parent=1 // pred_fallthru
      _
    // Predicated region
    $region14: #{tpu_custom_call.1} parent=1 // pred_check
      _
    $region15: #{tpu_custom_call.1} parent=1 // pred_check_branch
      %18 = sbr.rel (0) target = $region17
    $region16: #{tpu_custom_call.1} parent=1 // pred_region
      _
    $region17: #{tpu_custom_call.1} parent=1 // pred_fallthru
      _
    // Predicated region
    $region18: #{tpu_custom_call.1} parent=1 // pred_check
      _
    $region19: #{tpu_custom_call.1} parent=1 // pred_check_branch
      %20 = sbr.rel (0) target = $region21
    $region20: #{tpu_custom_call.1} parent=1 // pred_region
      _
    $region21: #{tpu_custom_call.1} parent=1 // pred_fallthru
      _
    %v21 = vld [vmem:[%s1] sm:$0xff]
    %v22 = vld [vmem:[%s1 + $0x8] sm:$0xff]
    %24 = vset.pattern.permute.xlu0 0
    %25 = vperm.xlu0 %24, %v21
    %v26 = vpop.permute.xlu0 %25
    %29 = vset.pattern.permute.xlu0 0
    %30 = vperm.xlu0 %29, %v22
    %v31 = vpop.permute.xlu0 %30
    %33 = vset.pattern.permute.xlu0 1
    %34 = vperm.xlu0 %33, %v21
    %v35 = vpop.permute.xlu0 %34
    %37 = vset.pattern.permute.xlu0 1
    %38 = vperm.xlu0 %37, %v22
    %v39 = vpop.permute.xlu0 %38
    %41 = vset.pattern.permute.xlu0 2
    %42 = vperm.xlu0 %41, %v21
    %v43 = vpop.permute.xlu0 %42
    %45 = vset.pattern.permute.xlu0 2
    %46 = vperm.xlu0 %45, %v22
    %v47 = vpop.permute.xlu0 %46
    %49 = vset.pattern.permute.xlu0 3
    %50 = vperm.xlu0 %49, %v21
    %v51 = vpop.permute.xlu0 %50
    %53 = vset.pattern.permute.xlu0 3
    %54 = vperm.xlu0 %53, %v22
    %v55 = vpop.permute.xlu0 %54
    %v57 = vsub.f32 1.0, %v26
    %v58 = vsub.f32 1.0, %v31
    %v59 = vsub.f32 1.0, %v35
    %v60 = vsub.f32 1.0, %v39
    %v61 = vsub.f32 1.0, %v43
    %v62 = vsub.f32 1.0, %v47
    %v63 = vsub.f32 1.0, %v51
    %v64 = vsub.f32 1.0, %v55
    %v65 = vld [vmem:[%s2] sm:$0xf]
    %67 = vset.pattern.permute.xlu0 18
    %68 = vperm.xlu0 %67, %v65
    %v69 = vpop.permute.xlu0 %68
    %v71 = vld [vmem:[%s3] sm:$0xff]
    %v72 = vld [vmem:[%s3 + $0x8] sm:$0xff]
    %v73 = vld [vmem:[%s3 + $0x10] sm:$0xff]
    %v74 = vld [vmem:[%s3 + $0x18] sm:$0xff]
    %v75 = vld [vmem:[%s4] sm:$0xff]
    %v76 = vld [vmem:[%s4 + $0x8] sm:$0xff]
    %v77 = vld [vmem:[%s4 + $0x10] sm:$0xff]
    %v78 = vld [vmem:[%s4 + $0x18] sm:$0xff]
    %79 = vset.pattern.permute.xlu0 10
    %80 = vperm.xlu0 %79, %v65
    %v81 = vpop.permute.xlu0 %80
    %83 = vset.pattern.permute.xlu0 11
    %84 = vperm.xlu0 %83, %v65
    %v85 = vpop.permute.xlu0 %84
    %87 = vset.pattern.permute.xlu0 12
    %88 = vperm.xlu0 %87, %v65
    %v89 = vpop.permute.xlu0 %88
    %91 = vset.pattern.permute.xlu0 13
    %92 = vperm.xlu0 %91, %v65
    %v93 = vpop.permute.xlu0 %92
    %95 = vset.pattern.permute.xlu0 14
    %96 = vperm.xlu0 %95, %v65
    %v97 = vpop.permute.xlu0 %96
    %99 = vset.pattern.permute.xlu0 15
    %100 = vperm.xlu0 %99, %v65
    %v101 = vpop.permute.xlu0 %100
    %103 = vset.pattern.permute.xlu0 16
    %104 = vperm.xlu0 %103, %v65
    %v105 = vpop.permute.xlu0 %104
    %107 = vset.pattern.permute.xlu0 17
    %108 = vperm.xlu0 %107, %v65
    %v109 = vpop.permute.xlu0 %108
    %v111 = vld [vmem:[%s0] sm:$0xff]
    %v112 = vld [vmem:[%s0 + $0x8] sm:$0x3]
    %vm113 = vcmask 80896
    %v114 = vsel %vm113, %v65, 0
    %vm116 = vcmask 1041408
    %v118 = vsel %vm116, %v112, 0
    %120 = vmatprep.subr.mxu0 0.0
    %121 = vmatpush1.msra.mxu0 %v111
    %122 = vmatprep.subr.mxu0 0.0
    %123 = vmatpush1.msra.mxu0 %v118
    %124 = vmatprep.subr.mxu0 0.0
    %125 = vmatpush1.msra.mxu0 0.0
    %126 = vmatprep.subr.mxu0 0.0
    %127 = vmatpush1.msra.mxu0 0.0
    %128 = vmatprep.subr.mxu0 0.0
    %129 = vmatpush1.msra.mxu0 0.0
    %130 = vmatprep.subr.mxu0 0.0
    %131 = vmatpush1.msra.mxu0 0.0
    %132 = vmatprep.subr.mxu0 0.0
    %133 = vmatpush1.msra.mxu0 0.0
    %134 = vmatprep.subr.mxu0 0.0
    %135 = vmatpush1.msra.mxu0 0.0
    %136 = vmatprep.subr.mxu0 0.0
    %137 = vmatpush1.msra.mxu0 0.0
    %138 = vmatprep.subr.mxu0 0.0
    %139 = vmatpush1.msra.mxu0 0.0
    %140 = vmatprep.subr.mxu0 0.0
    %141 = vmatpush1.msra.mxu0 0.0
    %142 = vmatprep.subr.mxu0 0.0
    %143 = vmatpush1.msra.mxu0 0.0
    %144 = vmatprep.subr.mxu0 0.0
    %145 = vmatpush1.msra.mxu0 0.0
    %146 = vmatprep.subr.mxu0 0.0
    %147 = vmatpush1.msra.mxu0 0.0
    %148 = vmatprep.subr.mxu0 0.0
    %149 = vmatpush1.msra.mxu0 0.0
    %150 = vmatprep.subr.mxu0 0.0
    %151 = vmatpush1.msra.mxu0 0.0
    %152 = vmatprep.subr.mxu0 0.0
    %153 = vmatpush1.msra.mxu0 0.0
    %154 = vmatprep.subr.mxu0 0.0
    %155 = vmatpush1.msra.mxu0 0.0
    %156 = vmatprep.subr.mxu0 0.0
    %157 = vmatpush1.msra.mxu0 0.0
    %158 = vmatprep.subr.mxu0 0.0
    %159 = vmatpush1.msra.mxu0 0.0
    %160 = vmatprep.subr.mxu0 0.0
    %161 = vmatpush1.msra.mxu0 0.0
    %162 = vmatprep.subr.mxu0 0.0
    %163 = vmatpush1.msra.mxu0 0.0
    %164 = vmatprep.subr.mxu0 0.0
    %165 = vmatpush1.msra.mxu0 0.0
    %166 = vmatprep.subr.mxu0 0.0
    %167 = vmatpush1.msra.mxu0 0.0
    %168 = vmatprep.subr.mxu0 0.0
    %169 = vmatpush1.msra.mxu0 0.0
    %170 = vmatprep.subr.mxu0 0.0
    %171 = vmatpush1.msra.mxu0 0.0
    %172 = vmatprep.subr.mxu0 0.0
    %173 = vmatpush1.msra.mxu0 0.0
    %174 = vmatprep.subr.mxu0 0.0
    %175 = vmatpush1.msra.mxu0 0.0
    %176 = vmatprep.subr.mxu0 0.0
    %177 = vmatpush1.msra.mxu0 0.0
    %178 = vmatprep.subr.mxu0 0.0
    %179 = vmatpush1.msra.mxu0 0.0
    %180 = vmatprep.subr.mxu0 0.0
    %181 = vmatpush1.msra.mxu0 0.0
    %182 = vmatprep.subr.mxu0 0.0
    %183 = vmatpush1.msra.mxu0 0.0
    %184 = vmatprep.mubr.f32.mxu0 0.0
    %185 = vmatmul.mubr.f32.gmra.mrb[0].mxu0 %v114
    %v186 = vpop.f32.mrb[0].mxu0
    %v187 = vadd.f32 %v69, %v186
    %v188 = vpop.f32.mrb[0].mxu0
    %189 = vdwg.mxu0
    %190 = vst [vmem:[#allocation2] sm:$0xf] %v187
    %s191 = scalar_lea.vmem %s0, 16
    %v192 = vld [vmem:[%s191] sm:$0xff]
    %v193 = vld [vmem:[%s191 + $0x8] sm:$0x3]
    %v195 = vsel %vm116, %v193, 0
    %197 = vmatprep.subr.mxu0 0.0
    %198 = vmatpush1.msra.mxu0 %v192
    %199 = vmatprep.subr.mxu0 0.0
    %200 = vmatpush1.msra.mxu0 %v195
    %201 = vmatprep.subr.mxu0 0.0
    %202 = vmatpush1.msra.mxu0 0.0
    %203 = vmatprep.subr.mxu0 0.0
    %204 = vmatpush1.msra.mxu0 0.0
    %205 = vmatprep.subr.mxu0 0.0
    %206 = vmatpush1.msra.mxu0 0.0
    %207 = vmatprep.subr.mxu0 0.0
    %208 = vmatpush1.msra.mxu0 0.0
    %209 = vmatprep.subr.mxu0 0.0
    %210 = vmatpush1.msra.mxu0 0.0
    %211 = vmatprep.subr.mxu0 0.0
    %212 = vmatpush1.msra.mxu0 0.0
    %213 = vmatprep.subr.mxu0 0.0
    %214 = vmatpush1.msra.mxu0 0.0
    %215 = vmatprep.subr.mxu0 0.0
    %216 = vmatpush1.msra.mxu0 0.0
    %217 = vmatprep.subr.mxu0 0.0
    %218 = vmatpush1.msra.mxu0 0.0
    %219 = vmatprep.subr.mxu0 0.0
    %220 = vmatpush1.msra.mxu0 0.0
    %221 = vmatprep.subr.mxu0 0.0
    %222 = vmatpush1.msra.mxu0 0.0
    %223 = vmatprep.subr.mxu0 0.0
    %224 = vmatpush1.msra.mxu0 0.0
    %225 = vmatprep.subr.mxu0 0.0
    %226 = vmatpush1.msra.mxu0 0.0
    %227 = vmatprep.subr.mxu0 0.0
    %228 = vmatpush1.msra.mxu0 0.0
    %229 = vmatprep.subr.mxu0 0.0
    %230 = vmatpush1.msra.mxu0 0.0
    %231 = vmatprep.subr.mxu0 0.0
    %232 = vmatpush1.msra.mxu0 0.0
    %233 = vmatprep.subr.mxu0 0.0
    %234 = vmatpush1.msra.mxu0 0.0
    %235 = vmatprep.subr.mxu0 0.0
    %236 = vmatpush1.msra.mxu0 0.0
    %237 = vmatprep.subr.mxu0 0.0
    %238 = vmatpush1.msra.mxu0 0.0
    %239 = vmatprep.subr.mxu0 0.0
    %240 = vmatpush1.msra.mxu0 0.0
    %241 = vmatprep.subr.mxu0 0.0
    %242 = vmatpush1.msra.mxu0 0.0
    %243 = vmatprep.subr.mxu0 0.0
    %244 = vmatpush1.msra.mxu0 0.0
    %245 = vmatprep.subr.mxu0 0.0
    %246 = vmatpush1.msra.mxu0 0.0
    %247 = vmatprep.subr.mxu0 0.0
    %248 = vmatpush1.msra.mxu0 0.0
    %249 = vmatprep.subr.mxu0 0.0
    %250 = vmatpush1.msra.mxu0 0.0
    %251 = vmatprep.subr.mxu0 0.0
    %252 = vmatpush1.msra.mxu0 0.0
    %253 = vmatprep.subr.mxu0 0.0
    %254 = vmatpush1.msra.mxu0 0.0
    %255 = vmatprep.subr.mxu0 0.0
    %256 = vmatpush1.msra.mxu0 0.0
    %257 = vmatprep.subr.mxu0 0.0
    %258 = vmatpush1.msra.mxu0 0.0
    %259 = vmatprep.subr.mxu0 0.0
    %260 = vmatpush1.msra.mxu0 0.0
    %261 = vmatprep.mubr.f32.mxu0 0.0
    %262 = vmatmul.mubr.f32.gmra.mrb[0].mxu0 %v114
    %v263 = vpop.f32.mrb[0].mxu0
    %v264 = vadd.f32 %v69, %v263
    %v265 = vpop.f32.mrb[0].mxu0
    %266 = vdwg.mxu0
    %s267 = scalar_lea.vmem [#allocation2], 4
    %268 = vst [vmem:[%s267] sm:$0xf] %v264
    %s269 = scalar_lea.vmem %s0, 32
    %v270 = vld [vmem:[%s269] sm:$0xff]
    %v271 = vld [vmem:[%s269 + $0x8] sm:$0x3]
    %v273 = vsel %vm116, %v271, 0
    %275 = vmatprep.subr.mxu0 0.0
    %276 = vmatpush1.msra.mxu0 %v270
    %277 = vmatprep.subr.mxu0 0.0
    %278 = vmatpush1.msra.mxu0 %v273
    %279 = vmatprep.subr.mxu0 0.0
    %280 = vmatpush1.msra.mxu0 0.0
    %281 = vmatprep.subr.mxu0 0.0
    %282 = vmatpush1.msra.mxu0 0.0
    %283 = vmatprep.subr.mxu0 0.0
    %284 = vmatpush1.msra.mxu0 0.0
    %285 = vmatprep.subr.mxu0 0.0
    %286 = vmatpush1.msra.mxu0 0.0
    %287 = vmatprep.subr.mxu0 0.0
    %288 = vmatpush1.msra.mxu0 0.0
    %289 = vmatprep.subr.mxu0 0.0
    %290 = vmatpush1.msra.mxu0 0.0
    %291 = vmatprep.subr.mxu0 0.0
    %292 = vmatpush1.msra.mxu0 0.0
    %293 = vmatprep.subr.mxu0 0.0
    %294 = vmatpush1.msra.mxu0 0.0
    %295 = vmatprep.subr.mxu0 0.0
    %296 = vmatpush1.msra.mxu0 0.0
    %297 = vmatprep.subr.mxu0 0.0
    %298 = vmatpush1.msra.mxu0 0.0
    %299 = vmatprep.subr.mxu0 0.0
    %300 = vmatpush1.msra.mxu0 0.0
    %301 = vmatprep.subr.mxu0 0.0
    %302 = vmatpush1.msra.mxu0 0.0
    %303 = vmatprep.subr.mxu0 0.0
    %304 = vmatpush1.msra.mxu0 0.0
    %305 = vmatprep.subr.mxu0 0.0
    %306 = vmatpush1.msra.mxu0 0.0
    %307 = vmatprep.subr.mxu0 0.0
    %308 = vmatpush1.msra.mxu0 0.0
    %309 = vmatprep.subr.mxu0 0.0
    %310 = vmatpush1.msra.mxu0 0.0
    %311 = vmatprep.subr.mxu0 0.0
    %312 = vmatpush1.msra.mxu0 0.0
    %313 = vmatprep.subr.mxu0 0.0
    %314 = vmatpush1.msra.mxu0 0.0
    %315 = vmatprep.subr.mxu0 0.0
    %316 = vmatpush1.msra.mxu0 0.0
    %317 = vmatprep.subr.mxu0 0.0
    %318 = vmatpush1.msra.mxu0 0.0
    %319 = vmatprep.subr.mxu0 0.0
    %320 = vmatpush1.msra.mxu0 0.0
    %321 = vmatprep.subr.mxu0 0.0
    %322 = vmatpush1.msra.mxu0 0.0
    %323 = vmatprep.subr.mxu0 0.0
    %324 = vmatpush1.msra.mxu0 0.0
    %325 = vmatprep.subr.mxu0 0.0
    %326 = vmatpush1.msra.mxu0 0.0
    %327 = vmatprep.subr.mxu0 0.0
    %328 = vmatpush1.msra.mxu0 0.0
    %329 = vmatprep.subr.mxu0 0.0
    %330 = vmatpush1.msra.mxu0 0.0
    %331 = vmatprep.subr.mxu0 0.0
    %332 = vmatpush1.msra.mxu0 0.0
    %333 = vmatprep.subr.mxu0 0.0
    %334 = vmatpush1.msra.mxu0 0.0
    %335 = vmatprep.subr.mxu0 0.0
    %336 = vmatpush1.msra.mxu0 0.0
    %337 = vmatprep.subr.mxu0 0.0
    %338 = vmatpush1.msra.mxu0 0.0
    %339 = vmatprep.mubr.f32.mxu0 0.0
    %340 = vmatmul.mubr.f32.gmra.mrb[0].mxu0 %v114
    %v341 = vpop.f32.mrb[0].mxu0
    %v342 = vadd.f32 %v69, %v341
    %v343 = vpop.f32.mrb[0].mxu0
    %344 = vdwg.mxu0
    %s345 = scalar_lea.vmem [#allocation2], 8
    %346 = vst [vmem:[%s345] sm:$0xf] %v342
    %s347 = scalar_lea.vmem %s0, 48
    %v348 = vld [vmem:[%s347] sm:$0xff]
    %v349 = vld [vmem:[%s347 + $0x8] sm:$0x3]
    %v351 = vsel %vm116, %v349, 0
    %353 = vmatprep.subr.mxu0 0.0
    %354 = vmatpush1.msra.mxu0 %v348
    %355 = vmatprep.subr.mxu0 0.0
    %356 = vmatpush1.msra.mxu0 %v351
    %357 = vmatprep.subr.mxu0 0.0
    %358 = vmatpush1.msra.mxu0 0.0
    %359 = vmatprep.subr.mxu0 0.0
    %360 = vmatpush1.msra.mxu0 0.0
    %361 = vmatprep.subr.mxu0 0.0
    %362 = vmatpush1.msra.mxu0 0.0
    %363 = vmatprep.subr.mxu0 0.0
    %364 = vmatpush1.msra.mxu0 0.0
    %365 = vmatprep.subr.mxu0 0.0
    %366 = vmatpush1.msra.mxu0 0.0
    %367 = vmatprep.subr.mxu0 0.0
    %368 = vmatpush1.msra.mxu0 0.0
    %369 = vmatprep.subr.mxu0 0.0
    %370 = vmatpush1.msra.mxu0 0.0
    %371 = vmatprep.subr.mxu0 0.0
    %372 = vmatpush1.msra.mxu0 0.0
    %373 = vmatprep.subr.mxu0 0.0
    %374 = vmatpush1.msra.mxu0 0.0
    %375 = vmatprep.subr.mxu0 0.0
    %376 = vmatpush1.msra.mxu0 0.0
    %377 = vmatprep.subr.mxu0 0.0
    %378 = vmatpush1.msra.mxu0 0.0
    %379 = vmatprep.subr.mxu0 0.0
    %380 = vmatpush1.msra.mxu0 0.0
    %381 = vmatprep.subr.mxu0 0.0
    %382 = vmatpush1.msra.mxu0 0.0
    %383 = vmatprep.subr.mxu0 0.0
    %384 = vmatpush1.msra.mxu0 0.0
    %385 = vmatprep.subr.mxu0 0.0
    %386 = vmatpush1.msra.mxu0 0.0
    %387 = vmatprep.subr.mxu0 0.0
    %388 = vmatpush1.msra.mxu0 0.0
    %389 = vmatprep.subr.mxu0 0.0
    %390 = vmatpush1.msra.mxu0 0.0
    %391 = vmatprep.subr.mxu0 0.0
    %392 = vmatpush1.msra.mxu0 0.0
    %393 = vmatprep.subr.mxu0 0.0
    %394 = vmatpush1.msra.mxu0 0.0
    %395 = vmatprep.subr.mxu0 0.0
    %396 = vmatpush1.msra.mxu0 0.0
    %397 = vmatprep.subr.mxu0 0.0
    %398 = vmatpush1.msra.mxu0 0.0
    %399 = vmatprep.subr.mxu0 0.0
    %400 = vmatpush1.msra.mxu0 0.0
    %401 = vmatprep.subr.mxu0 0.0
    %402 = vmatpush1.msra.mxu0 0.0
    %403 = vmatprep.subr.mxu0 0.0
    %404 = vmatpush1.msra.mxu0 0.0
    %405 = vmatprep.subr.mxu0 0.0
    %406 = vmatpush1.msra.mxu0 0.0
    %407 = vmatprep.subr.mxu0 0.0
    %408 = vmatpush1.msra.mxu0 0.0
    %409 = vmatprep.subr.mxu0 0.0
    %410 = vmatpush1.msra.mxu0 0.0
    %411 = vmatprep.subr.mxu0 0.0
    %412 = vmatpush1.msra.mxu0 0.0
    %413 = vmatprep.subr.mxu0 0.0
    %414 = vmatpush1.msra.mxu0 0.0
    %415 = vmatprep.subr.mxu0 0.0
    %416 = vmatpush1.msra.mxu0 0.0
    %417 = vmatprep.mubr.f32.mxu0 0.0
    %418 = vmatmul.mubr.f32.gmra.mrb[0].mxu0 %v114
    %v419 = vpop.f32.mrb[0].mxu0
    %v420 = vadd.f32 %v69, %v419
    %v421 = vpop.f32.mrb[0].mxu0
    %422 = vdwg.mxu0
    %s423 = scalar_lea.vmem [#allocation2], 12
    %424 = vst [vmem:[%s423] sm:$0xf] %v420
    %s425 = scalar_lea.vmem %s0, 64
    %v426 = vld [vmem:[%s425] sm:$0xff]
    %v427 = vld [vmem:[%s425 + $0x8] sm:$0x3]
    %v429 = vsel %vm116, %v427, 0
    %431 = vmatprep.subr.mxu0 0.0
    %432 = vmatpush1.msra.mxu0 %v426
    %433 = vmatprep.subr.mxu0 0.0
    %434 = vmatpush1.msra.mxu0 %v429
    %435 = vmatprep.subr.mxu0 0.0
    %436 = vmatpush1.msra.mxu0 0.0
    %437 = vmatprep.subr.mxu0 0.0
    %438 = vmatpush1.msra.mxu0 0.0
    %439 = vmatprep.subr.mxu0 0.0
    %440 = vmatpush1.msra.mxu0 0.0
    %441 = vmatprep.subr.mxu0 0.0
    %442 = vmatpush1.msra.mxu0 0.0
    %443 = vmatprep.subr.mxu0 0.0
    %444 = vmatpush1.msra.mxu0 0.0
    %445 = vmatprep.subr.mxu0 0.0
    %446 = vmatpush1.msra.mxu0 0.0
    %447 = vmatprep.subr.mxu0 0.0
    %448 = vmatpush1.msra.mxu0 0.0
    %449 = vmatprep.subr.mxu0 0.0
    %450 = vmatpush1.msra.mxu0 0.0
    %451 = vmatprep.subr.mxu0 0.0
    %452 = vmatpush1.msra.mxu0 0.0
    %453 = vmatprep.subr.mxu0 0.0
    %454 = vmatpush1.msra.mxu0 0.0
    %455 = vmatprep.subr.mxu0 0.0
    %456 = vmatpush1.msra.mxu0 0.0
    %457 = vmatprep.subr.mxu0 0.0
    %458 = vmatpush1.msra.mxu0 0.0
    %459 = vmatprep.subr.mxu0 0.0
    %460 = vmatpush1.msra.mxu0 0.0
    %461 = vmatprep.subr.mxu0 0.0
    %462 = vmatpush1.msra.mxu0 0.0
    %463 = vmatprep.subr.mxu0 0.0
    %464 = vmatpush1.msra.mxu0 0.0
    %465 = vmatprep.subr.mxu0 0.0
    %466 = vmatpush1.msra.mxu0 0.0
    %467 = vmatprep.subr.mxu0 0.0
    %468 = vmatpush1.msra.mxu0 0.0
    %469 = vmatprep.subr.mxu0 0.0
    %470 = vmatpush1.msra.mxu0 0.0
    %471 = vmatprep.subr.mxu0 0.0
    %472 = vmatpush1.msra.mxu0 0.0
    %473 = vmatprep.subr.mxu0 0.0
    %474 = vmatpush1.msra.mxu0 0.0
    %475 = vmatprep.subr.mxu0 0.0
    %476 = vmatpush1.msra.mxu0 0.0
    %477 = vmatprep.subr.mxu0 0.0
    %478 = vmatpush1.msra.mxu0 0.0
    %479 = vmatprep.subr.mxu0 0.0
    %480 = vmatpush1.msra.mxu0 0.0
    %481 = vmatprep.subr.mxu0 0.0
    %482 = vmatpush1.msra.mxu0 0.0
    %483 = vmatprep.subr.mxu0 0.0
    %484 = vmatpush1.msra.mxu0 0.0
    %485 = vmatprep.subr.mxu0 0.0
    %486 = vmatpush1.msra.mxu0 0.0
    %487 = vmatprep.subr.mxu0 0.0
    %488 = vmatpush1.msra.mxu0 0.0
    %489 = vmatprep.subr.mxu0 0.0
    %490 = vmatpush1.msra.mxu0 0.0
    %491 = vmatprep.subr.mxu0 0.0
    %492 = vmatpush1.msra.mxu0 0.0
    %493 = vmatprep.subr.mxu0 0.0
    %494 = vmatpush1.msra.mxu0 0.0
    %495 = vmatprep.mubr.f32.mxu0 0.0
    %496 = vmatmul.mubr.f32.gmra.mrb[0].mxu0 %v114
    %v497 = vpop.f32.mrb[0].mxu0
    %v498 = vadd.f32 %v69, %v497
    %v499 = vpop.f32.mrb[0].mxu0
    %500 = vdwg.mxu0
    %s501 = scalar_lea.vmem [#allocation2], 16
    %502 = vst [vmem:[%s501] sm:$0xf] %v498
    %s503 = scalar_lea.vmem %s0, 80
    %v504 = vld [vmem:[%s503] sm:$0xff]
    %v505 = vld [vmem:[%s503 + $0x8] sm:$0x3]
    %v507 = vsel %vm116, %v505, 0
    %509 = vmatprep.subr.mxu0 0.0
    %510 = vmatpush1.msra.mxu0 %v504
    %511 = vmatprep.subr.mxu0 0.0
    %512 = vmatpush1.msra.mxu0 %v507
    %513 = vmatprep.subr.mxu0 0.0
    %514 = vmatpush1.msra.mxu0 0.0
    %515 = vmatprep.subr.mxu0 0.0
    %516 = vmatpush1.msra.mxu0 0.0
    %517 = vmatprep.subr.mxu0 0.0
    %518 = vmatpush1.msra.mxu0 0.0
    %519 = vmatprep.subr.mxu0 0.0
    %520 = vmatpush1.msra.mxu0 0.0
    %521 = vmatprep.subr.mxu0 0.0
    %522 = vmatpush1.msra.mxu0 0.0
    %523 = vmatprep.subr.mxu0 0.0
    %524 = vmatpush1.msra.mxu0 0.0
    %525 = vmatprep.subr.mxu0 0.0
    %526 = vmatpush1.msra.mxu0 0.0
    %527 = vmatprep.subr.mxu0 0.0
    %528 = vmatpush1.msra.mxu0 0.0
    %529 = vmatprep.subr.mxu0 0.0
    %530 = vmatpush1.msra.mxu0 0.0
    %531 = vmatprep.subr.mxu0 0.0
    %532 = vmatpush1.msra.mxu0 0.0
    %533 = vmatprep.subr.mxu0 0.0
    %534 = vmatpush1.msra.mxu0 0.0
    %535 = vmatprep.subr.mxu0 0.0
    %536 = vmatpush1.msra.mxu0 0.0
    %537 = vmatprep.subr.mxu0 0.0
    %538 = vmatpush1.msra.mxu0 0.0
    %539 = vmatprep.subr.mxu0 0.0
    %540 = vmatpush1.msra.mxu0 0.0
    %541 = vmatprep.subr.mxu0 0.0
    %542 = vmatpush1.msra.mxu0 0.0
    %543 = vmatprep.subr.mxu0 0.0
    %544 = vmatpush1.msra.mxu0 0.0
    %545 = vmatprep.subr.mxu0 0.0
    %546 = vmatpush1.msra.mxu0 0.0
    %547 = vmatprep.subr.mxu0 0.0
    %548 = vmatpush1.msra.mxu0 0.0
    %549 = vmatprep.subr.mxu0 0.0
    %550 = vmatpush1.msra.mxu0 0.0
    %551 = vmatprep.subr.mxu0 0.0
    %552 = vmatpush1.msra.mxu0 0.0
    %553 = vmatprep.subr.mxu0 0.0
    %554 = vmatpush1.msra.mxu0 0.0
    %555 = vmatprep.subr.mxu0 0.0
    %556 = vmatpush1.msra.mxu0 0.0
    %557 = vmatprep.subr.mxu0 0.0
    %558 = vmatpush1.msra.mxu0 0.0
    %559 = vmatprep.subr.mxu0 0.0
    %560 = vmatpush1.msra.mxu0 0.0
    %561 = vmatprep.subr.mxu0 0.0
    %562 = vmatpush1.msra.mxu0 0.0
    %563 = vmatprep.subr.mxu0 0.0
    %564 = vmatpush1.msra.mxu0 0.0
    %565 = vmatprep.subr.mxu0 0.0
    %566 = vmatpush1.msra.mxu0 0.0
    %567 = vmatprep.subr.mxu0 0.0
    %568 = vmatpush1.msra.mxu0 0.0
    %569 = vmatprep.subr.mxu0 0.0
    %570 = vmatpush1.msra.mxu0 0.0
    %571 = vmatprep.subr.mxu0 0.0
    %572 = vmatpush1.msra.mxu0 0.0
    %573 = vmatprep.mubr.f32.mxu0 0.0
    %574 = vmatmul.mubr.f32.gmra.mrb[0].mxu0 %v114
    %v575 = vpop.f32.mrb[0].mxu0
    %v576 = vadd.f32 %v69, %v575
    %v577 = vpop.f32.mrb[0].mxu0
    %578 = vdwg.mxu0
    %s579 = scalar_lea.vmem [#allocation2], 20
    %580 = vst [vmem:[%s579] sm:$0xf] %v576
    %s581 = scalar_lea.vmem %s0, 96
    %v582 = vld [vmem:[%s581] sm:$0xff]
    %v583 = vld [vmem:[%s581 + $0x8] sm:$0x3]
    %v585 = vsel %vm116, %v583, 0
    %587 = vmatprep.subr.mxu0 0.0
    %588 = vmatpush1.msra.mxu0 %v582
    %589 = vmatprep.subr.mxu0 0.0
    %590 = vmatpush1.msra.mxu0 %v585
    %591 = vmatprep.subr.mxu0 0.0
    %592 = vmatpush1.msra.mxu0 0.0
    %593 = vmatprep.subr.mxu0 0.0
    %594 = vmatpush1.msra.mxu0 0.0
    %595 = vmatprep.subr.mxu0 0.0
    %596 = vmatpush1.msra.mxu0 0.0
    %597 = vmatprep.subr.mxu0 0.0
    %598 = vmatpush1.msra.mxu0 0.0
    %599 = vmatprep.subr.mxu0 0.0
    %600 = vmatpush1.msra.mxu0 0.0
    %601 = vmatprep.subr.mxu0 0.0
    %602 = vmatpush1.msra.mxu0 0.0
    %603 = vmatprep.subr.mxu0 0.0
    %604 = vmatpush1.msra.mxu0 0.0
    %605 = vmatprep.subr.mxu0 0.0
    %606 = vmatpush1.msra.mxu0 0.0
    %607 = vmatprep.subr.mxu0 0.0
    %608 = vmatpush1.msra.mxu0 0.0
    %609 = vmatprep.subr.mxu0 0.0
    %610 = vmatpush1.msra.mxu0 0.0
    %611 = vmatprep.subr.mxu0 0.0
    %612 = vmatpush1.msra.mxu0 0.0
    %613 = vmatprep.subr.mxu0 0.0
    %614 = vmatpush1.msra.mxu0 0.0
    %615 = vmatprep.subr.mxu0 0.0
    %616 = vmatpush1.msra.mxu0 0.0
    %617 = vmatprep.subr.mxu0 0.0
    %618 = vmatpush1.msra.mxu0 0.0
    %619 = vmatprep.subr.mxu0 0.0
    %620 = vmatpush1.msra.mxu0 0.0
    %621 = vmatprep.subr.mxu0 0.0
    %622 = vmatpush1.msra.mxu0 0.0
    %623 = vmatprep.subr.mxu0 0.0
    %624 = vmatpush1.msra.mxu0 0.0
    %625 = vmatprep.subr.mxu0 0.0
    %626 = vmatpush1.msra.mxu0 0.0
    %627 = vmatprep.subr.mxu0 0.0
    %628 = vmatpush1.msra.mxu0 0.0
    %629 = vmatprep.subr.mxu0 0.0
    %630 = vmatpush1.msra.mxu0 0.0
    %631 = vmatprep.subr.mxu0 0.0
    %632 = vmatpush1.msra.mxu0 0.0
    %633 = vmatprep.subr.mxu0 0.0
    %634 = vmatpush1.msra.mxu0 0.0
    %635 = vmatprep.subr.mxu0 0.0
    %636 = vmatpush1.msra.mxu0 0.0
    %637 = vmatprep.subr.mxu0 0.0
    %638 = vmatpush1.msra.mxu0 0.0
    %639 = vmatprep.subr.mxu0 0.0
    %640 = vmatpush1.msra.mxu0 0.0
    %641 = vmatprep.subr.mxu0 0.0
    %642 = vmatpush1.msra.mxu0 0.0
    %643 = vmatprep.subr.mxu0 0.0
    %644 = vmatpush1.msra.mxu0 0.0
    %645 = vmatprep.subr.mxu0 0.0
    %646 = vmatpush1.msra.mxu0 0.0
    %647 = vmatprep.subr.mxu0 0.0
    %648 = vmatpush1.msra.mxu0 0.0
    %649 = vmatprep.subr.mxu0 0.0
    %650 = vmatpush1.msra.mxu0 0.0
    %651 = vmatprep.mubr.f32.mxu0 0.0
    %652 = vmatmul.mubr.f32.gmra.mrb[0].mxu0 %v114
    %v653 = vpop.f32.mrb[0].mxu0
    %v654 = vadd.f32 %v69, %v653
    %v655 = vpop.f32.mrb[0].mxu0
    %656 = vdwg.mxu0
    %s657 = scalar_lea.vmem [#allocation2], 24
    %658 = vst [vmem:[%s657] sm:$0xf] %v654
    %v659 = vld [vmem:[#allocation2] sm:$0xf]
    %v660 = vmul.f32 %v81, 0.0
    %v661 = vmul.f32 %v85, 0.0
    %v662 = vadd.f32 %v660, %v661
    %v663 = vmul.f32 %v89, 0.0
    %v664 = vadd.f32 %v662, %v663
    %v665 = vmul.f32 %v93, 0.0
    %v666 = vadd.f32 %v664, %v665
    %v667 = vmul.f32 %v97, 0.0
    %v668 = vadd.f32 %v666, %v667
    %v669 = vmul.f32 %v101, 0.0
    %v670 = vadd.f32 %v668, %v669
    %v671 = vmul.f32 %v105, 0.0
    %v672 = vadd.f32 %v670, %v671
    %v673 = vmul.f32 %v109, 0.0
    %v674 = vadd.f32 %v672, %v673
    %v675 = vadd.f32 %v659, %v674
    %v676 = vtanh.pop %v675
    %v677 = vmul.f32 %v676, 1.5707964
    %v678 = vand.u32 2147483647, %v677
    %vm679 = vcmp.le.f32.partialorder %v678, 0.7853982
    %vm680 = vcmp.lt.s32.totalorder %v677, 0
    %v681 = vand.u32 %v677, 2139095040
    %v682 = vshrl.u32 %v681, 23
    %v683 = vsub.s32 %v682, 127
    %v684 = vand.u32 2147483647, %v677
    %v685 = vand.u32 %v684, 8388607
    %v686 = vor.u32 %v685, 8388608
    %v687 = vsub.s32 0, %v686
    %v688 = vadd.s32 %v683, 1
    %vm689 = vcmp.gt.s32.totalorder %v688, 0
    %v690 = vsel %vm689, %v688, 0
    %v691 = vshrl.u32 %v690, 5
    %v692 = vand.u32 %v690, 31
    %v693 = vsub.s32 32, %v692
    %v694 = vshrl.u32 683565275, %v693
    %v695 = vshll.u32 683565275, %v692
    %v696 = vshrl.u32 2475754826, %v693
    %v697 = vor.u32 %v695, %v696
    %v698 = vshll.u32 2475754826, %v692
    %v699 = vshrl.u32 2131351028, %v693
    %v700 = vor.u32 %v698, %v699
    %v701 = vshll.u32 2131351028, %v692
    %v702 = vshrl.u32 2102212464, %v693
    %v703 = vor.u32 %v701, %v702
    %v704 = vshll.u32 2102212464, %v692
    %v705 = vshrl.u32 920167782, %v693
    %v706 = vor.u32 %v704, %v705
    %v707 = vshll.u32 920167782, %v692
    %v708 = vshrl.u32 1326507024, %v693
    %v709 = vor.u32 %v707, %v708
    %vm710 = vcmp.lt.s32.totalorder %v691, 1
    %vm711 = vcmp.lt.s32.totalorder %v691, 2
    %vm712 = vcmp.lt.s32.totalorder %v691, 3
    %vm713 = vcmp.lt.s32.totalorder %v691, 4
    %v714 = vsel %vm710, %v694, %v697
    %v715 = vsel %vm713, %v703, 2102212464
    %v716 = vsel %vm712, %v700, %v715
    %v717 = vsel %vm711, %v714, %v716
    %v718 = vsel %vm710, %v697, %v700
    %v719 = vsel %vm713, %v706, 920167782
    %v720 = vsel %vm712, %v703, %v719
    %v721 = vsel %vm711, %v718, %v720
    %v722 = vsel %vm710, %v700, %v703
    %v723 = vsel %vm713, %v709, 1326507024
    %v724 = vsel %vm712, %v706, %v723
    %v725 = vsel %vm711, %v722, %v724
    %v726 = vshll.u32 %v686, 8
    %v727 = vmul.u32.u64.compose %v726, %v725
    %v728 = vextract.low.u32 %v727
    %v729 = vextract.high.u32 %v727
    %v730 = vmul.u32.u64.compose %v726, %v721
    %v731 = vextract.low.u32 %v730
    %v732 = vextract.high.u32 %v730
    %v733 = vmul.u32 %v726, %v717
    %v734 = vadd.s32 %v729, %v731
    %vm735 = vc.u32 %v729, %v731
    %v736 = vadd.s32 %v732, 1
    %v737 = vsel %vm735, %v736, %v732
    %v738 = vadd.s32 %v733, %v737
    %v739 = vadd.s32 %v738, 536870912
    %v740 = vshrl.u32 %v739, 30
    %v741 = vshll.u32 %v740, 30
    %v742 = vsub.s32 %v738, %v741
    %vm743 = vcmp.lt.s32.totalorder %v742, 0
    %v744 = vsub.s32 0, %v742
    %v745 = vsel %vm743, %v744, %v742
    %v746 = vclz %v745
    %v747 = vsub.s32 %v746, 2
    %vm748 = vcmp.gt.s32.totalorder 0, %v747
    %v749 = vsel %vm748, 0, %v747
    %v750 = vsub.s32 32, %v749
    %v751 = vshll.u32 %v742, %v749
    %v752 = vshrl.u32 %v734, %v750
    %v753 = vor.u32 %v751, %v752
    %v754 = vsub.s32 4294967266, %v749
    %v755 = vadd.s32 %v754, 127
    %v756 = vshll.u32 %v755, 23
    %v757 = vor.u32 4788187, %v756
    %v758 = vand.u32 2147483647, %v757
    %v760 = vcvt.s32.f32 %v753
    %v761 = vmul.f32 %v760, %v758
    %v762 = vxor.u32 %v761, 2147483648
    %v763 = vsel %vm680, %v762, %v761
    %v764 = vsub.s32 4, %v740
    %v765 = vsel %vm680, %v764, %v740
    %v766 = vsel %vm679, %v677, %v763
    %v767 = vsel %vm679, 0, %v765
    %v768 = vcosq.f32.pop %v766
    %v769 = vsinq.f32.pop %v766
    %vm770 = vweird.f32 %v677
    %v771 = vand.u32 %v767, 3
    %vm772 = vcmp.lt.s32.totalorder %v771, 2
    %vm773 = vcmp.eq.s32.totalorder %v771, 0
    %v774 = vxor.u32 %v769, 2147483648
    %v775 = vsel %vm773, %v768, %v774
    %vm776 = vcmp.eq.s32.totalorder %v771, 2
    %v777 = vxor.u32 %v768, 2147483648
    %v778 = vsel %vm776, %v777, %v769
    %v779 = vsel %vm772, %v775, %v778
    %v780 = vsel %vm770, nan, %v779
    %v781 = vand.u32 2147483647, %v677
    %vm782 = vcmp.le.f32.partialorder %v781, 0.7853982
    %vm783 = vcmp.lt.s32.totalorder %v677, 0
    %v784 = vand.u32 %v677, 2139095040
    %v785 = vshrl.u32 %v784, 23
    %v786 = vsub.s32 %v785, 127
    %v787 = vand.u32 2147483647, %v677
    %v788 = vand.u32 %v787, 8388607
    %v789 = vor.u32 %v788, 8388608
    %v790 = vsub.s32 0, %v789
    %v791 = vadd.s32 %v786, 1
    %vm792 = vcmp.gt.s32.totalorder %v791, 0
    %v793 = vsel %vm792, %v791, 0
    %v794 = vshrl.u32 %v793, 5
    %v795 = vand.u32 %v793, 31
    %v796 = vsub.s32 32, %v795
    %v797 = vshrl.u32 683565275, %v796
    %v798 = vshll.u32 683565275, %v795
    %v799 = vshrl.u32 2475754826, %v796
    %v800 = vor.u32 %v798, %v799
    %v801 = vshll.u32 2475754826, %v795
    %v802 = vshrl.u32 2131351028, %v796
    %v803 = vor.u32 %v801, %v802
    %v804 = vshll.u32 2131351028, %v795
    %v805 = vshrl.u32 2102212464, %v796
    %v806 = vor.u32 %v804, %v805
    %v807 = vshll.u32 2102212464, %v795
    %v808 = vshrl.u32 920167782, %v796
    %v809 = vor.u32 %v807, %v808
    %v810 = vshll.u32 920167782, %v795
    %v811 = vshrl.u32 1326507024, %v796
    %v812 = vor.u32 %v810, %v811
    %vm813 = vcmp.lt.s32.totalorder %v794, 1
    %vm814 = vcmp.lt.s32.totalorder %v794, 2
    %vm815 = vcmp.lt.s32.totalorder %v794, 3
    %vm816 = vcmp.lt.s32.totalorder %v794, 4
    %v817 = vsel %vm813, %v797, %v800
    %v818 = vsel %vm816, %v806, 2102212464
    %v819 = vsel %vm815, %v803, %v818
    %v820 = vsel %vm814, %v817, %v819
    %v821 = vsel %vm813, %v800, %v803
    %v822 = vsel %vm816, %v809, 920167782
    %v823 = vsel %vm815, %v806, %v822
    %v824 = vsel %vm814, %v821, %v823
    %v825 = vsel %vm813, %v803, %v806
    %v826 = vsel %vm816, %v812, 1326507024
    %v827 = vsel %vm815, %v809, %v826
    %v828 = vsel %vm814, %v825, %v827
    %v829 = vshll.u32 %v789, 8
    %v830 = vmul.u32.u64.compose %v829, %v828
    %v831 = vextract.low.u32 %v830
    %v832 = vextract.high.u32 %v830
    %v833 = vmul.u32.u64.compose %v829, %v824
    %v834 = vextract.low.u32 %v833
    %v835 = vextract.high.u32 %v833
    %v836 = vmul.u32 %v829, %v820
    %v837 = vadd.s32 %v832, %v834
    %vm838 = vc.u32 %v832, %v834
    %v839 = vadd.s32 %v835, 1
    %v840 = vsel %vm838, %v839, %v835
    %v841 = vadd.s32 %v836, %v840
    %v842 = vadd.s32 %v841, 536870912
    %v843 = vshrl.u32 %v842, 30
    %v844 = vshll.u32 %v843, 30
    %v845 = vsub.s32 %v841, %v844
    %vm846 = vcmp.lt.s32.totalorder %v845, 0
    %v847 = vsub.s32 0, %v845
    %v848 = vsel %vm846, %v847, %v845
    %v849 = vclz %v848
    %v850 = vsub.s32 %v849, 2
    %vm851 = vcmp.gt.s32.totalorder 0, %v850
    %v852 = vsel %vm851, 0, %v850
    %v853 = vsub.s32 32, %v852
    %v854 = vshll.u32 %v845, %v852
    %v855 = vshrl.u32 %v837, %v853
    %v856 = vor.u32 %v854, %v855
    %v857 = vsub.s32 4294967266, %v852
    %v858 = vadd.s32 %v857, 127
    %v859 = vshll.u32 %v858, 23
    %v860 = vor.u32 4788187, %v859
    %v861 = vand.u32 2147483647, %v860
    %v863 = vcvt.s32.f32 %v856
    %v864 = vmul.f32 %v863, %v861
    %v865 = vxor.u32 %v864, 2147483648
    %v866 = vsel %vm783, %v865, %v864
    %v867 = vsub.s32 4, %v843
    %v868 = vsel %vm783, %v867, %v843
    %v869 = vsel %vm782, %v677, %v866
    %v870 = vsel %vm782, 0, %v868
    %v871 = vcosq.f32.pop %v869
    %v872 = vsinq.f32.pop %v869
    %vm873 = vweird.f32 %v677
    %v874 = vadd.s32 %v870, 3
    %v875 = vand.u32 %v874, 3
    %vm876 = vcmp.lt.s32.totalorder %v875, 2
    %vm877 = vcmp.eq.s32.totalorder %v875, 0
    %v878 = vxor.u32 %v872, 2147483648
    %v879 = vsel %vm877, %v871, %v878
    %vm880 = vcmp.eq.s32.totalorder %v875, 2
    %v881 = vxor.u32 %v871, 2147483648
    %v882 = vsel %vm880, %v881, %v872
    %v883 = vsel %vm876, %v879, %v882
    %v884 = vsel %vm873, nan, %v883
    %v885 = vlaneseq
    %v886 = vshrl.u32 %v885, 7
    %v887 = vsub.s32 0, %v886
    %v888 = vrot.slane %v884, %v887
    %v889 = vmul.f32 %v888, %v26
    %v890 = vmul.f32 %v888, %v31
    %v891 = vlaneseq
    %v892 = vshrl.u32 %v891, 7
    %v893 = vsub.s32 0, %v892
    %v894 = vrot.slane %v780, %v893
    %v895 = vmul.f32 %v894, %v57
    %v896 = vmul.f32 %v894, %v58
    %v897 = vadd.f32 %v889, %v895
    %v898 = vadd.f32 %v890, %v896
    %v899 = vlaneseq
    %v900 = vshrl.u32 %v899, 7
    %v901 = vsub.s32 1, %v900
    %v902 = vrot.slane %v884, %v901
    %v903 = vmul.f32 %v902, %v35
    %v904 = vmul.f32 %v902, %v39
    %v905 = vlaneseq
    %v906 = vshrl.u32 %v905, 7
    %v907 = vsub.s32 1, %v906
    %v908 = vrot.slane %v780, %v907
    %v909 = vmul.f32 %v908, %v59
    %v910 = vmul.f32 %v908, %v60
    %v911 = vadd.f32 %v903, %v909
    %v912 = vadd.f32 %v904, %v910
    %v913 = vmul.f32 %v897, %v911
    %v914 = vmul.f32 %v898, %v912
    %v915 = vlaneseq
    %v916 = vshrl.u32 %v915, 7
    %v917 = vsub.s32 2, %v916
    %v918 = vrot.slane %v884, %v917
    %v919 = vmul.f32 %v918, %v43
    %v920 = vmul.f32 %v918, %v47
    %v921 = vlaneseq
    %v922 = vshrl.u32 %v921, 7
    %v923 = vsub.s32 2, %v922
    %v924 = vrot.slane %v780, %v923
    %v925 = vmul.f32 %v924, %v61
    %v926 = vmul.f32 %v924, %v62
    %v927 = vadd.f32 %v919, %v925
    %v928 = vadd.f32 %v920, %v926
    %v929 = vmul.f32 %v913, %v927
    %v930 = vmul.f32 %v914, %v928
    %v931 = vlaneseq
    %v932 = vshrl.u32 %v931, 7
    %v933 = vsub.s32 3, %v932
    %v934 = vrot.slane %v884, %v933
    %v935 = vmul.f32 %v934, %v51
    %v936 = vmul.f32 %v934, %v55
    %v937 = vlaneseq
    %v938 = vshrl.u32 %v937, 7
    %v939 = vsub.s32 3, %v938
    %v940 = vrot.slane %v780, %v939
    %v941 = vmul.f32 %v940, %v63
    %v942 = vmul.f32 %v940, %v64
    %v943 = vadd.f32 %v935, %v941
    %v944 = vadd.f32 %v936, %v942
    %v945 = vmul.f32 %v929, %v943
    %v946 = vmul.f32 %v930, %v944
    %vm947 = vcmask 130048
    %v949 = vsel %vm947, %v71, 0
    %v952 = vsel %vm947, %v72, 0
    %v955 = vsel %vm947, %v73, 0
    %v958 = vsel %vm947, %v74, 0
    %960 = vmatprep.subr.mxu0 0.0
    %961 = vmatpush1.msra.mxu0 %v945
    %962 = vmatprep.subr.mxu0 0.0
    %963 = vmatpush1.msra.mxu0 %v946
    %964 = vmatprep.subr.mxu0 0.0
    %965 = vmatpush1.msra.mxu0 0.0
    %966 = vmatprep.subr.mxu0 0.0
    %967 = vmatpush1.msra.mxu0 0.0
    %968 = vmatprep.subr.mxu0 0.0
    %969 = vmatpush1.msra.mxu0 0.0
    %970 = vmatprep.subr.mxu0 0.0
    %971 = vmatpush1.msra.mxu0 0.0
    %972 = vmatprep.subr.mxu0 0.0
    %973 = vmatpush1.msra.mxu0 0.0
    %974 = vmatprep.subr.mxu0 0.0
    %975 = vmatpush1.msra.mxu0 0.0
    %976 = vmatprep.subr.mxu0 0.0
    %977 = vmatpush1.msra.mxu0 0.0
    %978 = vmatprep.subr.mxu0 0.0
    %979 = vmatpush1.msra.mxu0 0.0
    %980 = vmatprep.subr.mxu0 0.0
    %981 = vmatpush1.msra.mxu0 0.0
    %982 = vmatprep.subr.mxu0 0.0
    %983 = vmatpush1.msra.mxu0 0.0
    %984 = vmatprep.subr.mxu0 0.0
    %985 = vmatpush1.msra.mxu0 0.0
    %986 = vmatprep.subr.mxu0 0.0
    %987 = vmatpush1.msra.mxu0 0.0
    %988 = vmatprep.subr.mxu0 0.0
    %989 = vmatpush1.msra.mxu0 0.0
    %990 = vmatprep.subr.mxu0 0.0
    %991 = vmatpush1.msra.mxu0 0.0
    %992 = vmatprep.subr.mxu0 0.0
    %993 = vmatpush1.msra.mxu0 0.0
    %994 = vmatprep.subr.mxu0 0.0
    %995 = vmatpush1.msra.mxu0 0.0
    %996 = vmatprep.subr.mxu0 0.0
    %997 = vmatpush1.msra.mxu0 0.0
    %998 = vmatprep.subr.mxu0 0.0
    %999 = vmatpush1.msra.mxu0 0.0
    %1000 = vmatprep.subr.mxu0 0.0
    %1001 = vmatpush1.msra.mxu0 0.0
    %1002 = vmatprep.subr.mxu0 0.0
    %1003 = vmatpush1.msra.mxu0 0.0
    %1004 = vmatprep.subr.mxu0 0.0
    %1005 = vmatpush1.msra.mxu0 0.0
    %1006 = vmatprep.subr.mxu0 0.0
    %1007 = vmatpush1.msra.mxu0 0.0
    %1008 = vmatprep.subr.mxu0 0.0
    %1009 = vmatpush1.msra.mxu0 0.0
    %1010 = vmatprep.subr.mxu0 0.0
    %1011 = vmatpush1.msra.mxu0 0.0
    %1012 = vmatprep.subr.mxu0 0.0
    %1013 = vmatpush1.msra.mxu0 0.0
    %1014 = vmatprep.subr.mxu0 0.0
    %1015 = vmatpush1.msra.mxu0 0.0
    %1016 = vmatprep.subr.mxu0 0.0
    %1017 = vmatpush1.msra.mxu0 0.0
    %1018 = vmatprep.subr.mxu0 0.0
    %1019 = vmatpush1.msra.mxu0 0.0
    %1020 = vmatprep.subr.mxu0 0.0
    %1021 = vmatpush1.msra.mxu0 0.0
    %1022 = vmatprep.subr.mxu0 0.0
    %1023 = vmatpush1.msra.mxu0 0.0
    %1024 = vmatprep.mubr.f32.mxu0 0.0
    %1025 = vmatmul.mubr.f32.gmra.mrb[0].mxu0 %v949
    %v1026 = vpop.f32.mrb[0].mxu0
    %v1027 = vadd.f32 0.0, %v1026
    %v1028 = vpop.f32.mrb[0].mxu0
    %1029 = vmatprep.mubr.f32.mxu0 0.0
    %1030 = vmatmul.mubr.f32.gmra.mrb[0].mxu0 %v952
    %v1031 = vpop.f32.mrb[0].mxu0
    %v1032 = vadd.f32 0.0, %v1031
    %v1033 = vpop.f32.mrb[0].mxu0
    %1034 = vmatprep.mubr.f32.mxu0 0.0
    %1035 = vmatmul.mubr.f32.gmra.mrb[0].mxu0 %v955
    %v1036 = vpop.f32.mrb[0].mxu0
    %v1037 = vadd.f32 0.0, %v1036
    %v1038 = vpop.f32.mrb[0].mxu0
    %1039 = vmatprep.mubr.f32.mxu0 0.0
    %1040 = vmatmul.mubr.f32.gmra.mrb[0].mxu0 %v958
    %v1041 = vpop.f32.mrb[0].mxu0
    %v1042 = vadd.f32 0.0, %v1041
    %v1043 = vpop.f32.mrb[0].mxu0
    %1044 = vdwg.mxu0
    %v1045 = vmul.f32 %v1027, %v1027
    %v1046 = vmul.f32 %v1032, %v1032
    %v1047 = vmul.f32 %v1037, %v1037
    %v1048 = vmul.f32 %v1042, %v1042
    %vm1049 = vcmask 261120
    %v1051 = vsel %vm1049, %v75, 0
    %v1054 = vsel %vm1049, %v76, 0
    %v1057 = vsel %vm1049, %v77, 0
    %v1060 = vsel %vm1049, %v78, 0
    %1062 = vmatprep.subr.mxu0 0.0
    %1063 = vmatpush1.msra.mxu0 %v1045
    %1064 = vmatprep.subr.mxu0 0.0
    %1065 = vmatpush1.msra.mxu0 %v1046
    %1066 = vmatprep.subr.mxu0 0.0
    %1067 = vmatpush1.msra.mxu0 %v1047
    %1068 = vmatprep.subr.mxu0 0.0
    %1069 = vmatpush1.msra.mxu0 %v1048
    %1070 = vmatprep.subr.mxu0 0.0
    %1071 = vmatpush1.msra.mxu0 0.0
    %1072 = vmatprep.subr.mxu0 0.0
    %1073 = vmatpush1.msra.mxu0 0.0
    %1074 = vmatprep.subr.mxu0 0.0
    %1075 = vmatpush1.msra.mxu0 0.0
    %1076 = vmatprep.subr.mxu0 0.0
    %1077 = vmatpush1.msra.mxu0 0.0
    %1078 = vmatprep.subr.mxu0 0.0
    %1079 = vmatpush1.msra.mxu0 0.0
    %1080 = vmatprep.subr.mxu0 0.0
    %1081 = vmatpush1.msra.mxu0 0.0
    %1082 = vmatprep.subr.mxu0 0.0
    %1083 = vmatpush1.msra.mxu0 0.0
    %1084 = vmatprep.subr.mxu0 0.0
    %1085 = vmatpush1.msra.mxu0 0.0
    %1086 = vmatprep.subr.mxu0 0.0
    %1087 = vmatpush1.msra.mxu0 0.0
    %1088 = vmatprep.subr.mxu0 0.0
    %1089 = vmatpush1.msra.mxu0 0.0
    %1090 = vmatprep.subr.mxu0 0.0
    %1091 = vmatpush1.msra.mxu0 0.0
    %1092 = vmatprep.subr.mxu0 0.0
    %1093 = vmatpush1.msra.mxu0 0.0
    %1094 = vmatprep.subr.mxu0 0.0
    %1095 = vmatpush1.msra.mxu0 0.0
    %1096 = vmatprep.subr.mxu0 0.0
    %1097 = vmatpush1.msra.mxu0 0.0
    %1098 = vmatprep.subr.mxu0 0.0
    %1099 = vmatpush1.msra.mxu0 0.0
    %1100 = vmatprep.subr.mxu0 0.0
    %1101 = vmatpush1.msra.mxu0 0.0
    %1102 = vmatprep.subr.mxu0 0.0
    %1103 = vmatpush1.msra.mxu0 0.0
    %1104 = vmatprep.subr.mxu0 0.0
    %1105 = vmatpush1.msra.mxu0 0.0
    %1106 = vmatprep.subr.mxu0 0.0
    %1107 = vmatpush1.msra.mxu0 0.0
    %1108 = vmatprep.subr.mxu0 0.0
    %1109 = vmatpush1.msra.mxu0 0.0
    %1110 = vmatprep.subr.mxu0 0.0
    %1111 = vmatpush1.msra.mxu0 0.0
    %1112 = vmatprep.subr.mxu0 0.0
    %1113 = vmatpush1.msra.mxu0 0.0
    %1114 = vmatprep.subr.mxu0 0.0
    %1115 = vmatpush1.msra.mxu0 0.0
    %1116 = vmatprep.subr.mxu0 0.0
    %1117 = vmatpush1.msra.mxu0 0.0
    %1118 = vmatprep.subr.mxu0 0.0
    %1119 = vmatpush1.msra.mxu0 0.0
    %1120 = vmatprep.subr.mxu0 0.0
    %1121 = vmatpush1.msra.mxu0 0.0
    %1122 = vmatprep.subr.mxu0 0.0
    %1123 = vmatpush1.msra.mxu0 0.0
    %1124 = vmatprep.subr.mxu0 0.0
    %1125 = vmatpush1.msra.mxu0 0.0
    %1126 = vmatprep.mubr.f32.mxu0 0.0
    %1127 = vmatmul.mubr.f32.gmra.mrb[0].mxu0 %v1051
    %v1128 = vpop.f32.mrb[0].mxu0
    %v1129 = vadd.f32 0.0, %v1128
    %v1130 = vpop.f32.mrb[0].mxu0
    %1131 = vmatprep.mubr.f32.mxu0 0.0
    %1132 = vmatmul.mubr.f32.gmra.mrb[0].mxu0 %v1054
    %v1133 = vpop.f32.mrb[0].mxu0
    %v1134 = vadd.f32 0.0, %v1133
    %v1135 = vpop.f32.mrb[0].mxu0
    %1136 = vmatprep.mubr.f32.mxu0 0.0
    %1137 = vmatmul.mubr.f32.gmra.mrb[0].mxu0 %v1057
    %v1138 = vpop.f32.mrb[0].mxu0
    %v1139 = vadd.f32 0.0, %v1138
    %v1140 = vpop.f32.mrb[0].mxu0
    %1141 = vmatprep.mubr.f32.mxu0 0.0
    %1142 = vmatmul.mubr.f32.gmra.mrb[0].mxu0 %v1060
    %v1143 = vpop.f32.mrb[0].mxu0
    %v1144 = vadd.f32 0.0, %v1143
    %v1145 = vpop.f32.mrb[0].mxu0
    %1146 = vdwg.mxu0
    %v1147 = vxor.u32 %v1129, 2147483648
    %v1148 = vxor.u32 %v1134, 2147483648
    %v1149 = vxor.u32 %v1139, 2147483648
    %v1150 = vxor.u32 %v1144, 2147483648
    %v1151 = vmul.f32 %v1147, 1.442695
    %v1152 = vpow.pop %v1151
    %v1153 = vmul.f32 %v1148, 1.442695
    %v1154 = vpow.pop %v1153
    %v1155 = vmul.f32 %v1149, 1.442695
    %v1156 = vpow.pop %v1155
    %v1157 = vmul.f32 %v1150, 1.442695
    %v1158 = vpow.pop %v1157
    %v1159 = vadd.f32 %v1152, 1.0
    %v1160 = vadd.f32 %v1154, 1.0
    %v1161 = vadd.f32 %v1156, 1.0
    %v1162 = vadd.f32 %v1158, 1.0
    %v1163 = vrcp.pop %v1159
    %v1164 = vmul.f32 1.0, %v1163
    %v1165 = vrcp.pop %v1160
    %v1166 = vmul.f32 1.0, %v1165
    %v1167 = vrcp.pop %v1161
    %v1168 = vmul.f32 1.0, %v1167
    %v1169 = vrcp.pop %v1162
    %v1170 = vmul.f32 1.0, %v1169
    %v1171 = vmul.f32 %v1170, 2.0
    %v1172 = vsub.f32 %v1171, 1.0
    %v1173 = vmul.f32 %v1166, 0.0
    %v1174 = vmul.f32 %v1164, %v1172
    %v1175 = vadd.f32 %v1173, %v1174
    %v1176 = vtanh.pop %v1175
    %v1177 = vmul.f32 %v1168, %v1176
    %v1178 = vld [vmem:[%s267] sm:$0xf]
    %v1179 = vlaneseq
    %v1180 = vshrl.u32 %v1179, 7
    %v1181 = vsub.s32 0, %v1180
    %v1182 = vrot.slane %v1177, %v1181
    %v1183 = vmul.f32 %v81, %v1182
    %v1184 = vlaneseq
    %v1185 = vshrl.u32 %v1184, 7
    %v1186 = vsub.s32 1, %v1185
    %v1187 = vrot.slane %v1177, %v1186
    %v1188 = vmul.f32 %v85, %v1187
    %v1189 = vadd.f32 %v1183, %v1188
    %v1190 = vlaneseq
    %v1191 = vshrl.u32 %v1190, 7
    %v1192 = vsub.s32 2, %v1191
    %v1193 = vrot.slane %v1177, %v1192
    %v1194 = vmul.f32 %v89, %v1193
    %v1195 = vadd.f32 %v1189, %v1194
    %v1196 = vlaneseq
    %v1197 = vshrl.u32 %v1196, 7
    %v1198 = vsub.s32 3, %v1197
    %v1199 = vrot.slane %v1177, %v1198
    %v1200 = vmul.f32 %v93, %v1199
    %v1201 = vadd.f32 %v1195, %v1200
    %v1202 = vlaneseq
    %v1203 = vshrl.u32 %v1202, 7
    %v1204 = vsub.s32 4, %v1203
    %v1205 = vrot.slane %v1177, %v1204
    %v1206 = vmul.f32 %v97, %v1205
    %v1207 = vadd.f32 %v1201, %v1206
    %v1208 = vlaneseq
    %v1209 = vshrl.u32 %v1208, 7
    %v1210 = vsub.s32 5, %v1209
    %v1211 = vrot.slane %v1177, %v1210
    %v1212 = vmul.f32 %v101, %v1211
    %v1213 = vadd.f32 %v1207, %v1212
    %v1214 = vlaneseq
    %v1215 = vshrl.u32 %v1214, 7
    %v1216 = vsub.s32 6, %v1215
    %v1217 = vrot.slane %v1177, %v1216
    %v1218 = vmul.f32 %v105, %v1217
    %v1219 = vadd.f32 %v1213, %v1218
    %v1220 = vlaneseq
    %v1221 = vshrl.u32 %v1220, 7
    %v1222 = vsub.s32 7, %v1221
    %v1223 = vrot.slane %v1177, %v1222
    %v1224 = vmul.f32 %v109, %v1223
    %v1225 = vadd.f32 %v1219, %v1224
    %v1226 = vadd.f32 %v1178, %v1225
    %v1227 = vtanh.pop %v1226
    %v1228 = vmul.f32 %v1227, 1.5707964
    %v1229 = vand.u32 2147483647, %v1228
    %vm1230 = vcmp.le.f32.partialorder %v1229, 0.7853982
    %vm1231 = vcmp.lt.s32.totalorder %v1228, 0
    %v1232 = vand.u32 %v1228, 2139095040
    %v1233 = vshrl.u32 %v1232, 23
    %v1234 = vsub.s32 %v1233, 127
    %v1235 = vand.u32 2147483647, %v1228
    %v1236 = vand.u32 %v1235, 8388607
    %v1237 = vor.u32 %v1236, 8388608
    %v1238 = vsub.s32 0, %v1237
    %v1239 = vadd.s32 %v1234, 1
    %vm1240 = vcmp.gt.s32.totalorder %v1239, 0
    %v1241 = vsel %vm1240, %v1239, 0
    %v1242 = vshrl.u32 %v1241, 5
    %v1243 = vand.u32 %v1241, 31
    %v1244 = vsub.s32 32, %v1243
    %v1245 = vshrl.u32 683565275, %v1244
    %v1246 = vshll.u32 683565275, %v1243
    %v1247 = vshrl.u32 2475754826, %v1244
    %v1248 = vor.u32 %v1246, %v1247
    %v1249 = vshll.u32 2475754826, %v1243
    %v1250 = vshrl.u32 2131351028, %v1244
    %v1251 = vor.u32 %v1249, %v1250
    %v1252 = vshll.u32 2131351028, %v1243
    %v1253 = vshrl.u32 2102212464, %v1244
    %v1254 = vor.u32 %v1252, %v1253
    %v1255 = vshll.u32 2102212464, %v1243
    %v1256 = vshrl.u32 920167782, %v1244
    %v1257 = vor.u32 %v1255, %v1256
    %v1258 = vshll.u32 920167782, %v1243
    %v1259 = vshrl.u32 1326507024, %v1244
    %v1260 = vor.u32 %v1258, %v1259
    %vm1261 = vcmp.lt.s32.totalorder %v1242, 1
    %vm1262 = vcmp.lt.s32.totalorder %v1242, 2
    %vm1263 = vcmp.lt.s32.totalorder %v1242, 3
    %vm1264 = vcmp.lt.s32.totalorder %v1242, 4
    %v1265 = vsel %vm1261, %v1245, %v1248
    %v1266 = vsel %vm1264, %v1254, 2102212464
    %v1267 = vsel %vm1263, %v1251, %v1266
    %v1268 = vsel %vm1262, %v1265, %v1267
    %v1269 = vsel %vm1261, %v1248, %v1251
    %v1270 = vsel %vm1264, %v1257, 920167782
    %v1271 = vsel %vm1263, %v1254, %v1270
    %v1272 = vsel %vm1262, %v1269, %v1271
    %v1273 = vsel %vm1261, %v1251, %v1254
    %v1274 = vsel %vm1264, %v1260, 1326507024
    %v1275 = vsel %vm1263, %v1257, %v1274
    %v1276 = vsel %vm1262, %v1273, %v1275
    %v1277 = vshll.u32 %v1237, 8
    %v1278 = vmul.u32.u64.compose %v1277, %v1276
    %v1279 = vextract.low.u32 %v1278
    %v1280 = vextract.high.u32 %v1278
    %v1281 = vmul.u32.u64.compose %v1277, %v1272
    %v1282 = vextract.low.u32 %v1281
    %v1283 = vextract.high.u32 %v1281
    %v1284 = vmul.u32 %v1277, %v1268
    %v1285 = vadd.s32 %v1280, %v1282
    %vm1286 = vc.u32 %v1280, %v1282
    %v1287 = vadd.s32 %v1283, 1
    %v1288 = vsel %vm1286, %v1287, %v1283
    %v1289 = vadd.s32 %v1284, %v1288
    %v1290 = vadd.s32 %v1289, 536870912
    %v1291 = vshrl.u32 %v1290, 30
    %v1292 = vshll.u32 %v1291, 30
    %v1293 = vsub.s32 %v1289, %v1292
    %vm1294 = vcmp.lt.s32.totalorder %v1293, 0
    %v1295 = vsub.s32 0, %v1293
    %v1296 = vsel %vm1294, %v1295, %v1293
    %v1297 = vclz %v1296
    %v1298 = vsub.s32 %v1297, 2
    %vm1299 = vcmp.gt.s32.totalorder 0, %v1298
    %v1300 = vsel %vm1299, 0, %v1298
    %v1301 = vsub.s32 32, %v1300
    %v1302 = vshll.u32 %v1293, %v1300
    %v1303 = vshrl.u32 %v1285, %v1301
    %v1304 = vor.u32 %v1302, %v1303
    %v1305 = vsub.s32 4294967266, %v1300
    %v1306 = vadd.s32 %v1305, 127
    %v1307 = vshll.u32 %v1306, 23
    %v1308 = vor.u32 4788187, %v1307
    %v1309 = vand.u32 2147483647, %v1308
    %v1311 = vcvt.s32.f32 %v1304
    %v1312 = vmul.f32 %v1311, %v1309
    %v1313 = vxor.u32 %v1312, 2147483648
    %v1314 = vsel %vm1231, %v1313, %v1312
    %v1315 = vsub.s32 4, %v1291
    %v1316 = vsel %vm1231, %v1315, %v1291
    %v1317 = vsel %vm1230, %v1228, %v1314
    %v1318 = vsel %vm1230, 0, %v1316
    %v1319 = vcosq.f32.pop %v1317
    %v1320 = vsinq.f32.pop %v1317
    %vm1321 = vweird.f32 %v1228
    %v1322 = vand.u32 %v1318, 3
    %vm1323 = vcmp.lt.s32.totalorder %v1322, 2
    %vm1324 = vcmp.eq.s32.totalorder %v1322, 0
    %v1325 = vxor.u32 %v1320, 2147483648
    %v1326 = vsel %vm1324, %v1319, %v1325
    %vm1327 = vcmp.eq.s32.totalorder %v1322, 2
    %v1328 = vxor.u32 %v1319, 2147483648
    %v1329 = vsel %vm1327, %v1328, %v1320
    %v1330 = vsel %vm1323, %v1326, %v1329
    %v1331 = vsel %vm1321, nan, %v1330
    %v1332 = vand.u32 2147483647, %v1228
    %vm1333 = vcmp.le.f32.partialorder %v1332, 0.7853982
    %vm1334 = vcmp.lt.s32.totalorder %v1228, 0
    %v1335 = vand.u32 %v1228, 2139095040
    %v1336 = vshrl.u32 %v1335, 23
    %v1337 = vsub.s32 %v1336, 127
    %v1338 = vand.u32 2147483647, %v1228
    %v1339 = vand.u32 %v1338, 8388607
    %v1340 = vor.u32 %v1339, 8388608
    %v1341 = vsub.s32 0, %v1340
    %v1342 = vadd.s32 %v1337, 1
    %vm1343 = vcmp.gt.s32.totalorder %v1342, 0
    %v1344 = vsel %vm1343, %v1342, 0
    %v1345 = vshrl.u32 %v1344, 5
    %v1346 = vand.u32 %v1344, 31
    %v1347 = vsub.s32 32, %v1346
    %v1348 = vshrl.u32 683565275, %v1347
    %v1349 = vshll.u32 683565275, %v1346
    %v1350 = vshrl.u32 2475754826, %v1347
    %v1351 = vor.u32 %v1349, %v1350
    %v1352 = vshll.u32 2475754826, %v1346
    %v1353 = vshrl.u32 2131351028, %v1347
    %v1354 = vor.u32 %v1352, %v1353
    %v1355 = vshll.u32 2131351028, %v1346
    %v1356 = vshrl.u32 2102212464, %v1347
    %v1357 = vor.u32 %v1355, %v1356
    %v1358 = vshll.u32 2102212464, %v1346
    %v1359 = vshrl.u32 920167782, %v1347
    %v1360 = vor.u32 %v1358, %v1359
    %v1361 = vshll.u32 920167782, %v1346
    %v1362 = vshrl.u32 1326507024, %v1347
    %v1363 = vor.u32 %v1361, %v1362
    %vm1364 = vcmp.lt.s32.totalorder %v1345, 1
    %vm1365 = vcmp.lt.s32.totalorder %v1345, 2
    %vm1366 = vcmp.lt.s32.totalorder %v1345, 3
    %vm1367 = vcmp.lt.s32.totalorder %v1345, 4
    %v1368 = vsel %vm1364, %v1348, %v1351
    %v1369 = vsel %vm1367, %v1357, 2102212464
    %v1370 = vsel %vm1366, %v1354, %v1369
    %v1371 = vsel %vm1365, %v1368, %v1370
    %v1372 = vsel %vm1364, %v1351, %v1354
    %v1373 = vsel %vm1367, %v1360, 920167782
    %v1374 = vsel %vm1366, %v1357, %v1373
    %v1375 = vsel %vm1365, %v1372, %v1374
    %v1376 = vsel %vm1364, %v1354, %v1357
    %v1377 = vsel %vm1367, %v1363, 1326507024
    %v1378 = vsel %vm1366, %v1360, %v1377
    %v1379 = vsel %vm1365, %v1376, %v1378
    %v1380 = vshll.u32 %v1340, 8
    %v1381 = vmul.u32.u64.compose %v1380, %v1379
    %v1382 = vextract.low.u32 %v1381
    %v1383 = vextract.high.u32 %v1381
    %v1384 = vmul.u32.u64.compose %v1380, %v1375
    %v1385 = vextract.low.u32 %v1384
    %v1386 = vextract.high.u32 %v1384
    %v1387 = vmul.u32 %v1380, %v1371
    %v1388 = vadd.s32 %v1383, %v1385
    %vm1389 = vc.u32 %v1383, %v1385
    %v1390 = vadd.s32 %v1386, 1
    %v1391 = vsel %vm1389, %v1390, %v1386
    %v1392 = vadd.s32 %v1387, %v1391
    %v1393 = vadd.s32 %v1392, 536870912
    %v1394 = vshrl.u32 %v1393, 30
    %v1395 = vshll.u32 %v1394, 30
    %v1396 = vsub.s32 %v1392, %v1395
    %vm1397 = vcmp.lt.s32.totalorder %v1396, 0
    %v1398 = vsub.s32 0, %v1396
    %v1399 = vsel %vm1397, %v1398, %v1396
    %v1400 = vclz %v1399
    %v1401 = vsub.s32 %v1400, 2
    %vm1402 = vcmp.gt.s32.totalorder 0, %v1401
    %v1403 = vsel %vm1402, 0, %v1401
    %v1404 = vsub.s32 32, %v1403
    %v1405 = vshll.u32 %v1396, %v1403
    %v1406 = vshrl.u32 %v1388, %v1404
    %v1407 = vor.u32 %v1405, %v1406
    %v1408 = vsub.s32 4294967266, %v1403
    %v1409 = vadd.s32 %v1408, 127
    %v1410 = vshll.u32 %v1409, 23
    %v1411 = vor.u32 4788187, %v1410
    %v1412 = vand.u32 2147483647, %v1411
    %v1414 = vcvt.s32.f32 %v1407
    %v1415 = vmul.f32 %v1414, %v1412
    %v1416 = vxor.u32 %v1415, 2147483648
    %v1417 = vsel %vm1334, %v1416, %v1415
    %v1418 = vsub.s32 4, %v1394
    %v1419 = vsel %vm1334, %v1418, %v1394
    %v1420 = vsel %vm1333, %v1228, %v1417
    %v1421 = vsel %vm1333, 0, %v1419
    %v1422 = vcosq.f32.pop %v1420
    %v1423 = vsinq.f32.pop %v1420
    %vm1424 = vweird.f32 %v1228
    %v1425 = vadd.s32 %v1421, 3
    %v1426 = vand.u32 %v1425, 3
    %vm1427 = vcmp.lt.s32.totalorder %v1426, 2
    %vm1428 = vcmp.eq.s32.totalorder %v1426, 0
    %v1429 = vxor.u32 %v1423, 2147483648
    %v1430 = vsel %vm1428, %v1422, %v1429
    %vm1431 = vcmp.eq.s32.totalorder %v1426, 2
    %v1432 = vxor.u32 %v1422, 2147483648
    %v1433 = vsel %vm1431, %v1432, %v1423
    %v1434 = vsel %vm1427, %v1430, %v1433
    %v1435 = vsel %vm1424, nan, %v1434
    %v1436 = vlaneseq
    %v1437 = vshrl.u32 %v1436, 7
    %v1438 = vsub.s32 0, %v1437
    %v1439 = vrot.slane %v1435, %v1438
    %v1440 = vmul.f32 %v1439, %v26
    %v1441 = vmul.f32 %v1439, %v31
    %v1442 = vlaneseq
    %v1443 = vshrl.u32 %v1442, 7
    %v1444 = vsub.s32 0, %v1443
    %v1445 = vrot.slane %v1331, %v1444
    %v1446 = vmul.f32 %v1445, %v57
    %v1447 = vmul.f32 %v1445, %v58
    %v1448 = vadd.f32 %v1440, %v1446
    %v1449 = vadd.f32 %v1441, %v1447
    %v1450 = vlaneseq
    %v1451 = vshrl.u32 %v1450, 7
    %v1452 = vsub.s32 1, %v1451
    %v1453 = vrot.slane %v1435, %v1452
    %v1454 = vmul.f32 %v1453, %v35
    %v1455 = vmul.f32 %v1453, %v39
    %v1456 = vlaneseq
    %v1457 = vshrl.u32 %v1456, 7
    %v1458 = vsub.s32 1, %v1457
    %v1459 = vrot.slane %v1331, %v1458
    %v1460 = vmul.f32 %v1459, %v59
    %v1461 = vmul.f32 %v1459, %v60
    %v1462 = vadd.f32 %v1454, %v1460
    %v1463 = vadd.f32 %v1455, %v1461
    %v1464 = vmul.f32 %v1448, %v1462
    %v1465 = vmul.f32 %v1449, %v1463
    %v1466 = vlaneseq
    %v1467 = vshrl.u32 %v1466, 7
    %v1468 = vsub.s32 2, %v1467
    %v1469 = vrot.slane %v1435, %v1468
    %v1470 = vmul.f32 %v1469, %v43
    %v1471 = vmul.f32 %v1469, %v47
    %v1472 = vlaneseq
    %v1473 = vshrl.u32 %v1472, 7
    %v1474 = vsub.s32 2, %v1473
    %v1475 = vrot.slane %v1331, %v1474
    %v1476 = vmul.f32 %v1475, %v61
    %v1477 = vmul.f32 %v1475, %v62
    %v1478 = vadd.f32 %v1470, %v1476
    %v1479 = vadd.f32 %v1471, %v1477
    %v1480 = vmul.f32 %v1464, %v1478
    %v1481 = vmul.f32 %v1465, %v1479
    %v1482 = vlaneseq
    %v1483 = vshrl.u32 %v1482, 7
    %v1484 = vsub.s32 3, %v1483
    %v1485 = vrot.slane %v1435, %v1484
    %v1486 = vmul.f32 %v1485, %v51
    %v1487 = vmul.f32 %v1485, %v55
    %v1488 = vlaneseq
    %v1489 = vshrl.u32 %v1488, 7
    %v1490 = vsub.s32 3, %v1489
    %v1491 = vrot.slane %v1331, %v1490
    %v1492 = vmul.f32 %v1491, %v63
    %v1493 = vmul.f32 %v1491, %v64
    %v1494 = vadd.f32 %v1486, %v1492
    %v1495 = vadd.f32 %v1487, %v1493
    %v1496 = vmul.f32 %v1480, %v1494
    %v1497 = vmul.f32 %v1481, %v1495
    %1498 = vmatprep.subr.mxu0 0.0
    %1499 = vmatpush1.msra.mxu0 %v1496
    %1500 = vmatprep.subr.mxu0 0.0
    %1501 = vmatpush1.msra.mxu0 %v1497
    %1502 = vmatprep.subr.mxu0 0.0
    %1503 = vmatpush1.msra.mxu0 0.0
    %1504 = vmatprep.subr.mxu0 0.0
    %1505 = vmatpush1.msra.mxu0 0.0
    %1506 = vmatprep.subr.mxu0 0.0
    %1507 = vmatpush1.msra.mxu0 0.0
    %1508 = vmatprep.subr.mxu0 0.0
    %1509 = vmatpush1.msra.mxu0 0.0
    %1510 = vmatprep.subr.mxu0 0.0
    %1511 = vmatpush1.msra.mxu0 0.0
    %1512 = vmatprep.subr.mxu0 0.0
    %1513 = vmatpush1.msra.mxu0 0.0
    %1514 = vmatprep.subr.mxu0 0.0
    %1515 = vmatpush1.msra.mxu0 0.0
    %1516 = vmatprep.subr.mxu0 0.0
    %1517 = vmatpush1.msra.mxu0 0.0
    %1518 = vmatprep.subr.mxu0 0.0
    %1519 = vmatpush1.msra.mxu0 0.0
    %1520 = vmatprep.subr.mxu0 0.0
    %1521 = vmatpush1.msra.mxu0 0.0
    %1522 = vmatprep.subr.mxu0 0.0
    %1523 = vmatpush1.msra.mxu0 0.0
    %1524 = vmatprep.subr.mxu0 0.0
    %1525 = vmatpush1.msra.mxu0 0.0
    %1526 = vmatprep.subr.mxu0 0.0
    %1527 = vmatpush1.msra.mxu0 0.0
    %1528 = vmatprep.subr.mxu0 0.0
    %1529 = vmatpush1.msra.mxu0 0.0
    %1530 = vmatprep.subr.mxu0 0.0
    %1531 = vmatpush1.msra.mxu0 0.0
    %1532 = vmatprep.subr.mxu0 0.0
    %1533 = vmatpush1.msra.mxu0 0.0
    %1534 = vmatprep.subr.mxu0 0.0
    %1535 = vmatpush1.msra.mxu0 0.0
    %1536 = vmatprep.subr.mxu0 0.0
    %1537 = vmatpush1.msra.mxu0 0.0
    %1538 = vmatprep.subr.mxu0 0.0
    %1539 = vmatpush1.msra.mxu0 0.0
    %1540 = vmatprep.subr.mxu0 0.0
    %1541 = vmatpush1.msra.mxu0 0.0
    %1542 = vmatprep.subr.mxu0 0.0
    %1543 = vmatpush1.msra.mxu0 0.0
    %1544 = vmatprep.subr.mxu0 0.0
    %1545 = vmatpush1.msra.mxu0 0.0
    %1546 = vmatprep.subr.mxu0 0.0
    %1547 = vmatpush1.msra.mxu0 0.0
    %1548 = vmatprep.subr.mxu0 0.0
    %1549 = vmatpush1.msra.mxu0 0.0
    %1550 = vmatprep.subr.mxu0 0.0
    %1551 = vmatpush1.msra.mxu0 0.0
    %1552 = vmatprep.subr.mxu0 0.0
    %1553 = vmatpush1.msra.mxu0 0.0
    %1554 = vmatprep.subr.mxu0 0.0
    %1555 = vmatpush1.msra.mxu0 0.0
    %1556 = vmatprep.subr.mxu0 0.0
    %1557 = vmatpush1.msra.mxu0 0.0
    %1558 = vmatprep.subr.mxu0 0.0
    %1559 = vmatpush1.msra.mxu0 0.0
    %1560 = vmatprep.subr.mxu0 0.0
    %1561 = vmatpush1.msra.mxu0 0.0
    %1562 = vmatprep.mubr.f32.mxu0 0.0
    %1563 = vmatmul.mubr.f32.gmra.mrb[0].mxu0 %v949
    %v1564 = vpop.f32.mrb[0].mxu0
    %v1565 = vadd.f32 0.0, %v1564
    %v1566 = vpop.f32.mrb[0].mxu0
    %1567 = vmatprep.mubr.f32.mxu0 0.0
    %1568 = vmatmul.mubr.f32.gmra.mrb[0].mxu0 %v952
    %v1569 = vpop.f32.mrb[0].mxu0
    %v1570 = vadd.f32 0.0, %v1569
    %v1571 = vpop.f32.mrb[0].mxu0
    %1572 = vmatprep.mubr.f32.mxu0 0.0
    %1573 = vmatmul.mubr.f32.gmra.mrb[0].mxu0 %v955
    %v1574 = vpop.f32.mrb[0].mxu0
    %v1575 = vadd.f32 0.0, %v1574
    %v1576 = vpop.f32.mrb[0].mxu0
    %1577 = vmatprep.mubr.f32.mxu0 0.0
    %1578 = vmatmul.mubr.f32.gmra.mrb[0].mxu0 %v958
    %v1579 = vpop.f32.mrb[0].mxu0
    %v1580 = vadd.f32 0.0, %v1579
    %v1581 = vpop.f32.mrb[0].mxu0
    %1582 = vdwg.mxu0
    %v1583 = vmul.f32 %v1565, %v1565
    %v1584 = vmul.f32 %v1570, %v1570
    %v1585 = vmul.f32 %v1575, %v1575
    %v1586 = vmul.f32 %v1580, %v1580
    %1587 = vmatprep.subr.mxu0 0.0
    %1588 = vmatpush1.msra.mxu0 %v1583
    %1589 = vmatprep.subr.mxu0 0.0
    %1590 = vmatpush1.msra.mxu0 %v1584
    %1591 = vmatprep.subr.mxu0 0.0
    %1592 = vmatpush1.msra.mxu0 %v1585
    %1593 = vmatprep.subr.mxu0 0.0
    %1594 = vmatpush1.msra.mxu0 %v1586
    %1595 = vmatprep.subr.mxu0 0.0
    %1596 = vmatpush1.msra.mxu0 0.0
    %1597 = vmatprep.subr.mxu0 0.0
    %1598 = vmatpush1.msra.mxu0 0.0
    %1599 = vmatprep.subr.mxu0 0.0
    %1600 = vmatpush1.msra.mxu0 0.0
    %1601 = vmatprep.subr.mxu0 0.0
    %1602 = vmatpush1.msra.mxu0 0.0
    %1603 = vmatprep.subr.mxu0 0.0
    %1604 = vmatpush1.msra.mxu0 0.0
    %1605 = vmatprep.subr.mxu0 0.0
    %1606 = vmatpush1.msra.mxu0 0.0
    %1607 = vmatprep.subr.mxu0 0.0
    %1608 = vmatpush1.msra.mxu0 0.0
    %1609 = vmatprep.subr.mxu0 0.0
    %1610 = vmatpush1.msra.mxu0 0.0
    %1611 = vmatprep.subr.mxu0 0.0
    %1612 = vmatpush1.msra.mxu0 0.0
    %1613 = vmatprep.subr.mxu0 0.0
    %1614 = vmatpush1.msra.mxu0 0.0
    %1615 = vmatprep.subr.mxu0 0.0
    %1616 = vmatpush1.msra.mxu0 0.0
    %1617 = vmatprep.subr.mxu0 0.0
    %1618 = vmatpush1.msra.mxu0 0.0
    %1619 = vmatprep.subr.mxu0 0.0
    %1620 = vmatpush1.msra.mxu0 0.0
    %1621 = vmatprep.subr.mxu0 0.0
    %1622 = vmatpush1.msra.mxu0 0.0
    %1623 = vmatprep.subr.mxu0 0.0
    %1624 = vmatpush1.msra.mxu0 0.0
    %1625 = vmatprep.subr.mxu0 0.0
    %1626 = vmatpush1.msra.mxu0 0.0
    %1627 = vmatprep.subr.mxu0 0.0
    %1628 = vmatpush1.msra.mxu0 0.0
    %1629 = vmatprep.subr.mxu0 0.0
    %1630 = vmatpush1.msra.mxu0 0.0
    %1631 = vmatprep.subr.mxu0 0.0
    %1632 = vmatpush1.msra.mxu0 0.0
    %1633 = vmatprep.subr.mxu0 0.0
    %1634 = vmatpush1.msra.mxu0 0.0
    %1635 = vmatprep.subr.mxu0 0.0
    %1636 = vmatpush1.msra.mxu0 0.0
    %1637 = vmatprep.subr.mxu0 0.0
    %1638 = vmatpush1.msra.mxu0 0.0
    %1639 = vmatprep.subr.mxu0 0.0
    %1640 = vmatpush1.msra.mxu0 0.0
    %1641 = vmatprep.subr.mxu0 0.0
    %1642 = vmatpush1.msra.mxu0 0.0
    %1643 = vmatprep.subr.mxu0 0.0
    %1644 = vmatpush1.msra.mxu0 0.0
    %1645 = vmatprep.subr.mxu0 0.0
    %1646 = vmatpush1.msra.mxu0 0.0
    %1647 = vmatprep.subr.mxu0 0.0
    %1648 = vmatpush1.msra.mxu0 0.0
    %1649 = vmatprep.subr.mxu0 0.0
    %1650 = vmatpush1.msra.mxu0 0.0
    %1651 = vmatprep.mubr.f32.mxu0 0.0
    %1652 = vmatmul.mubr.f32.gmra.mrb[0].mxu0 %v1051
    %v1653 = vpop.f32.mrb[0].mxu0
    %v1654 = vadd.f32 0.0, %v1653
    %v1655 = vpop.f32.mrb[0].mxu0
    %1656 = vmatprep.mubr.f32.mxu0 0.0
    %1657 = vmatmul.mubr.f32.gmra.mrb[0].mxu0 %v1054
    %v1658 = vpop.f32.mrb[0].mxu0
    %v1659 = vadd.f32 0.0, %v1658
    %v1660 = vpop.f32.mrb[0].mxu0
    %1661 = vmatprep.mubr.f32.mxu0 0.0
    %1662 = vmatmul.mubr.f32.gmra.mrb[0].mxu0 %v1057
    %v1663 = vpop.f32.mrb[0].mxu0
    %v1664 = vadd.f32 0.0, %v1663
    %v1665 = vpop.f32.mrb[0].mxu0
    %1666 = vmatprep.mubr.f32.mxu0 0.0
    %1667 = vmatmul.mubr.f32.gmra.mrb[0].mxu0 %v1060
    %v1668 = vpop.f32.mrb[0].mxu0
    %v1669 = vadd.f32 0.0, %v1668
    %v1670 = vpop.f32.mrb[0].mxu0
    %1671 = vdwg.mxu0
    %v1672 = vxor.u32 %v1654, 2147483648
    %v1673 = vxor.u32 %v1659, 2147483648
    %v1674 = vxor.u32 %v1664, 2147483648
    %v1675 = vxor.u32 %v1669, 2147483648
    %v1676 = vmul.f32 %v1672, 1.442695
    %v1677 = vpow.pop %v1676
    %v1678 = vmul.f32 %v1673, 1.442695
    %v1679 = vpow.pop %v1678
    %v1680 = vmul.f32 %v1674, 1.442695
    %v1681 = vpow.pop %v1680
    %v1682 = vmul.f32 %v1675, 1.442695
    %v1683 = vpow.pop %v1682
    %v1684 = vadd.f32 %v1677, 1.0
    %v1685 = vadd.f32 %v1679, 1.0
    %v1686 = vadd.f32 %v1681, 1.0
    %v1687 = vadd.f32 %v1683, 1.0
    %v1688 = vrcp.pop %v1684
    %v1689 = vmul.f32 1.0, %v1688
    %v1690 = vrcp.pop %v1685
    %v1691 = vmul.f32 1.0, %v1690
    %v1692 = vrcp.pop %v1686
    %v1693 = vmul.f32 1.0, %v1692
    %v1694 = vrcp.pop %v1687
    %v1695 = vmul.f32 1.0, %v1694
    %v1696 = vmul.f32 %v1695, 2.0
    %v1697 = vsub.f32 %v1696, 1.0
    %v1698 = vmul.f32 %v1691, %v1175
    %v1699 = vmul.f32 %v1689, %v1697
    %v1700 = vadd.f32 %v1698, %v1699
    %v1701 = vtanh.pop %v1700
    %v1702 = vmul.f32 %v1693, %v1701
    %v1703 = vld [vmem:[%s345] sm:$0xf]
    %v1704 = vlaneseq
    %v1705 = vshrl.u32 %v1704, 7
    %v1706 = vsub.s32 0, %v1705
    %v1707 = vrot.slane %v1702, %v1706
    %v1708 = vmul.f32 %v81, %v1707
    %v1709 = vlaneseq
    %v1710 = vshrl.u32 %v1709, 7
    %v1711 = vsub.s32 1, %v1710
    %v1712 = vrot.slane %v1702, %v1711
    %v1713 = vmul.f32 %v85, %v1712
    %v1714 = vadd.f32 %v1708, %v1713
    %v1715 = vlaneseq
    %v1716 = vshrl.u32 %v1715, 7
    %v1717 = vsub.s32 2, %v1716
    %v1718 = vrot.slane %v1702, %v1717
    %v1719 = vmul.f32 %v89, %v1718
    %v1720 = vadd.f32 %v1714, %v1719
    %v1721 = vlaneseq
    %v1722 = vshrl.u32 %v1721, 7
    %v1723 = vsub.s32 3, %v1722
    %v1724 = vrot.slane %v1702, %v1723
    %v1725 = vmul.f32 %v93, %v1724
    %v1726 = vadd.f32 %v1720, %v1725
    %v1727 = vlaneseq
    %v1728 = vshrl.u32 %v1727, 7
    %v1729 = vsub.s32 4, %v1728
    %v1730 = vrot.slane %v1702, %v1729
    %v1731 = vmul.f32 %v97, %v1730
    %v1732 = vadd.f32 %v1726, %v1731
    %v1733 = vlaneseq
    %v1734 = vshrl.u32 %v1733, 7
    %v1735 = vsub.s32 5, %v1734
    %v1736 = vrot.slane %v1702, %v1735
    %v1737 = vmul.f32 %v101, %v1736
    %v1738 = vadd.f32 %v1732, %v1737
    %v1739 = vlaneseq
    %v1740 = vshrl.u32 %v1739, 7
    %v1741 = vsub.s32 6, %v1740
    %v1742 = vrot.slane %v1702, %v1741
    %v1743 = vmul.f32 %v105, %v1742
    %v1744 = vadd.f32 %v1738, %v1743
    %v1745 = vlaneseq
    %v1746 = vshrl.u32 %v1745, 7
    %v1747 = vsub.s32 7, %v1746
    %v1748 = vrot.slane %v1702, %v1747
    %v1749 = vmul.f32 %v109, %v1748
    %v1750 = vadd.f32 %v1744, %v1749
    %v1751 = vadd.f32 %v1703, %v1750
    %v1752 = vtanh.pop %v1751
    %v1753 = vmul.f32 %v1752, 1.5707964
    %v1754 = vand.u32 2147483647, %v1753
    %vm1755 = vcmp.le.f32.partialorder %v1754, 0.7853982
    %vm1756 = vcmp.lt.s32.totalorder %v1753, 0
    %v1757 = vand.u32 %v1753, 2139095040
    %v1758 = vshrl.u32 %v1757, 23
    %v1759 = vsub.s32 %v1758, 127
    %v1760 = vand.u32 2147483647, %v1753
    %v1761 = vand.u32 %v1760, 8388607
    %v1762 = vor.u32 %v1761, 8388608
    %v1763 = vsub.s32 0, %v1762
    %v1764 = vadd.s32 %v1759, 1
    %vm1765 = vcmp.gt.s32.totalorder %v1764, 0
    %v1766 = vsel %vm1765, %v1764, 0
    %v1767 = vshrl.u32 %v1766, 5
    %v1768 = vand.u32 %v1766, 31
    %v1769 = vsub.s32 32, %v1768
    %v1770 = vshrl.u32 683565275, %v1769
    %v1771 = vshll.u32 683565275, %v1768
    %v1772 = vshrl.u32 2475754826, %v1769
    %v1773 = vor.u32 %v1771, %v1772
    %v1774 = vshll.u32 2475754826, %v1768
    %v1775 = vshrl.u32 2131351028, %v1769
    %v1776 = vor.u32 %v1774, %v1775
    %v1777 = vshll.u32 2131351028, %v1768
    %v1778 = vshrl.u32 2102212464, %v1769
    %v1779 = vor.u32 %v1777, %v1778
    %v1780 = vshll.u32 2102212464, %v1768
    %v1781 = vshrl.u32 920167782, %v1769
    %v1782 = vor.u32 %v1780, %v1781
    %v1783 = vshll.u32 920167782, %v1768
    %v1784 = vshrl.u32 1326507024, %v1769
    %v1785 = vor.u32 %v1783, %v1784
    %vm1786 = vcmp.lt.s32.totalorder %v1767, 1
    %vm1787 = vcmp.lt.s32.totalorder %v1767, 2
    %vm1788 = vcmp.lt.s32.totalorder %v1767, 3
    %vm1789 = vcmp.lt.s32.totalorder %v1767, 4
    %v1790 = vsel %vm1786, %v1770, %v1773
    %v1791 = vsel %vm1789, %v1779, 2102212464
    %v1792 = vsel %vm1788, %v1776, %v1791
    %v1793 = vsel %vm1787, %v1790, %v1792
    %v1794 = vsel %vm1786, %v1773, %v1776
    %v1795 = vsel %vm1789, %v1782, 920167782
    %v1796 = vsel %vm1788, %v1779, %v1795
    %v1797 = vsel %vm1787, %v1794, %v1796
    %v1798 = vsel %vm1786, %v1776, %v1779
    %v1799 = vsel %vm1789, %v1785, 1326507024
    %v1800 = vsel %vm1788, %v1782, %v1799
    %v1801 = vsel %vm1787, %v1798, %v1800
    %v1802 = vshll.u32 %v1762, 8
    %v1803 = vmul.u32.u64.compose %v1802, %v1801
    %v1804 = vextract.low.u32 %v1803
    %v1805 = vextract.high.u32 %v1803
    %v1806 = vmul.u32.u64.compose %v1802, %v1797
    %v1807 = vextract.low.u32 %v1806
    %v1808 = vextract.high.u32 %v1806
    %v1809 = vmul.u32 %v1802, %v1793
    %v1810 = vadd.s32 %v1805, %v1807
    %vm1811 = vc.u32 %v1805, %v1807
    %v1812 = vadd.s32 %v1808, 1
    %v1813 = vsel %vm1811, %v1812, %v1808
    %v1814 = vadd.s32 %v1809, %v1813
    %v1815 = vadd.s32 %v1814, 536870912
    %v1816 = vshrl.u32 %v1815, 30
    %v1817 = vshll.u32 %v1816, 30
    %v1818 = vsub.s32 %v1814, %v1817
    %vm1819 = vcmp.lt.s32.totalorder %v1818, 0
    %v1820 = vsub.s32 0, %v1818
    %v1821 = vsel %vm1819, %v1820, %v1818
    %v1822 = vclz %v1821
    %v1823 = vsub.s32 %v1822, 2
    %vm1824 = vcmp.gt.s32.totalorder 0, %v1823
    %v1825 = vsel %vm1824, 0, %v1823
    %v1826 = vsub.s32 32, %v1825
    %v1827 = vshll.u32 %v1818, %v1825
    %v1828 = vshrl.u32 %v1810, %v1826
    %v1829 = vor.u32 %v1827, %v1828
    %v1830 = vsub.s32 4294967266, %v1825
    %v1831 = vadd.s32 %v1830, 127
    %v1832 = vshll.u32 %v1831, 23
    %v1833 = vor.u32 4788187, %v1832
    %v1834 = vand.u32 2147483647, %v1833
    %v1836 = vcvt.s32.f32 %v1829
    %v1837 = vmul.f32 %v1836, %v1834
    %v1838 = vxor.u32 %v1837, 2147483648
    %v1839 = vsel %vm1756, %v1838, %v1837
    %v1840 = vsub.s32 4, %v1816
    %v1841 = vsel %vm1756, %v1840, %v1816
    %v1842 = vsel %vm1755, %v1753, %v1839
    %v1843 = vsel %vm1755, 0, %v1841
    %v1844 = vcosq.f32.pop %v1842
    %v1845 = vsinq.f32.pop %v1842
    %vm1846 = vweird.f32 %v1753
    %v1847 = vand.u32 %v1843, 3
    %vm1848 = vcmp.lt.s32.totalorder %v1847, 2
    %vm1849 = vcmp.eq.s32.totalorder %v1847, 0
    %v1850 = vxor.u32 %v1845, 2147483648
    %v1851 = vsel %vm1849, %v1844, %v1850
    %vm1852 = vcmp.eq.s32.totalorder %v1847, 2
    %v1853 = vxor.u32 %v1844, 2147483648
    %v1854 = vsel %vm1852, %v1853, %v1845
    %v1855 = vsel %vm1848, %v1851, %v1854
    %v1856 = vsel %vm1846, nan, %v1855
    %v1857 = vand.u32 2147483647, %v1753
    %vm1858 = vcmp.le.f32.partialorder %v1857, 0.7853982
    %vm1859 = vcmp.lt.s32.totalorder %v1753, 0
    %v1860 = vand.u32 %v1753, 2139095040
    %v1861 = vshrl.u32 %v1860, 23
    %v1862 = vsub.s32 %v1861, 127
    %v1863 = vand.u32 2147483647, %v1753
    %v1864 = vand.u32 %v1863, 8388607
    %v1865 = vor.u32 %v1864, 8388608
    %v1866 = vsub.s32 0, %v1865
    %v1867 = vadd.s32 %v1862, 1
    %vm1868 = vcmp.gt.s32.totalorder %v1867, 0
    %v1869 = vsel %vm1868, %v1867, 0
    %v1870 = vshrl.u32 %v1869, 5
    %v1871 = vand.u32 %v1869, 31
    %v1872 = vsub.s32 32, %v1871
    %v1873 = vshrl.u32 683565275, %v1872
    %v1874 = vshll.u32 683565275, %v1871
    %v1875 = vshrl.u32 2475754826, %v1872
    %v1876 = vor.u32 %v1874, %v1875
    %v1877 = vshll.u32 2475754826, %v1871
    %v1878 = vshrl.u32 2131351028, %v1872
    %v1879 = vor.u32 %v1877, %v1878
    %v1880 = vshll.u32 2131351028, %v1871
    %v1881 = vshrl.u32 2102212464, %v1872
    %v1882 = vor.u32 %v1880, %v1881
    %v1883 = vshll.u32 2102212464, %v1871
    %v1884 = vshrl.u32 920167782, %v1872
    %v1885 = vor.u32 %v1883, %v1884
    %v1886 = vshll.u32 920167782, %v1871
    %v1887 = vshrl.u32 1326507024, %v1872
    %v1888 = vor.u32 %v1886, %v1887
    %vm1889 = vcmp.lt.s32.totalorder %v1870, 1
    %vm1890 = vcmp.lt.s32.totalorder %v1870, 2
    %vm1891 = vcmp.lt.s32.totalorder %v1870, 3
    %vm1892 = vcmp.lt.s32.totalorder %v1870, 4
    %v1893 = vsel %vm1889, %v1873, %v1876
    %v1894 = vsel %vm1892, %v1882, 2102212464
    %v1895 = vsel %vm1891, %v1879, %v1894
    %v1896 = vsel %vm1890, %v1893, %v1895
    %v1897 = vsel %vm1889, %v1876, %v1879
    %v1898 = vsel %vm1892, %v1885, 920167782
    %v1899 = vsel %vm1891, %v1882, %v1898
    %v1900 = vsel %vm1890, %v1897, %v1899
    %v1901 = vsel %vm1889, %v1879, %v1882
    %v1902 = vsel %vm1892, %v1888, 1326507024
    %v1903 = vsel %vm1891, %v1885, %v1902
    %v1904 = vsel %vm1890, %v1901, %v1903
    %v1905 = vshll.u32 %v1865, 8
    %v1906 = vmul.u32.u64.compose %v1905, %v1904
    %v1907 = vextract.low.u32 %v1906
    %v1908 = vextract.high.u32 %v1906
    %v1909 = vmul.u32.u64.compose %v1905, %v1900
    %v1910 = vextract.low.u32 %v1909
    %v1911 = vextract.high.u32 %v1909
    %v1912 = vmul.u32 %v1905, %v1896
    %v1913 = vadd.s32 %v1908, %v1910
    %vm1914 = vc.u32 %v1908, %v1910
    %v1915 = vadd.s32 %v1911, 1
    %v1916 = vsel %vm1914, %v1915, %v1911
    %v1917 = vadd.s32 %v1912, %v1916
    %v1918 = vadd.s32 %v1917, 536870912
    %v1919 = vshrl.u32 %v1918, 30
    %v1920 = vshll.u32 %v1919, 30
    %v1921 = vsub.s32 %v1917, %v1920
    %vm1922 = vcmp.lt.s32.totalorder %v1921, 0
    %v1923 = vsub.s32 0, %v1921
    %v1924 = vsel %vm1922, %v1923, %v1921
    %v1925 = vclz %v1924
    %v1926 = vsub.s32 %v1925, 2
    %vm1927 = vcmp.gt.s32.totalorder 0, %v1926
    %v1928 = vsel %vm1927, 0, %v1926
    %v1929 = vsub.s32 32, %v1928
    %v1930 = vshll.u32 %v1921, %v1928
    %v1931 = vshrl.u32 %v1913, %v1929
    %v1932 = vor.u32 %v1930, %v1931
    %v1933 = vsub.s32 4294967266, %v1928
    %v1934 = vadd.s32 %v1933, 127
    %v1935 = vshll.u32 %v1934, 23
    %v1936 = vor.u32 4788187, %v1935
    %v1937 = vand.u32 2147483647, %v1936
    %v1939 = vcvt.s32.f32 %v1932
    %v1940 = vmul.f32 %v1939, %v1937
    %v1941 = vxor.u32 %v1940, 2147483648
    %v1942 = vsel %vm1859, %v1941, %v1940
    %v1943 = vsub.s32 4, %v1919
    %v1944 = vsel %vm1859, %v1943, %v1919
    %v1945 = vsel %vm1858, %v1753, %v1942
    %v1946 = vsel %vm1858, 0, %v1944
    %v1947 = vcosq.f32.pop %v1945
    %v1948 = vsinq.f32.pop %v1945
    %vm1949 = vweird.f32 %v1753
    %v1950 = vadd.s32 %v1946, 3
    %v1951 = vand.u32 %v1950, 3
    %vm1952 = vcmp.lt.s32.totalorder %v1951, 2
    %vm1953 = vcmp.eq.s32.totalorder %v1951, 0
    %v1954 = vxor.u32 %v1948, 2147483648
    %v1955 = vsel %vm1953, %v1947, %v1954
    %vm1956 = vcmp.eq.s32.totalorder %v1951, 2
    %v1957 = vxor.u32 %v1947, 2147483648
    %v1958 = vsel %vm1956, %v1957, %v1948
    %v1959 = vsel %vm1952, %v1955, %v1958
    %v1960 = vsel %vm1949, nan, %v1959
    %v1961 = vlaneseq
    %v1962 = vshrl.u32 %v1961, 7
    %v1963 = vsub.s32 0, %v1962
    %v1964 = vrot.slane %v1960, %v1963
    %v1965 = vmul.f32 %v1964, %v26
    %v1966 = vmul.f32 %v1964, %v31
    %v1967 = vlaneseq
    %v1968 = vshrl.u32 %v1967, 7
    %v1969 = vsub.s32 0, %v1968
    %v1970 = vrot.slane %v1856, %v1969
    %v1971 = vmul.f32 %v1970, %v57
    %v1972 = vmul.f32 %v1970, %v58
    %v1973 = vadd.f32 %v1965, %v1971
    %v1974 = vadd.f32 %v1966, %v1972
    %v1975 = vlaneseq
    %v1976 = vshrl.u32 %v1975, 7
    %v1977 = vsub.s32 1, %v1976
    %v1978 = vrot.slane %v1960, %v1977
    %v1979 = vmul.f32 %v1978, %v35
    %v1980 = vmul.f32 %v1978, %v39
    %v1981 = vlaneseq
    %v1982 = vshrl.u32 %v1981, 7
    %v1983 = vsub.s32 1, %v1982
    %v1984 = vrot.slane %v1856, %v1983
    %v1985 = vmul.f32 %v1984, %v59
    %v1986 = vmul.f32 %v1984, %v60
    %v1987 = vadd.f32 %v1979, %v1985
    %v1988 = vadd.f32 %v1980, %v1986
    %v1989 = vmul.f32 %v1973, %v1987
    %v1990 = vmul.f32 %v1974, %v1988
    %v1991 = vlaneseq
    %v1992 = vshrl.u32 %v1991, 7
    %v1993 = vsub.s32 2, %v1992
    %v1994 = vrot.slane %v1960, %v1993
    %v1995 = vmul.f32 %v1994, %v43
    %v1996 = vmul.f32 %v1994, %v47
    %v1997 = vlaneseq
    %v1998 = vshrl.u32 %v1997, 7
    %v1999 = vsub.s32 2, %v1998
    %v2000 = vrot.slane %v1856, %v1999
    %v2001 = vmul.f32 %v2000, %v61
    %v2002 = vmul.f32 %v2000, %v62
    %v2003 = vadd.f32 %v1995, %v2001
    %v2004 = vadd.f32 %v1996, %v2002
    %v2005 = vmul.f32 %v1989, %v2003
    %v2006 = vmul.f32 %v1990, %v2004
    %v2007 = vlaneseq
    %v2008 = vshrl.u32 %v2007, 7
    %v2009 = vsub.s32 3, %v2008
    %v2010 = vrot.slane %v1960, %v2009
    %v2011 = vmul.f32 %v2010, %v51
    %v2012 = vmul.f32 %v2010, %v55
    %v2013 = vlaneseq
    %v2014 = vshrl.u32 %v2013, 7
    %v2015 = vsub.s32 3, %v2014
    %v2016 = vrot.slane %v1856, %v2015
    %v2017 = vmul.f32 %v2016, %v63
    %v2018 = vmul.f32 %v2016, %v64
    %v2019 = vadd.f32 %v2011, %v2017
    %v2020 = vadd.f32 %v2012, %v2018
    %v2021 = vmul.f32 %v2005, %v2019
    %v2022 = vmul.f32 %v2006, %v2020
    %2023 = vmatprep.subr.mxu0 0.0
    %2024 = vmatpush1.msra.mxu0 %v2021
    %2025 = vmatprep.subr.mxu0 0.0
    %2026 = vmatpush1.msra.mxu0 %v2022
    %2027 = vmatprep.subr.mxu0 0.0
    %2028 = vmatpush1.msra.mxu0 0.0
    %2029 = vmatprep.subr.mxu0 0.0
    %2030 = vmatpush1.msra.mxu0 0.0
    %2031 = vmatprep.subr.mxu0 0.0
    %2032 = vmatpush1.msra.mxu0 0.0
    %2033 = vmatprep.subr.mxu0 0.0
    %2034 = vmatpush1.msra.mxu0 0.0
    %2035 = vmatprep.subr.mxu0 0.0
    %2036 = vmatpush1.msra.mxu0 0.0
    %2037 = vmatprep.subr.mxu0 0.0
    %2038 = vmatpush1.msra.mxu0 0.0
    %2039 = vmatprep.subr.mxu0 0.0
    %2040 = vmatpush1.msra.mxu0 0.0
    %2041 = vmatprep.subr.mxu0 0.0
    %2042 = vmatpush1.msra.mxu0 0.0
    %2043 = vmatprep.subr.mxu0 0.0
    %2044 = vmatpush1.msra.mxu0 0.0
    %2045 = vmatprep.subr.mxu0 0.0
    %2046 = vmatpush1.msra.mxu0 0.0
    %2047 = vmatprep.subr.mxu0 0.0
    %2048 = vmatpush1.msra.mxu0 0.0
    %2049 = vmatprep.subr.mxu0 0.0
    %2050 = vmatpush1.msra.mxu0 0.0
    %2051 = vmatprep.subr.mxu0 0.0
    %2052 = vmatpush1.msra.mxu0 0.0
    %2053 = vmatprep.subr.mxu0 0.0
    %2054 = vmatpush1.msra.mxu0 0.0
    %2055 = vmatprep.subr.mxu0 0.0
    %2056 = vmatpush1.msra.mxu0 0.0
    %2057 = vmatprep.subr.mxu0 0.0
    %2058 = vmatpush1.msra.mxu0 0.0
    %2059 = vmatprep.subr.mxu0 0.0
    %2060 = vmatpush1.msra.mxu0 0.0
    %2061 = vmatprep.subr.mxu0 0.0
    %2062 = vmatpush1.msra.mxu0 0.0
    %2063 = vmatprep.subr.mxu0 0.0
    %2064 = vmatpush1.msra.mxu0 0.0
    %2065 = vmatprep.subr.mxu0 0.0
    %2066 = vmatpush1.msra.mxu0 0.0
    %2067 = vmatprep.subr.mxu0 0.0
    %2068 = vmatpush1.msra.mxu0 0.0
    %2069 = vmatprep.subr.mxu0 0.0
    %2070 = vmatpush1.msra.mxu0 0.0
    %2071 = vmatprep.subr.mxu0 0.0
    %2072 = vmatpush1.msra.mxu0 0.0
    %2073 = vmatprep.subr.mxu0 0.0
    %2074 = vmatpush1.msra.mxu0 0.0
    %2075 = vmatprep.subr.mxu0 0.0
    %2076 = vmatpush1.msra.mxu0 0.0
    %2077 = vmatprep.subr.mxu0 0.0
    %2078 = vmatpush1.msra.mxu0 0.0
    %2079 = vmatprep.subr.mxu0 0.0
    %2080 = vmatpush1.msra.mxu0 0.0
    %2081 = vmatprep.subr.mxu0 0.0
    %2082 = vmatpush1.msra.mxu0 0.0
    %2083 = vmatprep.subr.mxu0 0.0
    %2084 = vmatpush1.msra.mxu0 0.0
    %2085 = vmatprep.subr.mxu0 0.0
    %2086 = vmatpush1.msra.mxu0 0.0
    %2087 = vmatprep.mubr.f32.mxu0 0.0
    %2088 = vmatmul.mubr.f32.gmra.mrb[0].mxu0 %v949
    %v2089 = vpop.f32.mrb[0].mxu0
    %v2090 = vadd.f32 0.0, %v2089
    %v2091 = vpop.f32.mrb[0].mxu0
    %2092 = vmatprep.mubr.f32.mxu0 0.0
    %2093 = vmatmul.mubr.f32.gmra.mrb[0].mxu0 %v952
    %v2094 = vpop.f32.mrb[0].mxu0
    %v2095 = vadd.f32 0.0, %v2094
    %v2096 = vpop.f32.mrb[0].mxu0
    %2097 = vmatprep.mubr.f32.mxu0 0.0
    %2098 = vmatmul.mubr.f32.gmra.mrb[0].mxu0 %v955
    %v2099 = vpop.f32.mrb[0].mxu0
    %v2100 = vadd.f32 0.0, %v2099
    %v2101 = vpop.f32.mrb[0].mxu0
    %2102 = vmatprep.mubr.f32.mxu0 0.0
    %2103 = vmatmul.mubr.f32.gmra.mrb[0].mxu0 %v958
    %v2104 = vpop.f32.mrb[0].mxu0
    %v2105 = vadd.f32 0.0, %v2104
    %v2106 = vpop.f32.mrb[0].mxu0
    %2107 = vdwg.mxu0
    %v2108 = vmul.f32 %v2090, %v2090
    %v2109 = vmul.f32 %v2095, %v2095
    %v2110 = vmul.f32 %v2100, %v2100
    %v2111 = vmul.f32 %v2105, %v2105
    %2112 = vmatprep.subr.mxu0 0.0
    %2113 = vmatpush1.msra.mxu0 %v2108
    %2114 = vmatprep.subr.mxu0 0.0
    %2115 = vmatpush1.msra.mxu0 %v2109
    %2116 = vmatprep.subr.mxu0 0.0
    %2117 = vmatpush1.msra.mxu0 %v2110
    %2118 = vmatprep.subr.mxu0 0.0
    %2119 = vmatpush1.msra.mxu0 %v2111
    %2120 = vmatprep.subr.mxu0 0.0
    %2121 = vmatpush1.msra.mxu0 0.0
    %2122 = vmatprep.subr.mxu0 0.0
    %2123 = vmatpush1.msra.mxu0 0.0
    %2124 = vmatprep.subr.mxu0 0.0
    %2125 = vmatpush1.msra.mxu0 0.0
    %2126 = vmatprep.subr.mxu0 0.0
    %2127 = vmatpush1.msra.mxu0 0.0
    %2128 = vmatprep.subr.mxu0 0.0
    %2129 = vmatpush1.msra.mxu0 0.0
    %2130 = vmatprep.subr.mxu0 0.0
    %2131 = vmatpush1.msra.mxu0 0.0
    %2132 = vmatprep.subr.mxu0 0.0
    %2133 = vmatpush1.msra.mxu0 0.0
    %2134 = vmatprep.subr.mxu0 0.0
    %2135 = vmatpush1.msra.mxu0 0.0
    %2136 = vmatprep.subr.mxu0 0.0
    %2137 = vmatpush1.msra.mxu0 0.0
    %2138 = vmatprep.subr.mxu0 0.0
    %2139 = vmatpush1.msra.mxu0 0.0
    %2140 = vmatprep.subr.mxu0 0.0
    %2141 = vmatpush1.msra.mxu0 0.0
    %2142 = vmatprep.subr.mxu0 0.0
    %2143 = vmatpush1.msra.mxu0 0.0
    %2144 = vmatprep.subr.mxu0 0.0
    %2145 = vmatpush1.msra.mxu0 0.0
    %2146 = vmatprep.subr.mxu0 0.0
    %2147 = vmatpush1.msra.mxu0 0.0
    %2148 = vmatprep.subr.mxu0 0.0
    %2149 = vmatpush1.msra.mxu0 0.0
    %2150 = vmatprep.subr.mxu0 0.0
    %2151 = vmatpush1.msra.mxu0 0.0
    %2152 = vmatprep.subr.mxu0 0.0
    %2153 = vmatpush1.msra.mxu0 0.0
    %2154 = vmatprep.subr.mxu0 0.0
    %2155 = vmatpush1.msra.mxu0 0.0
    %2156 = vmatprep.subr.mxu0 0.0
    %2157 = vmatpush1.msra.mxu0 0.0
    %2158 = vmatprep.subr.mxu0 0.0
    %2159 = vmatpush1.msra.mxu0 0.0
    %2160 = vmatprep.subr.mxu0 0.0
    %2161 = vmatpush1.msra.mxu0 0.0
    %2162 = vmatprep.subr.mxu0 0.0
    %2163 = vmatpush1.msra.mxu0 0.0
    %2164 = vmatprep.subr.mxu0 0.0
    %2165 = vmatpush1.msra.mxu0 0.0
    %2166 = vmatprep.subr.mxu0 0.0
    %2167 = vmatpush1.msra.mxu0 0.0
    %2168 = vmatprep.subr.mxu0 0.0
    %2169 = vmatpush1.msra.mxu0 0.0
    %2170 = vmatprep.subr.mxu0 0.0
    %2171 = vmatpush1.msra.mxu0 0.0
    %2172 = vmatprep.subr.mxu0 0.0
    %2173 = vmatpush1.msra.mxu0 0.0
    %2174 = vmatprep.subr.mxu0 0.0
    %2175 = vmatpush1.msra.mxu0 0.0
    %2176 = vmatprep.mubr.f32.mxu0 0.0
    %2177 = vmatmul.mubr.f32.gmra.mrb[0].mxu0 %v1051
    %v2178 = vpop.f32.mrb[0].mxu0
    %v2179 = vadd.f32 0.0, %v2178
    %v2180 = vpop.f32.mrb[0].mxu0
    %2181 = vmatprep.mubr.f32.mxu0 0.0
    %2182 = vmatmul.mubr.f32.gmra.mrb[0].mxu0 %v1054
    %v2183 = vpop.f32.mrb[0].mxu0
    %v2184 = vadd.f32 0.0, %v2183
    %v2185 = vpop.f32.mrb[0].mxu0
    %2186 = vmatprep.mubr.f32.mxu0 0.0
    %2187 = vmatmul.mubr.f32.gmra.mrb[0].mxu0 %v1057
    %v2188 = vpop.f32.mrb[0].mxu0
    %v2189 = vadd.f32 0.0, %v2188
    %v2190 = vpop.f32.mrb[0].mxu0
    %2191 = vmatprep.mubr.f32.mxu0 0.0
    %2192 = vmatmul.mubr.f32.gmra.mrb[0].mxu0 %v1060
    %v2193 = vpop.f32.mrb[0].mxu0
    %v2194 = vadd.f32 0.0, %v2193
    %v2195 = vpop.f32.mrb[0].mxu0
    %2196 = vdwg.mxu0
    %v2197 = vxor.u32 %v2179, 2147483648
    %v2198 = vxor.u32 %v2184, 2147483648
    %v2199 = vxor.u32 %v2189, 2147483648
    %v2200 = vxor.u32 %v2194, 2147483648
    %v2201 = vmul.f32 %v2197, 1.442695
    %v2202 = vpow.pop %v2201
    %v2203 = vmul.f32 %v2198, 1.442695
    %v2204 = vpow.pop %v2203
    %v2205 = vmul.f32 %v2199, 1.442695
    %v2206 = vpow.pop %v2205
    %v2207 = vmul.f32 %v2200, 1.442695
    %v2208 = vpow.pop %v2207
    %v2209 = vadd.f32 %v2202, 1.0
    %v2210 = vadd.f32 %v2204, 1.0
    %v2211 = vadd.f32 %v2206, 1.0
    %v2212 = vadd.f32 %v2208, 1.0
    %v2213 = vrcp.pop %v2209
    %v2214 = vmul.f32 1.0, %v2213
    %v2215 = vrcp.pop %v2210
    %v2216 = vmul.f32 1.0, %v2215
    %v2217 = vrcp.pop %v2211
    %v2218 = vmul.f32 1.0, %v2217
    %v2219 = vrcp.pop %v2212
    %v2220 = vmul.f32 1.0, %v2219
    %v2221 = vmul.f32 %v2220, 2.0
    %v2222 = vsub.f32 %v2221, 1.0
    %v2223 = vmul.f32 %v2216, %v1700
    %v2224 = vmul.f32 %v2214, %v2222
    %v2225 = vadd.f32 %v2223, %v2224
    %v2226 = vtanh.pop %v2225
    %v2227 = vmul.f32 %v2218, %v2226
    %v2228 = vld [vmem:[%s423] sm:$0xf]
    %v2229 = vlaneseq
    %v2230 = vshrl.u32 %v2229, 7
    %v2231 = vsub.s32 0, %v2230
    %v2232 = vrot.slane %v2227, %v2231
    %v2233 = vmul.f32 %v81, %v2232
    %v2234 = vlaneseq
    %v2235 = vshrl.u32 %v2234, 7
    %v2236 = vsub.s32 1, %v2235
    %v2237 = vrot.slane %v2227, %v2236
    %v2238 = vmul.f32 %v85, %v2237
    %v2239 = vadd.f32 %v2233, %v2238
    %v2240 = vlaneseq
    %v2241 = vshrl.u32 %v2240, 7
    %v2242 = vsub.s32 2, %v2241
    %v2243 = vrot.slane %v2227, %v2242
    %v2244 = vmul.f32 %v89, %v2243
    %v2245 = vadd.f32 %v2239, %v2244
    %v2246 = vlaneseq
    %v2247 = vshrl.u32 %v2246, 7
    %v2248 = vsub.s32 3, %v2247
    %v2249 = vrot.slane %v2227, %v2248
    %v2250 = vmul.f32 %v93, %v2249
    %v2251 = vadd.f32 %v2245, %v2250
    %v2252 = vlaneseq
    %v2253 = vshrl.u32 %v2252, 7
    %v2254 = vsub.s32 4, %v2253
    %v2255 = vrot.slane %v2227, %v2254
    %v2256 = vmul.f32 %v97, %v2255
    %v2257 = vadd.f32 %v2251, %v2256
    %v2258 = vlaneseq
    %v2259 = vshrl.u32 %v2258, 7
    %v2260 = vsub.s32 5, %v2259
    %v2261 = vrot.slane %v2227, %v2260
    %v2262 = vmul.f32 %v101, %v2261
    %v2263 = vadd.f32 %v2257, %v2262
    %v2264 = vlaneseq
    %v2265 = vshrl.u32 %v2264, 7
    %v2266 = vsub.s32 6, %v2265
    %v2267 = vrot.slane %v2227, %v2266
    %v2268 = vmul.f32 %v105, %v2267
    %v2269 = vadd.f32 %v2263, %v2268
    %v2270 = vlaneseq
    %v2271 = vshrl.u32 %v2270, 7
    %v2272 = vsub.s32 7, %v2271
    %v2273 = vrot.slane %v2227, %v2272
    %v2274 = vmul.f32 %v109, %v2273
    %v2275 = vadd.f32 %v2269, %v2274
    %v2276 = vadd.f32 %v2228, %v2275
    %v2277 = vtanh.pop %v2276
    %v2278 = vmul.f32 %v2277, 1.5707964
    %v2279 = vand.u32 2147483647, %v2278
    %vm2280 = vcmp.le.f32.partialorder %v2279, 0.7853982
    %vm2281 = vcmp.lt.s32.totalorder %v2278, 0
    %v2282 = vand.u32 %v2278, 2139095040
    %v2283 = vshrl.u32 %v2282, 23
    %v2284 = vsub.s32 %v2283, 127
    %v2285 = vand.u32 2147483647, %v2278
    %v2286 = vand.u32 %v2285, 8388607
    %v2287 = vor.u32 %v2286, 8388608
    %v2288 = vsub.s32 0, %v2287
    %v2289 = vadd.s32 %v2284, 1
    %vm2290 = vcmp.gt.s32.totalorder %v2289, 0
    %v2291 = vsel %vm2290, %v2289, 0
    %v2292 = vshrl.u32 %v2291, 5
    %v2293 = vand.u32 %v2291, 31
    %v2294 = vsub.s32 32, %v2293
    %v2295 = vshrl.u32 683565275, %v2294
    %v2296 = vshll.u32 683565275, %v2293
    %v2297 = vshrl.u32 2475754826, %v2294
    %v2298 = vor.u32 %v2296, %v2297
    %v2299 = vshll.u32 2475754826, %v2293
    %v2300 = vshrl.u32 2131351028, %v2294
    %v2301 = vor.u32 %v2299, %v2300
    %v2302 = vshll.u32 2131351028, %v2293
    %v2303 = vshrl.u32 2102212464, %v2294
    %v2304 = vor.u32 %v2302, %v2303
    %v2305 = vshll.u32 2102212464, %v2293
    %v2306 = vshrl.u32 920167782, %v2294
    %v2307 = vor.u32 %v2305, %v2306
    %v2308 = vshll.u32 920167782, %v2293
    %v2309 = vshrl.u32 1326507024, %v2294
    %v2310 = vor.u32 %v2308, %v2309
    %vm2311 = vcmp.lt.s32.totalorder %v2292, 1
    %vm2312 = vcmp.lt.s32.totalorder %v2292, 2
    %vm2313 = vcmp.lt.s32.totalorder %v2292, 3
    %vm2314 = vcmp.lt.s32.totalorder %v2292, 4
    %v2315 = vsel %vm2311, %v2295, %v2298
    %v2316 = vsel %vm2314, %v2304, 2102212464
    %v2317 = vsel %vm2313, %v2301, %v2316
    %v2318 = vsel %vm2312, %v2315, %v2317
    %v2319 = vsel %vm2311, %v2298, %v2301
    %v2320 = vsel %vm2314, %v2307, 920167782
    %v2321 = vsel %vm2313, %v2304, %v2320
    %v2322 = vsel %vm2312, %v2319, %v2321
    %v2323 = vsel %vm2311, %v2301, %v2304
    %v2324 = vsel %vm2314, %v2310, 1326507024
    %v2325 = vsel %vm2313, %v2307, %v2324
    %v2326 = vsel %vm2312, %v2323, %v2325
    %v2327 = vshll.u32 %v2287, 8
    %v2328 = vmul.u32.u64.compose %v2327, %v2326
    %v2329 = vextract.low.u32 %v2328
    %v2330 = vextract.high.u32 %v2328
    %v2331 = vmul.u32.u64.compose %v2327, %v2322
    %v2332 = vextract.low.u32 %v2331
    %v2333 = vextract.high.u32 %v2331
    %v2334 = vmul.u32 %v2327, %v2318
    %v2335 = vadd.s32 %v2330, %v2332
    %vm2336 = vc.u32 %v2330, %v2332
    %v2337 = vadd.s32 %v2333, 1
    %v2338 = vsel %vm2336, %v2337, %v2333
    %v2339 = vadd.s32 %v2334, %v2338
    %v2340 = vadd.s32 %v2339, 536870912
    %v2341 = vshrl.u32 %v2340, 30
    %v2342 = vshll.u32 %v2341, 30
    %v2343 = vsub.s32 %v2339, %v2342
    %vm2344 = vcmp.lt.s32.totalorder %v2343, 0
    %v2345 = vsub.s32 0, %v2343
    %v2346 = vsel %vm2344, %v2345, %v2343
    %v2347 = vclz %v2346
    %v2348 = vsub.s32 %v2347, 2
    %vm2349 = vcmp.gt.s32.totalorder 0, %v2348
    %v2350 = vsel %vm2349, 0, %v2348
    %v2351 = vsub.s32 32, %v2350
    %v2352 = vshll.u32 %v2343, %v2350
    %v2353 = vshrl.u32 %v2335, %v2351
    %v2354 = vor.u32 %v2352, %v2353
    %v2355 = vsub.s32 4294967266, %v2350
    %v2356 = vadd.s32 %v2355, 127
    %v2357 = vshll.u32 %v2356, 23
    %v2358 = vor.u32 4788187, %v2357
    %v2359 = vand.u32 2147483647, %v2358
    %v2361 = vcvt.s32.f32 %v2354
    %v2362 = vmul.f32 %v2361, %v2359
    %v2363 = vxor.u32 %v2362, 2147483648
    %v2364 = vsel %vm2281, %v2363, %v2362
    %v2365 = vsub.s32 4, %v2341
    %v2366 = vsel %vm2281, %v2365, %v2341
    %v2367 = vsel %vm2280, %v2278, %v2364
    %v2368 = vsel %vm2280, 0, %v2366
    %v2369 = vcosq.f32.pop %v2367
    %v2370 = vsinq.f32.pop %v2367
    %vm2371 = vweird.f32 %v2278
    %v2372 = vand.u32 %v2368, 3
    %vm2373 = vcmp.lt.s32.totalorder %v2372, 2
    %vm2374 = vcmp.eq.s32.totalorder %v2372, 0
    %v2375 = vxor.u32 %v2370, 2147483648
    %v2376 = vsel %vm2374, %v2369, %v2375
    %vm2377 = vcmp.eq.s32.totalorder %v2372, 2
    %v2378 = vxor.u32 %v2369, 2147483648
    %v2379 = vsel %vm2377, %v2378, %v2370
    %v2380 = vsel %vm2373, %v2376, %v2379
    %v2381 = vsel %vm2371, nan, %v2380
    %v2382 = vand.u32 2147483647, %v2278
    %vm2383 = vcmp.le.f32.partialorder %v2382, 0.7853982
    %vm2384 = vcmp.lt.s32.totalorder %v2278, 0
    %v2385 = vand.u32 %v2278, 2139095040
    %v2386 = vshrl.u32 %v2385, 23
    %v2387 = vsub.s32 %v2386, 127
    %v2388 = vand.u32 2147483647, %v2278
    %v2389 = vand.u32 %v2388, 8388607
    %v2390 = vor.u32 %v2389, 8388608
    %v2391 = vsub.s32 0, %v2390
    %v2392 = vadd.s32 %v2387, 1
    %vm2393 = vcmp.gt.s32.totalorder %v2392, 0
    %v2394 = vsel %vm2393, %v2392, 0
    %v2395 = vshrl.u32 %v2394, 5
    %v2396 = vand.u32 %v2394, 31
    %v2397 = vsub.s32 32, %v2396
    %v2398 = vshrl.u32 683565275, %v2397
    %v2399 = vshll.u32 683565275, %v2396
    %v2400 = vshrl.u32 2475754826, %v2397
    %v2401 = vor.u32 %v2399, %v2400
    %v2402 = vshll.u32 2475754826, %v2396
    %v2403 = vshrl.u32 2131351028, %v2397
    %v2404 = vor.u32 %v2402, %v2403
    %v2405 = vshll.u32 2131351028, %v2396
    %v2406 = vshrl.u32 2102212464, %v2397
    %v2407 = vor.u32 %v2405, %v2406
    %v2408 = vshll.u32 2102212464, %v2396
    %v2409 = vshrl.u32 920167782, %v2397
    %v2410 = vor.u32 %v2408, %v2409
    %v2411 = vshll.u32 920167782, %v2396
    %v2412 = vshrl.u32 1326507024, %v2397
    %v2413 = vor.u32 %v2411, %v2412
    %vm2414 = vcmp.lt.s32.totalorder %v2395, 1
    %vm2415 = vcmp.lt.s32.totalorder %v2395, 2
    %vm2416 = vcmp.lt.s32.totalorder %v2395, 3
    %vm2417 = vcmp.lt.s32.totalorder %v2395, 4
    %v2418 = vsel %vm2414, %v2398, %v2401
    %v2419 = vsel %vm2417, %v2407, 2102212464
    %v2420 = vsel %vm2416, %v2404, %v2419
    %v2421 = vsel %vm2415, %v2418, %v2420
    %v2422 = vsel %vm2414, %v2401, %v2404
    %v2423 = vsel %vm2417, %v2410, 920167782
    %v2424 = vsel %vm2416, %v2407, %v2423
    %v2425 = vsel %vm2415, %v2422, %v2424
    %v2426 = vsel %vm2414, %v2404, %v2407
    %v2427 = vsel %vm2417, %v2413, 1326507024
    %v2428 = vsel %vm2416, %v2410, %v2427
    %v2429 = vsel %vm2415, %v2426, %v2428
    %v2430 = vshll.u32 %v2390, 8
    %v2431 = vmul.u32.u64.compose %v2430, %v2429
    %v2432 = vextract.low.u32 %v2431
    %v2433 = vextract.high.u32 %v2431
    %v2434 = vmul.u32.u64.compose %v2430, %v2425
    %v2435 = vextract.low.u32 %v2434
    %v2436 = vextract.high.u32 %v2434
    %v2437 = vmul.u32 %v2430, %v2421
    %v2438 = vadd.s32 %v2433, %v2435
    %vm2439 = vc.u32 %v2433, %v2435
    %v2440 = vadd.s32 %v2436, 1
    %v2441 = vsel %vm2439, %v2440, %v2436
    %v2442 = vadd.s32 %v2437, %v2441
    %v2443 = vadd.s32 %v2442, 536870912
    %v2444 = vshrl.u32 %v2443, 30
    %v2445 = vshll.u32 %v2444, 30
    %v2446 = vsub.s32 %v2442, %v2445
    %vm2447 = vcmp.lt.s32.totalorder %v2446, 0
    %v2448 = vsub.s32 0, %v2446
    %v2449 = vsel %vm2447, %v2448, %v2446
    %v2450 = vclz %v2449
    %v2451 = vsub.s32 %v2450, 2
    %vm2452 = vcmp.gt.s32.totalorder 0, %v2451
    %v2453 = vsel %vm2452, 0, %v2451
    %v2454 = vsub.s32 32, %v2453
    %v2455 = vshll.u32 %v2446, %v2453
    %v2456 = vshrl.u32 %v2438, %v2454
    %v2457 = vor.u32 %v2455, %v2456
    %v2458 = vsub.s32 4294967266, %v2453
    %v2459 = vadd.s32 %v2458, 127
    %v2460 = vshll.u32 %v2459, 23
    %v2461 = vor.u32 4788187, %v2460
    %v2462 = vand.u32 2147483647, %v2461
    %v2464 = vcvt.s32.f32 %v2457
    %v2465 = vmul.f32 %v2464, %v2462
    %v2466 = vxor.u32 %v2465, 2147483648
    %v2467 = vsel %vm2384, %v2466, %v2465
    %v2468 = vsub.s32 4, %v2444
    %v2469 = vsel %vm2384, %v2468, %v2444
    %v2470 = vsel %vm2383, %v2278, %v2467
    %v2471 = vsel %vm2383, 0, %v2469
    %v2472 = vcosq.f32.pop %v2470
    %v2473 = vsinq.f32.pop %v2470
    %vm2474 = vweird.f32 %v2278
    %v2475 = vadd.s32 %v2471, 3
    %v2476 = vand.u32 %v2475, 3
    %vm2477 = vcmp.lt.s32.totalorder %v2476, 2
    %vm2478 = vcmp.eq.s32.totalorder %v2476, 0
    %v2479 = vxor.u32 %v2473, 2147483648
    %v2480 = vsel %vm2478, %v2472, %v2479
    %vm2481 = vcmp.eq.s32.totalorder %v2476, 2
    %v2482 = vxor.u32 %v2472, 2147483648
    %v2483 = vsel %vm2481, %v2482, %v2473
    %v2484 = vsel %vm2477, %v2480, %v2483
    %v2485 = vsel %vm2474, nan, %v2484
    %v2486 = vlaneseq
    %v2487 = vshrl.u32 %v2486, 7
    %v2488 = vsub.s32 0, %v2487
    %v2489 = vrot.slane %v2485, %v2488
    %v2490 = vmul.f32 %v2489, %v26
    %v2491 = vmul.f32 %v2489, %v31
    %v2492 = vlaneseq
    %v2493 = vshrl.u32 %v2492, 7
    %v2494 = vsub.s32 0, %v2493
    %v2495 = vrot.slane %v2381, %v2494
    %v2496 = vmul.f32 %v2495, %v57
    %v2497 = vmul.f32 %v2495, %v58
    %v2498 = vadd.f32 %v2490, %v2496
    %v2499 = vadd.f32 %v2491, %v2497
    %v2500 = vlaneseq
    %v2501 = vshrl.u32 %v2500, 7
    %v2502 = vsub.s32 1, %v2501
    %v2503 = vrot.slane %v2485, %v2502
    %v2504 = vmul.f32 %v2503, %v35
    %v2505 = vmul.f32 %v2503, %v39
    %v2506 = vlaneseq
    %v2507 = vshrl.u32 %v2506, 7
    %v2508 = vsub.s32 1, %v2507
    %v2509 = vrot.slane %v2381, %v2508
    %v2510 = vmul.f32 %v2509, %v59
    %v2511 = vmul.f32 %v2509, %v60
    %v2512 = vadd.f32 %v2504, %v2510
    %v2513 = vadd.f32 %v2505, %v2511
    %v2514 = vmul.f32 %v2498, %v2512
    %v2515 = vmul.f32 %v2499, %v2513
    %v2516 = vlaneseq
    %v2517 = vshrl.u32 %v2516, 7
    %v2518 = vsub.s32 2, %v2517
    %v2519 = vrot.slane %v2485, %v2518
    %v2520 = vmul.f32 %v2519, %v43
    %v2521 = vmul.f32 %v2519, %v47
    %v2522 = vlaneseq
    %v2523 = vshrl.u32 %v2522, 7
    %v2524 = vsub.s32 2, %v2523
    %v2525 = vrot.slane %v2381, %v2524
    %v2526 = vmul.f32 %v2525, %v61
    %v2527 = vmul.f32 %v2525, %v62
    %v2528 = vadd.f32 %v2520, %v2526
    %v2529 = vadd.f32 %v2521, %v2527
    %v2530 = vmul.f32 %v2514, %v2528
    %v2531 = vmul.f32 %v2515, %v2529
    %v2532 = vlaneseq
    %v2533 = vshrl.u32 %v2532, 7
    %v2534 = vsub.s32 3, %v2533
    %v2535 = vrot.slane %v2485, %v2534
    %v2536 = vmul.f32 %v2535, %v51
    %v2537 = vmul.f32 %v2535, %v55
    %v2538 = vlaneseq
    %v2539 = vshrl.u32 %v2538, 7
    %v2540 = vsub.s32 3, %v2539
    %v2541 = vrot.slane %v2381, %v2540
    %v2542 = vmul.f32 %v2541, %v63
    %v2543 = vmul.f32 %v2541, %v64
    %v2544 = vadd.f32 %v2536, %v2542
    %v2545 = vadd.f32 %v2537, %v2543
    %v2546 = vmul.f32 %v2530, %v2544
    %v2547 = vmul.f32 %v2531, %v2545
    %2548 = vmatprep.subr.mxu0 0.0
    %2549 = vmatpush1.msra.mxu0 %v2546
    %2550 = vmatprep.subr.mxu0 0.0
    %2551 = vmatpush1.msra.mxu0 %v2547
    %2552 = vmatprep.subr.mxu0 0.0
    %2553 = vmatpush1.msra.mxu0 0.0
    %2554 = vmatprep.subr.mxu0 0.0
    %2555 = vmatpush1.msra.mxu0 0.0
    %2556 = vmatprep.subr.mxu0 0.0
    %2557 = vmatpush1.msra.mxu0 0.0
    %2558 = vmatprep.subr.mxu0 0.0
    %2559 = vmatpush1.msra.mxu0 0.0
    %2560 = vmatprep.subr.mxu0 0.0
    %2561 = vmatpush1.msra.mxu0 0.0
    %2562 = vmatprep.subr.mxu0 0.0
    %2563 = vmatpush1.msra.mxu0 0.0
    %2564 = vmatprep.subr.mxu0 0.0
    %2565 = vmatpush1.msra.mxu0 0.0
    %2566 = vmatprep.subr.mxu0 0.0
    %2567 = vmatpush1.msra.mxu0 0.0
    %2568 = vmatprep.subr.mxu0 0.0
    %2569 = vmatpush1.msra.mxu0 0.0
    %2570 = vmatprep.subr.mxu0 0.0
    %2571 = vmatpush1.msra.mxu0 0.0
    %2572 = vmatprep.subr.mxu0 0.0
    %2573 = vmatpush1.msra.mxu0 0.0
    %2574 = vmatprep.subr.mxu0 0.0
    %2575 = vmatpush1.msra.mxu0 0.0
    %2576 = vmatprep.subr.mxu0 0.0
    %2577 = vmatpush1.msra.mxu0 0.0
    %2578 = vmatprep.subr.mxu0 0.0
    %2579 = vmatpush1.msra.mxu0 0.0
    %2580 = vmatprep.subr.mxu0 0.0
    %2581 = vmatpush1.msra.mxu0 0.0
    %2582 = vmatprep.subr.mxu0 0.0
    %2583 = vmatpush1.msra.mxu0 0.0
    %2584 = vmatprep.subr.mxu0 0.0
    %2585 = vmatpush1.msra.mxu0 0.0
    %2586 = vmatprep.subr.mxu0 0.0
    %2587 = vmatpush1.msra.mxu0 0.0
    %2588 = vmatprep.subr.mxu0 0.0
    %2589 = vmatpush1.msra.mxu0 0.0
    %2590 = vmatprep.subr.mxu0 0.0
    %2591 = vmatpush1.msra.mxu0 0.0
    %2592 = vmatprep.subr.mxu0 0.0
    %2593 = vmatpush1.msra.mxu0 0.0
    %2594 = vmatprep.subr.mxu0 0.0
    %2595 = vmatpush1.msra.mxu0 0.0
    %2596 = vmatprep.subr.mxu0 0.0
    %2597 = vmatpush1.msra.mxu0 0.0
    %2598 = vmatprep.subr.mxu0 0.0
    %2599 = vmatpush1.msra.mxu0 0.0
    %2600 = vmatprep.subr.mxu0 0.0
    %2601 = vmatpush1.msra.mxu0 0.0
    %2602 = vmatprep.subr.mxu0 0.0
    %2603 = vmatpush1.msra.mxu0 0.0
    %2604 = vmatprep.subr.mxu0 0.0
    %2605 = vmatpush1.msra.mxu0 0.0
    %2606 = vmatprep.subr.mxu0 0.0
    %2607 = vmatpush1.msra.mxu0 0.0
    %2608 = vmatprep.subr.mxu0 0.0
    %2609 = vmatpush1.msra.mxu0 0.0
    %2610 = vmatprep.subr.mxu0 0.0
    %2611 = vmatpush1.msra.mxu0 0.0
    %2612 = vmatprep.mubr.f32.mxu0 0.0
    %2613 = vmatmul.mubr.f32.gmra.mrb[0].mxu0 %v949
    %v2614 = vpop.f32.mrb[0].mxu0
    %v2615 = vadd.f32 0.0, %v2614
    %v2616 = vpop.f32.mrb[0].mxu0
    %2617 = vmatprep.mubr.f32.mxu0 0.0
    %2618 = vmatmul.mubr.f32.gmra.mrb[0].mxu0 %v952
    %v2619 = vpop.f32.mrb[0].mxu0
    %v2620 = vadd.f32 0.0, %v2619
    %v2621 = vpop.f32.mrb[0].mxu0
    %2622 = vmatprep.mubr.f32.mxu0 0.0
    %2623 = vmatmul.mubr.f32.gmra.mrb[0].mxu0 %v955
    %v2624 = vpop.f32.mrb[0].mxu0
    %v2625 = vadd.f32 0.0, %v2624
    %v2626 = vpop.f32.mrb[0].mxu0
    %2627 = vmatprep.mubr.f32.mxu0 0.0
    %2628 = vmatmul.mubr.f32.gmra.mrb[0].mxu0 %v958
    %v2629 = vpop.f32.mrb[0].mxu0
    %v2630 = vadd.f32 0.0, %v2629
    %v2631 = vpop.f32.mrb[0].mxu0
    %2632 = vdwg.mxu0
    %v2633 = vmul.f32 %v2615, %v2615
    %v2634 = vmul.f32 %v2620, %v2620
    %v2635 = vmul.f32 %v2625, %v2625
    %v2636 = vmul.f32 %v2630, %v2630
    %2637 = vmatprep.subr.mxu0 0.0
    %2638 = vmatpush1.msra.mxu0 %v2633
    %2639 = vmatprep.subr.mxu0 0.0
    %2640 = vmatpush1.msra.mxu0 %v2634
    %2641 = vmatprep.subr.mxu0 0.0
    %2642 = vmatpush1.msra.mxu0 %v2635
    %2643 = vmatprep.subr.mxu0 0.0
    %2644 = vmatpush1.msra.mxu0 %v2636
    %2645 = vmatprep.subr.mxu0 0.0
    %2646 = vmatpush1.msra.mxu0 0.0
    %2647 = vmatprep.subr.mxu0 0.0
    %2648 = vmatpush1.msra.mxu0 0.0
    %2649 = vmatprep.subr.mxu0 0.0
    %2650 = vmatpush1.msra.mxu0 0.0
    %2651 = vmatprep.subr.mxu0 0.0
    %2652 = vmatpush1.msra.mxu0 0.0
    %2653 = vmatprep.subr.mxu0 0.0
    %2654 = vmatpush1.msra.mxu0 0.0
    %2655 = vmatprep.subr.mxu0 0.0
    %2656 = vmatpush1.msra.mxu0 0.0
    %2657 = vmatprep.subr.mxu0 0.0
    %2658 = vmatpush1.msra.mxu0 0.0
    %2659 = vmatprep.subr.mxu0 0.0
    %2660 = vmatpush1.msra.mxu0 0.0
    %2661 = vmatprep.subr.mxu0 0.0
    %2662 = vmatpush1.msra.mxu0 0.0
    %2663 = vmatprep.subr.mxu0 0.0
    %2664 = vmatpush1.msra.mxu0 0.0
    %2665 = vmatprep.subr.mxu0 0.0
    %2666 = vmatpush1.msra.mxu0 0.0
    %2667 = vmatprep.subr.mxu0 0.0
    %2668 = vmatpush1.msra.mxu0 0.0
    %2669 = vmatprep.subr.mxu0 0.0
    %2670 = vmatpush1.msra.mxu0 0.0
    %2671 = vmatprep.subr.mxu0 0.0
    %2672 = vmatpush1.msra.mxu0 0.0
    %2673 = vmatprep.subr.mxu0 0.0
    %2674 = vmatpush1.msra.mxu0 0.0
    %2675 = vmatprep.subr.mxu0 0.0
    %2676 = vmatpush1.msra.mxu0 0.0
    %2677 = vmatprep.subr.mxu0 0.0
    %2678 = vmatpush1.msra.mxu0 0.0
    %2679 = vmatprep.subr.mxu0 0.0
    %2680 = vmatpush1.msra.mxu0 0.0
    %2681 = vmatprep.subr.mxu0 0.0
    %2682 = vmatpush1.msra.mxu0 0.0
    %2683 = vmatprep.subr.mxu0 0.0
    %2684 = vmatpush1.msra.mxu0 0.0
    %2685 = vmatprep.subr.mxu0 0.0
    %2686 = vmatpush1.msra.mxu0 0.0
    %2687 = vmatprep.subr.mxu0 0.0
    %2688 = vmatpush1.msra.mxu0 0.0
    %2689 = vmatprep.subr.mxu0 0.0
    %2690 = vmatpush1.msra.mxu0 0.0
    %2691 = vmatprep.subr.mxu0 0.0
    %2692 = vmatpush1.msra.mxu0 0.0
    %2693 = vmatprep.subr.mxu0 0.0
    %2694 = vmatpush1.msra.mxu0 0.0
    %2695 = vmatprep.subr.mxu0 0.0
    %2696 = vmatpush1.msra.mxu0 0.0
    %2697 = vmatprep.subr.mxu0 0.0
    %2698 = vmatpush1.msra.mxu0 0.0
    %2699 = vmatprep.subr.mxu0 0.0
    %2700 = vmatpush1.msra.mxu0 0.0
    %2701 = vmatprep.mubr.f32.mxu0 0.0
    %2702 = vmatmul.mubr.f32.gmra.mrb[0].mxu0 %v1051
    %v2703 = vpop.f32.mrb[0].mxu0
    %v2704 = vadd.f32 0.0, %v2703
    %v2705 = vpop.f32.mrb[0].mxu0
    %2706 = vmatprep.mubr.f32.mxu0 0.0
    %2707 = vmatmul.mubr.f32.gmra.mrb[0].mxu0 %v1054
    %v2708 = vpop.f32.mrb[0].mxu0
    %v2709 = vadd.f32 0.0, %v2708
    %v2710 = vpop.f32.mrb[0].mxu0
    %2711 = vmatprep.mubr.f32.mxu0 0.0
    %2712 = vmatmul.mubr.f32.gmra.mrb[0].mxu0 %v1057
    %v2713 = vpop.f32.mrb[0].mxu0
    %v2714 = vadd.f32 0.0, %v2713
    %v2715 = vpop.f32.mrb[0].mxu0
    %2716 = vmatprep.mubr.f32.mxu0 0.0
    %2717 = vmatmul.mubr.f32.gmra.mrb[0].mxu0 %v1060
    %v2718 = vpop.f32.mrb[0].mxu0
    %v2719 = vadd.f32 0.0, %v2718
    %v2720 = vpop.f32.mrb[0].mxu0
    %2721 = vdwg.mxu0
    %v2722 = vxor.u32 %v2704, 2147483648
    %v2723 = vxor.u32 %v2709, 2147483648
    %v2724 = vxor.u32 %v2714, 2147483648
    %v2725 = vxor.u32 %v2719, 2147483648
    %v2726 = vmul.f32 %v2722, 1.442695
    %v2727 = vpow.pop %v2726
    %v2728 = vmul.f32 %v2723, 1.442695
    %v2729 = vpow.pop %v2728
    %v2730 = vmul.f32 %v2724, 1.442695
    %v2731 = vpow.pop %v2730
    %v2732 = vmul.f32 %v2725, 1.442695
    %v2733 = vpow.pop %v2732
    %v2734 = vadd.f32 %v2727, 1.0
    %v2735 = vadd.f32 %v2729, 1.0
    %v2736 = vadd.f32 %v2731, 1.0
    %v2737 = vadd.f32 %v2733, 1.0
    %v2738 = vrcp.pop %v2734
    %v2739 = vmul.f32 1.0, %v2738
    %v2740 = vrcp.pop %v2735
    %v2741 = vmul.f32 1.0, %v2740
    %v2742 = vrcp.pop %v2736
    %v2743 = vmul.f32 1.0, %v2742
    %v2744 = vrcp.pop %v2737
    %v2745 = vmul.f32 1.0, %v2744
    %v2746 = vmul.f32 %v2745, 2.0
    %v2747 = vsub.f32 %v2746, 1.0
    %v2748 = vmul.f32 %v2741, %v2225
    %v2749 = vmul.f32 %v2739, %v2747
    %v2750 = vadd.f32 %v2748, %v2749
    %v2751 = vtanh.pop %v2750
    %v2752 = vmul.f32 %v2743, %v2751
    %v2753 = vld [vmem:[%s501] sm:$0xf]
    %v2754 = vlaneseq
    %v2755 = vshrl.u32 %v2754, 7
    %v2756 = vsub.s32 0, %v2755
    %v2757 = vrot.slane %v2752, %v2756
    %v2758 = vmul.f32 %v81, %v2757
    %v2759 = vlaneseq
    %v2760 = vshrl.u32 %v2759, 7
    %v2761 = vsub.s32 1, %v2760
    %v2762 = vrot.slane %v2752, %v2761
    %v2763 = vmul.f32 %v85, %v2762
    %v2764 = vadd.f32 %v2758, %v2763
    %v2765 = vlaneseq
    %v2766 = vshrl.u32 %v2765, 7
    %v2767 = vsub.s32 2, %v2766
    %v2768 = vrot.slane %v2752, %v2767
    %v2769 = vmul.f32 %v89, %v2768
    %v2770 = vadd.f32 %v2764, %v2769
    %v2771 = vlaneseq
    %v2772 = vshrl.u32 %v2771, 7
    %v2773 = vsub.s32 3, %v2772
    %v2774 = vrot.slane %v2752, %v2773
    %v2775 = vmul.f32 %v93, %v2774
    %v2776 = vadd.f32 %v2770, %v2775
    %v2777 = vlaneseq
    %v2778 = vshrl.u32 %v2777, 7
    %v2779 = vsub.s32 4, %v2778
    %v2780 = vrot.slane %v2752, %v2779
    %v2781 = vmul.f32 %v97, %v2780
    %v2782 = vadd.f32 %v2776, %v2781
    %v2783 = vlaneseq
    %v2784 = vshrl.u32 %v2783, 7
    %v2785 = vsub.s32 5, %v2784
    %v2786 = vrot.slane %v2752, %v2785
    %v2787 = vmul.f32 %v101, %v2786
    %v2788 = vadd.f32 %v2782, %v2787
    %v2789 = vlaneseq
    %v2790 = vshrl.u32 %v2789, 7
    %v2791 = vsub.s32 6, %v2790
    %v2792 = vrot.slane %v2752, %v2791
    %v2793 = vmul.f32 %v105, %v2792
    %v2794 = vadd.f32 %v2788, %v2793
    %v2795 = vlaneseq
    %v2796 = vshrl.u32 %v2795, 7
    %v2797 = vsub.s32 7, %v2796
    %v2798 = vrot.slane %v2752, %v2797
    %v2799 = vmul.f32 %v109, %v2798
    %v2800 = vadd.f32 %v2794, %v2799
    %v2801 = vadd.f32 %v2753, %v2800
    %v2802 = vtanh.pop %v2801
    %v2803 = vmul.f32 %v2802, 1.5707964
    %v2804 = vand.u32 2147483647, %v2803
    %vm2805 = vcmp.le.f32.partialorder %v2804, 0.7853982
    %vm2806 = vcmp.lt.s32.totalorder %v2803, 0
    %v2807 = vand.u32 %v2803, 2139095040
    %v2808 = vshrl.u32 %v2807, 23
    %v2809 = vsub.s32 %v2808, 127
    %v2810 = vand.u32 2147483647, %v2803
    %v2811 = vand.u32 %v2810, 8388607
    %v2812 = vor.u32 %v2811, 8388608
    %v2813 = vsub.s32 0, %v2812
    %v2814 = vadd.s32 %v2809, 1
    %vm2815 = vcmp.gt.s32.totalorder %v2814, 0
    %v2816 = vsel %vm2815, %v2814, 0
    %v2817 = vshrl.u32 %v2816, 5
    %v2818 = vand.u32 %v2816, 31
    %v2819 = vsub.s32 32, %v2818
    %v2820 = vshrl.u32 683565275, %v2819
    %v2821 = vshll.u32 683565275, %v2818
    %v2822 = vshrl.u32 2475754826, %v2819
    %v2823 = vor.u32 %v2821, %v2822
    %v2824 = vshll.u32 2475754826, %v2818
    %v2825 = vshrl.u32 2131351028, %v2819
    %v2826 = vor.u32 %v2824, %v2825
    %v2827 = vshll.u32 2131351028, %v2818
    %v2828 = vshrl.u32 2102212464, %v2819
    %v2829 = vor.u32 %v2827, %v2828
    %v2830 = vshll.u32 2102212464, %v2818
    %v2831 = vshrl.u32 920167782, %v2819
    %v2832 = vor.u32 %v2830, %v2831
    %v2833 = vshll.u32 920167782, %v2818
    %v2834 = vshrl.u32 1326507024, %v2819
    %v2835 = vor.u32 %v2833, %v2834
    %vm2836 = vcmp.lt.s32.totalorder %v2817, 1
    %vm2837 = vcmp.lt.s32.totalorder %v2817, 2
    %vm2838 = vcmp.lt.s32.totalorder %v2817, 3
    %vm2839 = vcmp.lt.s32.totalorder %v2817, 4
    %v2840 = vsel %vm2836, %v2820, %v2823
    %v2841 = vsel %vm2839, %v2829, 2102212464
    %v2842 = vsel %vm2838, %v2826, %v2841
    %v2843 = vsel %vm2837, %v2840, %v2842
    %v2844 = vsel %vm2836, %v2823, %v2826
    %v2845 = vsel %vm2839, %v2832, 920167782
    %v2846 = vsel %vm2838, %v2829, %v2845
    %v2847 = vsel %vm2837, %v2844, %v2846
    %v2848 = vsel %vm2836, %v2826, %v2829
    %v2849 = vsel %vm2839, %v2835, 1326507024
    %v2850 = vsel %vm2838, %v2832, %v2849
    %v2851 = vsel %vm2837, %v2848, %v2850
    %v2852 = vshll.u32 %v2812, 8
    %v2853 = vmul.u32.u64.compose %v2852, %v2851
    %v2854 = vextract.low.u32 %v2853
    %v2855 = vextract.high.u32 %v2853
    %v2856 = vmul.u32.u64.compose %v2852, %v2847
    %v2857 = vextract.low.u32 %v2856
    %v2858 = vextract.high.u32 %v2856
    %v2859 = vmul.u32 %v2852, %v2843
    %v2860 = vadd.s32 %v2855, %v2857
    %vm2861 = vc.u32 %v2855, %v2857
    %v2862 = vadd.s32 %v2858, 1
    %v2863 = vsel %vm2861, %v2862, %v2858
    %v2864 = vadd.s32 %v2859, %v2863
    %v2865 = vadd.s32 %v2864, 536870912
    %v2866 = vshrl.u32 %v2865, 30
    %v2867 = vshll.u32 %v2866, 30
    %v2868 = vsub.s32 %v2864, %v2867
    %vm2869 = vcmp.lt.s32.totalorder %v2868, 0
    %v2870 = vsub.s32 0, %v2868
    %v2871 = vsel %vm2869, %v2870, %v2868
    %v2872 = vclz %v2871
    %v2873 = vsub.s32 %v2872, 2
    %vm2874 = vcmp.gt.s32.totalorder 0, %v2873
    %v2875 = vsel %vm2874, 0, %v2873
    %v2876 = vsub.s32 32, %v2875
    %v2877 = vshll.u32 %v2868, %v2875
    %v2878 = vshrl.u32 %v2860, %v2876
    %v2879 = vor.u32 %v2877, %v2878
    %v2880 = vsub.s32 4294967266, %v2875
    %v2881 = vadd.s32 %v2880, 127
    %v2882 = vshll.u32 %v2881, 23
    %v2883 = vor.u32 4788187, %v2882
    %v2884 = vand.u32 2147483647, %v2883
    %v2886 = vcvt.s32.f32 %v2879
    %v2887 = vmul.f32 %v2886, %v2884
    %v2888 = vxor.u32 %v2887, 2147483648
    %v2889 = vsel %vm2806, %v2888, %v2887
    %v2890 = vsub.s32 4, %v2866
    %v2891 = vsel %vm2806, %v2890, %v2866
    %v2892 = vsel %vm2805, %v2803, %v2889
    %v2893 = vsel %vm2805, 0, %v2891
    %v2894 = vcosq.f32.pop %v2892
    %v2895 = vsinq.f32.pop %v2892
    %vm2896 = vweird.f32 %v2803
    %v2897 = vand.u32 %v2893, 3
    %vm2898 = vcmp.lt.s32.totalorder %v2897, 2
    %vm2899 = vcmp.eq.s32.totalorder %v2897, 0
    %v2900 = vxor.u32 %v2895, 2147483648
    %v2901 = vsel %vm2899, %v2894, %v2900
    %vm2902 = vcmp.eq.s32.totalorder %v2897, 2
    %v2903 = vxor.u32 %v2894, 2147483648
    %v2904 = vsel %vm2902, %v2903, %v2895
    %v2905 = vsel %vm2898, %v2901, %v2904
    %v2906 = vsel %vm2896, nan, %v2905
    %v2907 = vand.u32 2147483647, %v2803
    %vm2908 = vcmp.le.f32.partialorder %v2907, 0.7853982
    %vm2909 = vcmp.lt.s32.totalorder %v2803, 0
    %v2910 = vand.u32 %v2803, 2139095040
    %v2911 = vshrl.u32 %v2910, 23
    %v2912 = vsub.s32 %v2911, 127
    %v2913 = vand.u32 2147483647, %v2803
    %v2914 = vand.u32 %v2913, 8388607
    %v2915 = vor.u32 %v2914, 8388608
    %v2916 = vsub.s32 0, %v2915
    %v2917 = vadd.s32 %v2912, 1
    %vm2918 = vcmp.gt.s32.totalorder %v2917, 0
    %v2919 = vsel %vm2918, %v2917, 0
    %v2920 = vshrl.u32 %v2919, 5
    %v2921 = vand.u32 %v2919, 31
    %v2922 = vsub.s32 32, %v2921
    %v2923 = vshrl.u32 683565275, %v2922
    %v2924 = vshll.u32 683565275, %v2921
    %v2925 = vshrl.u32 2475754826, %v2922
    %v2926 = vor.u32 %v2924, %v2925
    %v2927 = vshll.u32 2475754826, %v2921
    %v2928 = vshrl.u32 2131351028, %v2922
    %v2929 = vor.u32 %v2927, %v2928
    %v2930 = vshll.u32 2131351028, %v2921
    %v2931 = vshrl.u32 2102212464, %v2922
    %v2932 = vor.u32 %v2930, %v2931
    %v2933 = vshll.u32 2102212464, %v2921
    %v2934 = vshrl.u32 920167782, %v2922
    %v2935 = vor.u32 %v2933, %v2934
    %v2936 = vshll.u32 920167782, %v2921
    %v2937 = vshrl.u32 1326507024, %v2922
    %v2938 = vor.u32 %v2936, %v2937
    %vm2939 = vcmp.lt.s32.totalorder %v2920, 1
    %vm2940 = vcmp.lt.s32.totalorder %v2920, 2
    %vm2941 = vcmp.lt.s32.totalorder %v2920, 3
    %vm2942 = vcmp.lt.s32.totalorder %v2920, 4
    %v2943 = vsel %vm2939, %v2923, %v2926
    %v2944 = vsel %vm2942, %v2932, 2102212464
    %v2945 = vsel %vm2941, %v2929, %v2944
    %v2946 = vsel %vm2940, %v2943, %v2945
    %v2947 = vsel %vm2939, %v2926, %v2929
    %v2948 = vsel %vm2942, %v2935, 920167782
    %v2949 = vsel %vm2941, %v2932, %v2948
    %v2950 = vsel %vm2940, %v2947, %v2949
    %v2951 = vsel %vm2939, %v2929, %v2932
    %v2952 = vsel %vm2942, %v2938, 1326507024
    %v2953 = vsel %vm2941, %v2935, %v2952
    %v2954 = vsel %vm2940, %v2951, %v2953
    %v2955 = vshll.u32 %v2915, 8
    %v2956 = vmul.u32.u64.compose %v2955, %v2954
    %v2957 = vextract.low.u32 %v2956
    %v2958 = vextract.high.u32 %v2956
    %v2959 = vmul.u32.u64.compose %v2955, %v2950
    %v2960 = vextract.low.u32 %v2959
    %v2961 = vextract.high.u32 %v2959
    %v2962 = vmul.u32 %v2955, %v2946
    %v2963 = vadd.s32 %v2958, %v2960
    %vm2964 = vc.u32 %v2958, %v2960
    %v2965 = vadd.s32 %v2961, 1
    %v2966 = vsel %vm2964, %v2965, %v2961
    %v2967 = vadd.s32 %v2962, %v2966
    %v2968 = vadd.s32 %v2967, 536870912
    %v2969 = vshrl.u32 %v2968, 30
    %v2970 = vshll.u32 %v2969, 30
    %v2971 = vsub.s32 %v2967, %v2970
    %vm2972 = vcmp.lt.s32.totalorder %v2971, 0
    %v2973 = vsub.s32 0, %v2971
    %v2974 = vsel %vm2972, %v2973, %v2971
    %v2975 = vclz %v2974
    %v2976 = vsub.s32 %v2975, 2
    %vm2977 = vcmp.gt.s32.totalorder 0, %v2976
    %v2978 = vsel %vm2977, 0, %v2976
    %v2979 = vsub.s32 32, %v2978
    %v2980 = vshll.u32 %v2971, %v2978
    %v2981 = vshrl.u32 %v2963, %v2979
    %v2982 = vor.u32 %v2980, %v2981
    %v2983 = vsub.s32 4294967266, %v2978
    %v2984 = vadd.s32 %v2983, 127
    %v2985 = vshll.u32 %v2984, 23
    %v2986 = vor.u32 4788187, %v2985
    %v2987 = vand.u32 2147483647, %v2986
    %v2989 = vcvt.s32.f32 %v2982
    %v2990 = vmul.f32 %v2989, %v2987
    %v2991 = vxor.u32 %v2990, 2147483648
    %v2992 = vsel %vm2909, %v2991, %v2990
    %v2993 = vsub.s32 4, %v2969
    %v2994 = vsel %vm2909, %v2993, %v2969
    %v2995 = vsel %vm2908, %v2803, %v2992
    %v2996 = vsel %vm2908, 0, %v2994
    %v2997 = vcosq.f32.pop %v2995
    %v2998 = vsinq.f32.pop %v2995
    %vm2999 = vweird.f32 %v2803
    %v3000 = vadd.s32 %v2996, 3
    %v3001 = vand.u32 %v3000, 3
    %vm3002 = vcmp.lt.s32.totalorder %v3001, 2
    %vm3003 = vcmp.eq.s32.totalorder %v3001, 0
    %v3004 = vxor.u32 %v2998, 2147483648
    %v3005 = vsel %vm3003, %v2997, %v3004
    %vm3006 = vcmp.eq.s32.totalorder %v3001, 2
    %v3007 = vxor.u32 %v2997, 2147483648
    %v3008 = vsel %vm3006, %v3007, %v2998
    %v3009 = vsel %vm3002, %v3005, %v3008
    %v3010 = vsel %vm2999, nan, %v3009
    %v3011 = vlaneseq
    %v3012 = vshrl.u32 %v3011, 7
    %v3013 = vsub.s32 0, %v3012
    %v3014 = vrot.slane %v3010, %v3013
    %v3015 = vmul.f32 %v3014, %v26
    %v3016 = vmul.f32 %v3014, %v31
    %v3017 = vlaneseq
    %v3018 = vshrl.u32 %v3017, 7
    %v3019 = vsub.s32 0, %v3018
    %v3020 = vrot.slane %v2906, %v3019
    %v3021 = vmul.f32 %v3020, %v57
    %v3022 = vmul.f32 %v3020, %v58
    %v3023 = vadd.f32 %v3015, %v3021
    %v3024 = vadd.f32 %v3016, %v3022
    %v3025 = vlaneseq
    %v3026 = vshrl.u32 %v3025, 7
    %v3027 = vsub.s32 1, %v3026
    %v3028 = vrot.slane %v3010, %v3027
    %v3029 = vmul.f32 %v3028, %v35
    %v3030 = vmul.f32 %v3028, %v39
    %v3031 = vlaneseq
    %v3032 = vshrl.u32 %v3031, 7
    %v3033 = vsub.s32 1, %v3032
    %v3034 = vrot.slane %v2906, %v3033
    %v3035 = vmul.f32 %v3034, %v59
    %v3036 = vmul.f32 %v3034, %v60
    %v3037 = vadd.f32 %v3029, %v3035
    %v3038 = vadd.f32 %v3030, %v3036
    %v3039 = vmul.f32 %v3023, %v3037
    %v3040 = vmul.f32 %v3024, %v3038
    %v3041 = vlaneseq
    %v3042 = vshrl.u32 %v3041, 7
    %v3043 = vsub.s32 2, %v3042
    %v3044 = vrot.slane %v3010, %v3043
    %v3045 = vmul.f32 %v3044, %v43
    %v3046 = vmul.f32 %v3044, %v47
    %v3047 = vlaneseq
    %v3048 = vshrl.u32 %v3047, 7
    %v3049 = vsub.s32 2, %v3048
    %v3050 = vrot.slane %v2906, %v3049
    %v3051 = vmul.f32 %v3050, %v61
    %v3052 = vmul.f32 %v3050, %v62
    %v3053 = vadd.f32 %v3045, %v3051
    %v3054 = vadd.f32 %v3046, %v3052
    %v3055 = vmul.f32 %v3039, %v3053
    %v3056 = vmul.f32 %v3040, %v3054
    %v3057 = vlaneseq
    %v3058 = vshrl.u32 %v3057, 7
    %v3059 = vsub.s32 3, %v3058
    %v3060 = vrot.slane %v3010, %v3059
    %v3061 = vmul.f32 %v3060, %v51
    %v3062 = vmul.f32 %v3060, %v55
    %v3063 = vlaneseq
    %v3064 = vshrl.u32 %v3063, 7
    %v3065 = vsub.s32 3, %v3064
    %v3066 = vrot.slane %v2906, %v3065
    %v3067 = vmul.f32 %v3066, %v63
    %v3068 = vmul.f32 %v3066, %v64
    %v3069 = vadd.f32 %v3061, %v3067
    %v3070 = vadd.f32 %v3062, %v3068
    %v3071 = vmul.f32 %v3055, %v3069
    %v3072 = vmul.f32 %v3056, %v3070
    %3073 = vmatprep.subr.mxu0 0.0
    %3074 = vmatpush1.msra.mxu0 %v3071
    %3075 = vmatprep.subr.mxu0 0.0
    %3076 = vmatpush1.msra.mxu0 %v3072
    %3077 = vmatprep.subr.mxu0 0.0
    %3078 = vmatpush1.msra.mxu0 0.0
    %3079 = vmatprep.subr.mxu0 0.0
    %3080 = vmatpush1.msra.mxu0 0.0
    %3081 = vmatprep.subr.mxu0 0.0
    %3082 = vmatpush1.msra.mxu0 0.0
    %3083 = vmatprep.subr.mxu0 0.0
    %3084 = vmatpush1.msra.mxu0 0.0
    %3085 = vmatprep.subr.mxu0 0.0
    %3086 = vmatpush1.msra.mxu0 0.0
    %3087 = vmatprep.subr.mxu0 0.0
    %3088 = vmatpush1.msra.mxu0 0.0
    %3089 = vmatprep.subr.mxu0 0.0
    %3090 = vmatpush1.msra.mxu0 0.0
    %3091 = vmatprep.subr.mxu0 0.0
    %3092 = vmatpush1.msra.mxu0 0.0
    %3093 = vmatprep.subr.mxu0 0.0
    %3094 = vmatpush1.msra.mxu0 0.0
    %3095 = vmatprep.subr.mxu0 0.0
    %3096 = vmatpush1.msra.mxu0 0.0
    %3097 = vmatprep.subr.mxu0 0.0
    %3098 = vmatpush1.msra.mxu0 0.0
    %3099 = vmatprep.subr.mxu0 0.0
    %3100 = vmatpush1.msra.mxu0 0.0
    %3101 = vmatprep.subr.mxu0 0.0
    %3102 = vmatpush1.msra.mxu0 0.0
    %3103 = vmatprep.subr.mxu0 0.0
    %3104 = vmatpush1.msra.mxu0 0.0
    %3105 = vmatprep.subr.mxu0 0.0
    %3106 = vmatpush1.msra.mxu0 0.0
    %3107 = vmatprep.subr.mxu0 0.0
    %3108 = vmatpush1.msra.mxu0 0.0
    %3109 = vmatprep.subr.mxu0 0.0
    %3110 = vmatpush1.msra.mxu0 0.0
    %3111 = vmatprep.subr.mxu0 0.0
    %3112 = vmatpush1.msra.mxu0 0.0
    %3113 = vmatprep.subr.mxu0 0.0
    %3114 = vmatpush1.msra.mxu0 0.0
    %3115 = vmatprep.subr.mxu0 0.0
    %3116 = vmatpush1.msra.mxu0 0.0
    %3117 = vmatprep.subr.mxu0 0.0
    %3118 = vmatpush1.msra.mxu0 0.0
    %3119 = vmatprep.subr.mxu0 0.0
    %3120 = vmatpush1.msra.mxu0 0.0
    %3121 = vmatprep.subr.mxu0 0.0
    %3122 = vmatpush1.msra.mxu0 0.0
    %3123 = vmatprep.subr.mxu0 0.0
    %3124 = vmatpush1.msra.mxu0 0.0
    %3125 = vmatprep.subr.mxu0 0.0
    %3126 = vmatpush1.msra.mxu0 0.0
    %3127 = vmatprep.subr.mxu0 0.0
    %3128 = vmatpush1.msra.mxu0 0.0
    %3129 = vmatprep.subr.mxu0 0.0
    %3130 = vmatpush1.msra.mxu0 0.0
    %3131 = vmatprep.subr.mxu0 0.0
    %3132 = vmatpush1.msra.mxu0 0.0
    %3133 = vmatprep.subr.mxu0 0.0
    %3134 = vmatpush1.msra.mxu0 0.0
    %3135 = vmatprep.subr.mxu0 0.0
    %3136 = vmatpush1.msra.mxu0 0.0
    %3137 = vmatprep.mubr.f32.mxu0 0.0
    %3138 = vmatmul.mubr.f32.gmra.mrb[0].mxu0 %v949
    %v3139 = vpop.f32.mrb[0].mxu0
    %v3140 = vadd.f32 0.0, %v3139
    %v3141 = vpop.f32.mrb[0].mxu0
    %3142 = vmatprep.mubr.f32.mxu0 0.0
    %3143 = vmatmul.mubr.f32.gmra.mrb[0].mxu0 %v952
    %v3144 = vpop.f32.mrb[0].mxu0
    %v3145 = vadd.f32 0.0, %v3144
    %v3146 = vpop.f32.mrb[0].mxu0
    %3147 = vmatprep.mubr.f32.mxu0 0.0
    %3148 = vmatmul.mubr.f32.gmra.mrb[0].mxu0 %v955
    %v3149 = vpop.f32.mrb[0].mxu0
    %v3150 = vadd.f32 0.0, %v3149
    %v3151 = vpop.f32.mrb[0].mxu0
    %3152 = vmatprep.mubr.f32.mxu0 0.0
    %3153 = vmatmul.mubr.f32.gmra.mrb[0].mxu0 %v958
    %v3154 = vpop.f32.mrb[0].mxu0
    %v3155 = vadd.f32 0.0, %v3154
    %v3156 = vpop.f32.mrb[0].mxu0
    %3157 = vdwg.mxu0
    %v3158 = vmul.f32 %v3140, %v3140
    %v3159 = vmul.f32 %v3145, %v3145
    %v3160 = vmul.f32 %v3150, %v3150
    %v3161 = vmul.f32 %v3155, %v3155
    %3162 = vmatprep.subr.mxu0 0.0
    %3163 = vmatpush1.msra.mxu0 %v3158
    %3164 = vmatprep.subr.mxu0 0.0
    %3165 = vmatpush1.msra.mxu0 %v3159
    %3166 = vmatprep.subr.mxu0 0.0
    %3167 = vmatpush1.msra.mxu0 %v3160
    %3168 = vmatprep.subr.mxu0 0.0
    %3169 = vmatpush1.msra.mxu0 %v3161
    %3170 = vmatprep.subr.mxu0 0.0
    %3171 = vmatpush1.msra.mxu0 0.0
    %3172 = vmatprep.subr.mxu0 0.0
    %3173 = vmatpush1.msra.mxu0 0.0
    %3174 = vmatprep.subr.mxu0 0.0
    %3175 = vmatpush1.msra.mxu0 0.0
    %3176 = vmatprep.subr.mxu0 0.0
    %3177 = vmatpush1.msra.mxu0 0.0
    %3178 = vmatprep.subr.mxu0 0.0
    %3179 = vmatpush1.msra.mxu0 0.0
    %3180 = vmatprep.subr.mxu0 0.0
    %3181 = vmatpush1.msra.mxu0 0.0
    %3182 = vmatprep.subr.mxu0 0.0
    %3183 = vmatpush1.msra.mxu0 0.0
    %3184 = vmatprep.subr.mxu0 0.0
    %3185 = vmatpush1.msra.mxu0 0.0
    %3186 = vmatprep.subr.mxu0 0.0
    %3187 = vmatpush1.msra.mxu0 0.0
    %3188 = vmatprep.subr.mxu0 0.0
    %3189 = vmatpush1.msra.mxu0 0.0
    %3190 = vmatprep.subr.mxu0 0.0
    %3191 = vmatpush1.msra.mxu0 0.0
    %3192 = vmatprep.subr.mxu0 0.0
    %3193 = vmatpush1.msra.mxu0 0.0
    %3194 = vmatprep.subr.mxu0 0.0
    %3195 = vmatpush1.msra.mxu0 0.0
    %3196 = vmatprep.subr.mxu0 0.0
    %3197 = vmatpush1.msra.mxu0 0.0
    %3198 = vmatprep.subr.mxu0 0.0
    %3199 = vmatpush1.msra.mxu0 0.0
    %3200 = vmatprep.subr.mxu0 0.0
    %3201 = vmatpush1.msra.mxu0 0.0
    %3202 = vmatprep.subr.mxu0 0.0
    %3203 = vmatpush1.msra.mxu0 0.0
    %3204 = vmatprep.subr.mxu0 0.0
    %3205 = vmatpush1.msra.mxu0 0.0
    %3206 = vmatprep.subr.mxu0 0.0
    %3207 = vmatpush1.msra.mxu0 0.0
    %3208 = vmatprep.subr.mxu0 0.0
    %3209 = vmatpush1.msra.mxu0 0.0
    %3210 = vmatprep.subr.mxu0 0.0
    %3211 = vmatpush1.msra.mxu0 0.0
    %3212 = vmatprep.subr.mxu0 0.0
    %3213 = vmatpush1.msra.mxu0 0.0
    %3214 = vmatprep.subr.mxu0 0.0
    %3215 = vmatpush1.msra.mxu0 0.0
    %3216 = vmatprep.subr.mxu0 0.0
    %3217 = vmatpush1.msra.mxu0 0.0
    %3218 = vmatprep.subr.mxu0 0.0
    %3219 = vmatpush1.msra.mxu0 0.0
    %3220 = vmatprep.subr.mxu0 0.0
    %3221 = vmatpush1.msra.mxu0 0.0
    %3222 = vmatprep.subr.mxu0 0.0
    %3223 = vmatpush1.msra.mxu0 0.0
    %3224 = vmatprep.subr.mxu0 0.0
    %3225 = vmatpush1.msra.mxu0 0.0
    %3226 = vmatprep.mubr.f32.mxu0 0.0
    %3227 = vmatmul.mubr.f32.gmra.mrb[0].mxu0 %v1051
    %v3228 = vpop.f32.mrb[0].mxu0
    %v3229 = vadd.f32 0.0, %v3228
    %v3230 = vpop.f32.mrb[0].mxu0
    %3231 = vmatprep.mubr.f32.mxu0 0.0
    %3232 = vmatmul.mubr.f32.gmra.mrb[0].mxu0 %v1054
    %v3233 = vpop.f32.mrb[0].mxu0
    %v3234 = vadd.f32 0.0, %v3233
    %v3235 = vpop.f32.mrb[0].mxu0
    %3236 = vmatprep.mubr.f32.mxu0 0.0
    %3237 = vmatmul.mubr.f32.gmra.mrb[0].mxu0 %v1057
    %v3238 = vpop.f32.mrb[0].mxu0
    %v3239 = vadd.f32 0.0, %v3238
    %v3240 = vpop.f32.mrb[0].mxu0
    %3241 = vmatprep.mubr.f32.mxu0 0.0
    %3242 = vmatmul.mubr.f32.gmra.mrb[0].mxu0 %v1060
    %v3243 = vpop.f32.mrb[0].mxu0
    %v3244 = vadd.f32 0.0, %v3243
    %v3245 = vpop.f32.mrb[0].mxu0
    %3246 = vdwg.mxu0
    %v3247 = vxor.u32 %v3229, 2147483648
    %v3248 = vxor.u32 %v3234, 2147483648
    %v3249 = vxor.u32 %v3239, 2147483648
    %v3250 = vxor.u32 %v3244, 2147483648
    %v3251 = vmul.f32 %v3247, 1.442695
    %v3252 = vpow.pop %v3251
    %v3253 = vmul.f32 %v3248, 1.442695
    %v3254 = vpow.pop %v3253
    %v3255 = vmul.f32 %v3249, 1.442695
    %v3256 = vpow.pop %v3255
    %v3257 = vmul.f32 %v3250, 1.442695
    %v3258 = vpow.pop %v3257
    %v3259 = vadd.f32 %v3252, 1.0
    %v3260 = vadd.f32 %v3254, 1.0
    %v3261 = vadd.f32 %v3256, 1.0
    %v3262 = vadd.f32 %v3258, 1.0
    %v3263 = vrcp.pop %v3259
    %v3264 = vmul.f32 1.0, %v3263
    %v3265 = vrcp.pop %v3260
    %v3266 = vmul.f32 1.0, %v3265
    %v3267 = vrcp.pop %v3261
    %v3268 = vmul.f32 1.0, %v3267
    %v3269 = vrcp.pop %v3262
    %v3270 = vmul.f32 1.0, %v3269
    %v3271 = vmul.f32 %v3270, 2.0
    %v3272 = vsub.f32 %v3271, 1.0
    %v3273 = vmul.f32 %v3266, %v2750
    %v3274 = vmul.f32 %v3264, %v3272
    %v3275 = vadd.f32 %v3273, %v3274
    %v3276 = vtanh.pop %v3275
    %v3277 = vmul.f32 %v3268, %v3276
    %v3278 = vld [vmem:[%s579] sm:$0xf]
    %v3279 = vlaneseq
    %v3280 = vshrl.u32 %v3279, 7
    %v3281 = vsub.s32 0, %v3280
    %v3282 = vrot.slane %v3277, %v3281
    %v3283 = vmul.f32 %v81, %v3282
    %v3284 = vlaneseq
    %v3285 = vshrl.u32 %v3284, 7
    %v3286 = vsub.s32 1, %v3285
    %v3287 = vrot.slane %v3277, %v3286
    %v3288 = vmul.f32 %v85, %v3287
    %v3289 = vadd.f32 %v3283, %v3288
    %v3290 = vlaneseq
    %v3291 = vshrl.u32 %v3290, 7
    %v3292 = vsub.s32 2, %v3291
    %v3293 = vrot.slane %v3277, %v3292
    %v3294 = vmul.f32 %v89, %v3293
    %v3295 = vadd.f32 %v3289, %v3294
    %v3296 = vlaneseq
    %v3297 = vshrl.u32 %v3296, 7
    %v3298 = vsub.s32 3, %v3297
    %v3299 = vrot.slane %v3277, %v3298
    %v3300 = vmul.f32 %v93, %v3299
    %v3301 = vadd.f32 %v3295, %v3300
    %v3302 = vlaneseq
    %v3303 = vshrl.u32 %v3302, 7
    %v3304 = vsub.s32 4, %v3303
    %v3305 = vrot.slane %v3277, %v3304
    %v3306 = vmul.f32 %v97, %v3305
    %v3307 = vadd.f32 %v3301, %v3306
    %v3308 = vlaneseq
    %v3309 = vshrl.u32 %v3308, 7
    %v3310 = vsub.s32 5, %v3309
    %v3311 = vrot.slane %v3277, %v3310
    %v3312 = vmul.f32 %v101, %v3311
    %v3313 = vadd.f32 %v3307, %v3312
    %v3314 = vlaneseq
    %v3315 = vshrl.u32 %v3314, 7
    %v3316 = vsub.s32 6, %v3315
    %v3317 = vrot.slane %v3277, %v3316
    %v3318 = vmul.f32 %v105, %v3317
    %v3319 = vadd.f32 %v3313, %v3318
    %v3320 = vlaneseq
    %v3321 = vshrl.u32 %v3320, 7
    %v3322 = vsub.s32 7, %v3321
    %v3323 = vrot.slane %v3277, %v3322
    %v3324 = vmul.f32 %v109, %v3323
    %v3325 = vadd.f32 %v3319, %v3324
    %v3326 = vadd.f32 %v3278, %v3325
    %v3327 = vtanh.pop %v3326
    %v3328 = vmul.f32 %v3327, 1.5707964
    %v3329 = vand.u32 2147483647, %v3328
    %vm3330 = vcmp.le.f32.partialorder %v3329, 0.7853982
    %vm3331 = vcmp.lt.s32.totalorder %v3328, 0
    %v3332 = vand.u32 %v3328, 2139095040
    %v3333 = vshrl.u32 %v3332, 23
    %v3334 = vsub.s32 %v3333, 127
    %v3335 = vand.u32 2147483647, %v3328
    %v3336 = vand.u32 %v3335, 8388607
    %v3337 = vor.u32 %v3336, 8388608
    %v3338 = vsub.s32 0, %v3337
    %v3339 = vadd.s32 %v3334, 1
    %vm3340 = vcmp.gt.s32.totalorder %v3339, 0
    %v3341 = vsel %vm3340, %v3339, 0
    %v3342 = vshrl.u32 %v3341, 5
    %v3343 = vand.u32 %v3341, 31
    %v3344 = vsub.s32 32, %v3343
    %v3345 = vshrl.u32 683565275, %v3344
    %v3346 = vshll.u32 683565275, %v3343
    %v3347 = vshrl.u32 2475754826, %v3344
    %v3348 = vor.u32 %v3346, %v3347
    %v3349 = vshll.u32 2475754826, %v3343
    %v3350 = vshrl.u32 2131351028, %v3344
    %v3351 = vor.u32 %v3349, %v3350
    %v3352 = vshll.u32 2131351028, %v3343
    %v3353 = vshrl.u32 2102212464, %v3344
    %v3354 = vor.u32 %v3352, %v3353
    %v3355 = vshll.u32 2102212464, %v3343
    %v3356 = vshrl.u32 920167782, %v3344
    %v3357 = vor.u32 %v3355, %v3356
    %v3358 = vshll.u32 920167782, %v3343
    %v3359 = vshrl.u32 1326507024, %v3344
    %v3360 = vor.u32 %v3358, %v3359
    %vm3361 = vcmp.lt.s32.totalorder %v3342, 1
    %vm3362 = vcmp.lt.s32.totalorder %v3342, 2
    %vm3363 = vcmp.lt.s32.totalorder %v3342, 3
    %vm3364 = vcmp.lt.s32.totalorder %v3342, 4
    %v3365 = vsel %vm3361, %v3345, %v3348
    %v3366 = vsel %vm3364, %v3354, 2102212464
    %v3367 = vsel %vm3363, %v3351, %v3366
    %v3368 = vsel %vm3362, %v3365, %v3367
    %v3369 = vsel %vm3361, %v3348, %v3351
    %v3370 = vsel %vm3364, %v3357, 920167782
    %v3371 = vsel %vm3363, %v3354, %v3370
    %v3372 = vsel %vm3362, %v3369, %v3371
    %v3373 = vsel %vm3361, %v3351, %v3354
    %v3374 = vsel %vm3364, %v3360, 1326507024
    %v3375 = vsel %vm3363, %v3357, %v3374
    %v3376 = vsel %vm3362, %v3373, %v3375
    %v3377 = vshll.u32 %v3337, 8
    %v3378 = vmul.u32.u64.compose %v3377, %v3376
    %v3379 = vextract.low.u32 %v3378
    %v3380 = vextract.high.u32 %v3378
    %v3381 = vmul.u32.u64.compose %v3377, %v3372
    %v3382 = vextract.low.u32 %v3381
    %v3383 = vextract.high.u32 %v3381
    %v3384 = vmul.u32 %v3377, %v3368
    %v3385 = vadd.s32 %v3380, %v3382
    %vm3386 = vc.u32 %v3380, %v3382
    %v3387 = vadd.s32 %v3383, 1
    %v3388 = vsel %vm3386, %v3387, %v3383
    %v3389 = vadd.s32 %v3384, %v3388
    %v3390 = vadd.s32 %v3389, 536870912
    %v3391 = vshrl.u32 %v3390, 30
    %v3392 = vshll.u32 %v3391, 30
    %v3393 = vsub.s32 %v3389, %v3392
    %vm3394 = vcmp.lt.s32.totalorder %v3393, 0
    %v3395 = vsub.s32 0, %v3393
    %v3396 = vsel %vm3394, %v3395, %v3393
    %v3397 = vclz %v3396
    %v3398 = vsub.s32 %v3397, 2
    %vm3399 = vcmp.gt.s32.totalorder 0, %v3398
    %v3400 = vsel %vm3399, 0, %v3398
    %v3401 = vsub.s32 32, %v3400
    %v3402 = vshll.u32 %v3393, %v3400
    %v3403 = vshrl.u32 %v3385, %v3401
    %v3404 = vor.u32 %v3402, %v3403
    %v3405 = vsub.s32 4294967266, %v3400
    %v3406 = vadd.s32 %v3405, 127
    %v3407 = vshll.u32 %v3406, 23
    %v3408 = vor.u32 4788187, %v3407
    %v3409 = vand.u32 2147483647, %v3408
    %v3411 = vcvt.s32.f32 %v3404
    %v3412 = vmul.f32 %v3411, %v3409
    %v3413 = vxor.u32 %v3412, 2147483648
    %v3414 = vsel %vm3331, %v3413, %v3412
    %v3415 = vsub.s32 4, %v3391
    %v3416 = vsel %vm3331, %v3415, %v3391
    %v3417 = vsel %vm3330, %v3328, %v3414
    %v3418 = vsel %vm3330, 0, %v3416
    %v3419 = vcosq.f32.pop %v3417
    %v3420 = vsinq.f32.pop %v3417
    %vm3421 = vweird.f32 %v3328
    %v3422 = vand.u32 %v3418, 3
    %vm3423 = vcmp.lt.s32.totalorder %v3422, 2
    %vm3424 = vcmp.eq.s32.totalorder %v3422, 0
    %v3425 = vxor.u32 %v3420, 2147483648
    %v3426 = vsel %vm3424, %v3419, %v3425
    %vm3427 = vcmp.eq.s32.totalorder %v3422, 2
    %v3428 = vxor.u32 %v3419, 2147483648
    %v3429 = vsel %vm3427, %v3428, %v3420
    %v3430 = vsel %vm3423, %v3426, %v3429
    %v3431 = vsel %vm3421, nan, %v3430
    %v3432 = vand.u32 2147483647, %v3328
    %vm3433 = vcmp.le.f32.partialorder %v3432, 0.7853982
    %vm3434 = vcmp.lt.s32.totalorder %v3328, 0
    %v3435 = vand.u32 %v3328, 2139095040
    %v3436 = vshrl.u32 %v3435, 23
    %v3437 = vsub.s32 %v3436, 127
    %v3438 = vand.u32 2147483647, %v3328
    %v3439 = vand.u32 %v3438, 8388607
    %v3440 = vor.u32 %v3439, 8388608
    %v3441 = vsub.s32 0, %v3440
    %v3442 = vadd.s32 %v3437, 1
    %vm3443 = vcmp.gt.s32.totalorder %v3442, 0
    %v3444 = vsel %vm3443, %v3442, 0
    %v3445 = vshrl.u32 %v3444, 5
    %v3446 = vand.u32 %v3444, 31
    %v3447 = vsub.s32 32, %v3446
    %v3448 = vshrl.u32 683565275, %v3447
    %v3449 = vshll.u32 683565275, %v3446
    %v3450 = vshrl.u32 2475754826, %v3447
    %v3451 = vor.u32 %v3449, %v3450
    %v3452 = vshll.u32 2475754826, %v3446
    %v3453 = vshrl.u32 2131351028, %v3447
    %v3454 = vor.u32 %v3452, %v3453
    %v3455 = vshll.u32 2131351028, %v3446
    %v3456 = vshrl.u32 2102212464, %v3447
    %v3457 = vor.u32 %v3455, %v3456
    %v3458 = vshll.u32 2102212464, %v3446
    %v3459 = vshrl.u32 920167782, %v3447
    %v3460 = vor.u32 %v3458, %v3459
    %v3461 = vshll.u32 920167782, %v3446
    %v3462 = vshrl.u32 1326507024, %v3447
    %v3463 = vor.u32 %v3461, %v3462
    %vm3464 = vcmp.lt.s32.totalorder %v3445, 1
    %vm3465 = vcmp.lt.s32.totalorder %v3445, 2
    %vm3466 = vcmp.lt.s32.totalorder %v3445, 3
    %vm3467 = vcmp.lt.s32.totalorder %v3445, 4
    %v3468 = vsel %vm3464, %v3448, %v3451
    %v3469 = vsel %vm3467, %v3457, 2102212464
    %v3470 = vsel %vm3466, %v3454, %v3469
    %v3471 = vsel %vm3465, %v3468, %v3470
    %v3472 = vsel %vm3464, %v3451, %v3454
    %v3473 = vsel %vm3467, %v3460, 920167782
    %v3474 = vsel %vm3466, %v3457, %v3473
    %v3475 = vsel %vm3465, %v3472, %v3474
    %v3476 = vsel %vm3464, %v3454, %v3457
    %v3477 = vsel %vm3467, %v3463, 1326507024
    %v3478 = vsel %vm3466, %v3460, %v3477
    %v3479 = vsel %vm3465, %v3476, %v3478
    %v3480 = vshll.u32 %v3440, 8
    %v3481 = vmul.u32.u64.compose %v3480, %v3479
    %v3482 = vextract.low.u32 %v3481
    %v3483 = vextract.high.u32 %v3481
    %v3484 = vmul.u32.u64.compose %v3480, %v3475
    %v3485 = vextract.low.u32 %v3484
    %v3486 = vextract.high.u32 %v3484
    %v3487 = vmul.u32 %v3480, %v3471
    %v3488 = vadd.s32 %v3483, %v3485
    %vm3489 = vc.u32 %v3483, %v3485
    %v3490 = vadd.s32 %v3486, 1
    %v3491 = vsel %vm3489, %v3490, %v3486
    %v3492 = vadd.s32 %v3487, %v3491
    %v3493 = vadd.s32 %v3492, 536870912
    %v3494 = vshrl.u32 %v3493, 30
    %v3495 = vshll.u32 %v3494, 30
    %v3496 = vsub.s32 %v3492, %v3495
    %vm3497 = vcmp.lt.s32.totalorder %v3496, 0
    %v3498 = vsub.s32 0, %v3496
    %v3499 = vsel %vm3497, %v3498, %v3496
    %v3500 = vclz %v3499
    %v3501 = vsub.s32 %v3500, 2
    %vm3502 = vcmp.gt.s32.totalorder 0, %v3501
    %v3503 = vsel %vm3502, 0, %v3501
    %v3504 = vsub.s32 32, %v3503
    %v3505 = vshll.u32 %v3496, %v3503
    %v3506 = vshrl.u32 %v3488, %v3504
    %v3507 = vor.u32 %v3505, %v3506
    %v3508 = vsub.s32 4294967266, %v3503
    %v3509 = vadd.s32 %v3508, 127
    %v3510 = vshll.u32 %v3509, 23
    %v3511 = vor.u32 4788187, %v3510
    %v3512 = vand.u32 2147483647, %v3511
    %v3514 = vcvt.s32.f32 %v3507
    %v3515 = vmul.f32 %v3514, %v3512
    %v3516 = vxor.u32 %v3515, 2147483648
    %v3517 = vsel %vm3434, %v3516, %v3515
    %v3518 = vsub.s32 4, %v3494
    %v3519 = vsel %vm3434, %v3518, %v3494
    %v3520 = vsel %vm3433, %v3328, %v3517
    %v3521 = vsel %vm3433, 0, %v3519
    %v3522 = vcosq.f32.pop %v3520
    %v3523 = vsinq.f32.pop %v3520
    %vm3524 = vweird.f32 %v3328
    %v3525 = vadd.s32 %v3521, 3
    %v3526 = vand.u32 %v3525, 3
    %vm3527 = vcmp.lt.s32.totalorder %v3526, 2
    %vm3528 = vcmp.eq.s32.totalorder %v3526, 0
    %v3529 = vxor.u32 %v3523, 2147483648
    %v3530 = vsel %vm3528, %v3522, %v3529
    %vm3531 = vcmp.eq.s32.totalorder %v3526, 2
    %v3532 = vxor.u32 %v3522, 2147483648
    %v3533 = vsel %vm3531, %v3532, %v3523
    %v3534 = vsel %vm3527, %v3530, %v3533
    %v3535 = vsel %vm3524, nan, %v3534
    %v3536 = vlaneseq
    %v3537 = vshrl.u32 %v3536, 7
    %v3538 = vsub.s32 0, %v3537
    %v3539 = vrot.slane %v3535, %v3538
    %v3540 = vmul.f32 %v3539, %v26
    %v3541 = vmul.f32 %v3539, %v31
    %v3542 = vlaneseq
    %v3543 = vshrl.u32 %v3542, 7
    %v3544 = vsub.s32 0, %v3543
    %v3545 = vrot.slane %v3431, %v3544
    %v3546 = vmul.f32 %v3545, %v57
    %v3547 = vmul.f32 %v3545, %v58
    %v3548 = vadd.f32 %v3540, %v3546
    %v3549 = vadd.f32 %v3541, %v3547
    %v3550 = vlaneseq
    %v3551 = vshrl.u32 %v3550, 7
    %v3552 = vsub.s32 1, %v3551
    %v3553 = vrot.slane %v3535, %v3552
    %v3554 = vmul.f32 %v3553, %v35
    %v3555 = vmul.f32 %v3553, %v39
    %v3556 = vlaneseq
    %v3557 = vshrl.u32 %v3556, 7
    %v3558 = vsub.s32 1, %v3557
    %v3559 = vrot.slane %v3431, %v3558
    %v3560 = vmul.f32 %v3559, %v59
    %v3561 = vmul.f32 %v3559, %v60
    %v3562 = vadd.f32 %v3554, %v3560
    %v3563 = vadd.f32 %v3555, %v3561
    %v3564 = vmul.f32 %v3548, %v3562
    %v3565 = vmul.f32 %v3549, %v3563
    %v3566 = vlaneseq
    %v3567 = vshrl.u32 %v3566, 7
    %v3568 = vsub.s32 2, %v3567
    %v3569 = vrot.slane %v3535, %v3568
    %v3570 = vmul.f32 %v3569, %v43
    %v3571 = vmul.f32 %v3569, %v47
    %v3572 = vlaneseq
    %v3573 = vshrl.u32 %v3572, 7
    %v3574 = vsub.s32 2, %v3573
    %v3575 = vrot.slane %v3431, %v3574
    %v3576 = vmul.f32 %v3575, %v61
    %v3577 = vmul.f32 %v3575, %v62
    %v3578 = vadd.f32 %v3570, %v3576
    %v3579 = vadd.f32 %v3571, %v3577
    %v3580 = vmul.f32 %v3564, %v3578
    %v3581 = vmul.f32 %v3565, %v3579
    %v3582 = vlaneseq
    %v3583 = vshrl.u32 %v3582, 7
    %v3584 = vsub.s32 3, %v3583
    %v3585 = vrot.slane %v3535, %v3584
    %v3586 = vmul.f32 %v3585, %v51
    %v3587 = vmul.f32 %v3585, %v55
    %v3588 = vlaneseq
    %v3589 = vshrl.u32 %v3588, 7
    %v3590 = vsub.s32 3, %v3589
    %v3591 = vrot.slane %v3431, %v3590
    %v3592 = vmul.f32 %v3591, %v63
    %v3593 = vmul.f32 %v3591, %v64
    %v3594 = vadd.f32 %v3586, %v3592
    %v3595 = vadd.f32 %v3587, %v3593
    %v3596 = vmul.f32 %v3580, %v3594
    %v3597 = vmul.f32 %v3581, %v3595
    %3598 = vmatprep.subr.mxu0 0.0
    %3599 = vmatpush1.msra.mxu0 %v3596
    %3600 = vmatprep.subr.mxu0 0.0
    %3601 = vmatpush1.msra.mxu0 %v3597
    %3602 = vmatprep.subr.mxu0 0.0
    %3603 = vmatpush1.msra.mxu0 0.0
    %3604 = vmatprep.subr.mxu0 0.0
    %3605 = vmatpush1.msra.mxu0 0.0
    %3606 = vmatprep.subr.mxu0 0.0
    %3607 = vmatpush1.msra.mxu0 0.0
    %3608 = vmatprep.subr.mxu0 0.0
    %3609 = vmatpush1.msra.mxu0 0.0
    %3610 = vmatprep.subr.mxu0 0.0
    %3611 = vmatpush1.msra.mxu0 0.0
    %3612 = vmatprep.subr.mxu0 0.0
    %3613 = vmatpush1.msra.mxu0 0.0
    %3614 = vmatprep.subr.mxu0 0.0
    %3615 = vmatpush1.msra.mxu0 0.0
    %3616 = vmatprep.subr.mxu0 0.0
    %3617 = vmatpush1.msra.mxu0 0.0
    %3618 = vmatprep.subr.mxu0 0.0
    %3619 = vmatpush1.msra.mxu0 0.0
    %3620 = vmatprep.subr.mxu0 0.0
    %3621 = vmatpush1.msra.mxu0 0.0
    %3622 = vmatprep.subr.mxu0 0.0
    %3623 = vmatpush1.msra.mxu0 0.0
    %3624 = vmatprep.subr.mxu0 0.0
    %3625 = vmatpush1.msra.mxu0 0.0
    %3626 = vmatprep.subr.mxu0 0.0
    %3627 = vmatpush1.msra.mxu0 0.0
    %3628 = vmatprep.subr.mxu0 0.0
    %3629 = vmatpush1.msra.mxu0 0.0
    %3630 = vmatprep.subr.mxu0 0.0
    %3631 = vmatpush1.msra.mxu0 0.0
    %3632 = vmatprep.subr.mxu0 0.0
    %3633 = vmatpush1.msra.mxu0 0.0
    %3634 = vmatprep.subr.mxu0 0.0
    %3635 = vmatpush1.msra.mxu0 0.0
    %3636 = vmatprep.subr.mxu0 0.0
    %3637 = vmatpush1.msra.mxu0 0.0
    %3638 = vmatprep.subr.mxu0 0.0
    %3639 = vmatpush1.msra.mxu0 0.0
    %3640 = vmatprep.subr.mxu0 0.0
    %3641 = vmatpush1.msra.mxu0 0.0
    %3642 = vmatprep.subr.mxu0 0.0
    %3643 = vmatpush1.msra.mxu0 0.0
    %3644 = vmatprep.subr.mxu0 0.0
    %3645 = vmatpush1.msra.mxu0 0.0
    %3646 = vmatprep.subr.mxu0 0.0
    %3647 = vmatpush1.msra.mxu0 0.0
    %3648 = vmatprep.subr.mxu0 0.0
    %3649 = vmatpush1.msra.mxu0 0.0
    %3650 = vmatprep.subr.mxu0 0.0
    %3651 = vmatpush1.msra.mxu0 0.0
    %3652 = vmatprep.subr.mxu0 0.0
    %3653 = vmatpush1.msra.mxu0 0.0
    %3654 = vmatprep.subr.mxu0 0.0
    %3655 = vmatpush1.msra.mxu0 0.0
    %3656 = vmatprep.subr.mxu0 0.0
    %3657 = vmatpush1.msra.mxu0 0.0
    %3658 = vmatprep.subr.mxu0 0.0
    %3659 = vmatpush1.msra.mxu0 0.0
    %3660 = vmatprep.subr.mxu0 0.0
    %3661 = vmatpush1.msra.mxu0 0.0
    %3662 = vmatprep.mubr.f32.mxu0 0.0
    %3663 = vmatmul.mubr.f32.gmra.mrb[0].mxu0 %v949
    %v3664 = vpop.f32.mrb[0].mxu0
    %v3665 = vadd.f32 0.0, %v3664
    %v3666 = vpop.f32.mrb[0].mxu0
    %3667 = vmatprep.mubr.f32.mxu0 0.0
    %3668 = vmatmul.mubr.f32.gmra.mrb[0].mxu0 %v952
    %v3669 = vpop.f32.mrb[0].mxu0
    %v3670 = vadd.f32 0.0, %v3669
    %v3671 = vpop.f32.mrb[0].mxu0
    %3672 = vmatprep.mubr.f32.mxu0 0.0
    %3673 = vmatmul.mubr.f32.gmra.mrb[0].mxu0 %v955
    %v3674 = vpop.f32.mrb[0].mxu0
    %v3675 = vadd.f32 0.0, %v3674
    %v3676 = vpop.f32.mrb[0].mxu0
    %3677 = vmatprep.mubr.f32.mxu0 0.0
    %3678 = vmatmul.mubr.f32.gmra.mrb[0].mxu0 %v958
    %v3679 = vpop.f32.mrb[0].mxu0
    %v3680 = vadd.f32 0.0, %v3679
    %v3681 = vpop.f32.mrb[0].mxu0
    %3682 = vdwg.mxu0
    %v3683 = vmul.f32 %v3665, %v3665
    %v3684 = vmul.f32 %v3670, %v3670
    %v3685 = vmul.f32 %v3675, %v3675
    %v3686 = vmul.f32 %v3680, %v3680
    %3687 = vmatprep.subr.mxu0 0.0
    %3688 = vmatpush1.msra.mxu0 %v3683
    %3689 = vmatprep.subr.mxu0 0.0
    %3690 = vmatpush1.msra.mxu0 %v3684
    %3691 = vmatprep.subr.mxu0 0.0
    %3692 = vmatpush1.msra.mxu0 %v3685
    %3693 = vmatprep.subr.mxu0 0.0
    %3694 = vmatpush1.msra.mxu0 %v3686
    %3695 = vmatprep.subr.mxu0 0.0
    %3696 = vmatpush1.msra.mxu0 0.0
    %3697 = vmatprep.subr.mxu0 0.0
    %3698 = vmatpush1.msra.mxu0 0.0
    %3699 = vmatprep.subr.mxu0 0.0
    %3700 = vmatpush1.msra.mxu0 0.0
    %3701 = vmatprep.subr.mxu0 0.0
    %3702 = vmatpush1.msra.mxu0 0.0
    %3703 = vmatprep.subr.mxu0 0.0
    %3704 = vmatpush1.msra.mxu0 0.0
    %3705 = vmatprep.subr.mxu0 0.0
    %3706 = vmatpush1.msra.mxu0 0.0
    %3707 = vmatprep.subr.mxu0 0.0
    %3708 = vmatpush1.msra.mxu0 0.0
    %3709 = vmatprep.subr.mxu0 0.0
    %3710 = vmatpush1.msra.mxu0 0.0
    %3711 = vmatprep.subr.mxu0 0.0
    %3712 = vmatpush1.msra.mxu0 0.0
    %3713 = vmatprep.subr.mxu0 0.0
    %3714 = vmatpush1.msra.mxu0 0.0
    %3715 = vmatprep.subr.mxu0 0.0
    %3716 = vmatpush1.msra.mxu0 0.0
    %3717 = vmatprep.subr.mxu0 0.0
    %3718 = vmatpush1.msra.mxu0 0.0
    %3719 = vmatprep.subr.mxu0 0.0
    %3720 = vmatpush1.msra.mxu0 0.0
    %3721 = vmatprep.subr.mxu0 0.0
    %3722 = vmatpush1.msra.mxu0 0.0
    %3723 = vmatprep.subr.mxu0 0.0
    %3724 = vmatpush1.msra.mxu0 0.0
    %3725 = vmatprep.subr.mxu0 0.0
    %3726 = vmatpush1.msra.mxu0 0.0
    %3727 = vmatprep.subr.mxu0 0.0
    %3728 = vmatpush1.msra.mxu0 0.0
    %3729 = vmatprep.subr.mxu0 0.0
    %3730 = vmatpush1.msra.mxu0 0.0
    %3731 = vmatprep.subr.mxu0 0.0
    %3732 = vmatpush1.msra.mxu0 0.0
    %3733 = vmatprep.subr.mxu0 0.0
    %3734 = vmatpush1.msra.mxu0 0.0
    %3735 = vmatprep.subr.mxu0 0.0
    %3736 = vmatpush1.msra.mxu0 0.0
    %3737 = vmatprep.subr.mxu0 0.0
    %3738 = vmatpush1.msra.mxu0 0.0
    %3739 = vmatprep.subr.mxu0 0.0
    %3740 = vmatpush1.msra.mxu0 0.0
    %3741 = vmatprep.subr.mxu0 0.0
    %3742 = vmatpush1.msra.mxu0 0.0
    %3743 = vmatprep.subr.mxu0 0.0
    %3744 = vmatpush1.msra.mxu0 0.0
    %3745 = vmatprep.subr.mxu0 0.0
    %3746 = vmatpush1.msra.mxu0 0.0
    %3747 = vmatprep.subr.mxu0 0.0
    %3748 = vmatpush1.msra.mxu0 0.0
    %3749 = vmatprep.subr.mxu0 0.0
    %3750 = vmatpush1.msra.mxu0 0.0
    %3751 = vmatprep.mubr.f32.mxu0 0.0
    %3752 = vmatmul.mubr.f32.gmra.mrb[0].mxu0 %v1051
    %v3753 = vpop.f32.mrb[0].mxu0
    %v3754 = vadd.f32 0.0, %v3753
    %v3755 = vpop.f32.mrb[0].mxu0
    %3756 = vmatprep.mubr.f32.mxu0 0.0
    %3757 = vmatmul.mubr.f32.gmra.mrb[0].mxu0 %v1054
    %v3758 = vpop.f32.mrb[0].mxu0
    %v3759 = vadd.f32 0.0, %v3758
    %v3760 = vpop.f32.mrb[0].mxu0
    %3761 = vmatprep.mubr.f32.mxu0 0.0
    %3762 = vmatmul.mubr.f32.gmra.mrb[0].mxu0 %v1057
    %v3763 = vpop.f32.mrb[0].mxu0
    %v3764 = vadd.f32 0.0, %v3763
    %v3765 = vpop.f32.mrb[0].mxu0
    %3766 = vmatprep.mubr.f32.mxu0 0.0
    %3767 = vmatmul.mubr.f32.gmra.mrb[0].mxu0 %v1060
    %v3768 = vpop.f32.mrb[0].mxu0
    %v3769 = vadd.f32 0.0, %v3768
    %v3770 = vpop.f32.mrb[0].mxu0
    %3771 = vdwg.mxu0
    %v3772 = vxor.u32 %v3754, 2147483648
    %v3773 = vxor.u32 %v3759, 2147483648
    %v3774 = vxor.u32 %v3764, 2147483648
    %v3775 = vxor.u32 %v3769, 2147483648
    %v3776 = vmul.f32 %v3772, 1.442695
    %v3777 = vpow.pop %v3776
    %v3778 = vmul.f32 %v3773, 1.442695
    %v3779 = vpow.pop %v3778
    %v3780 = vmul.f32 %v3774, 1.442695
    %v3781 = vpow.pop %v3780
    %v3782 = vmul.f32 %v3775, 1.442695
    %v3783 = vpow.pop %v3782
    %v3784 = vadd.f32 %v3777, 1.0
    %v3785 = vadd.f32 %v3779, 1.0
    %v3786 = vadd.f32 %v3781, 1.0
    %v3787 = vadd.f32 %v3783, 1.0
    %v3788 = vrcp.pop %v3784
    %v3789 = vmul.f32 1.0, %v3788
    %v3790 = vrcp.pop %v3785
    %v3791 = vmul.f32 1.0, %v3790
    %v3792 = vrcp.pop %v3786
    %v3793 = vmul.f32 1.0, %v3792
    %v3794 = vrcp.pop %v3787
    %v3795 = vmul.f32 1.0, %v3794
    %v3796 = vmul.f32 %v3795, 2.0
    %v3797 = vsub.f32 %v3796, 1.0
    %v3798 = vmul.f32 %v3791, %v3275
    %v3799 = vmul.f32 %v3789, %v3797
    %v3800 = vadd.f32 %v3798, %v3799
    %v3801 = vtanh.pop %v3800
    %v3802 = vmul.f32 %v3793, %v3801
    %v3803 = vld [vmem:[%s657] sm:$0xf]
    %v3804 = vlaneseq
    %v3805 = vshrl.u32 %v3804, 7
    %v3806 = vsub.s32 0, %v3805
    %v3807 = vrot.slane %v3802, %v3806
    %v3808 = vmul.f32 %v81, %v3807
    %v3809 = vlaneseq
    %v3810 = vshrl.u32 %v3809, 7
    %v3811 = vsub.s32 1, %v3810
    %v3812 = vrot.slane %v3802, %v3811
    %v3813 = vmul.f32 %v85, %v3812
    %v3814 = vadd.f32 %v3808, %v3813
    %v3815 = vlaneseq
    %v3816 = vshrl.u32 %v3815, 7
    %v3817 = vsub.s32 2, %v3816
    %v3818 = vrot.slane %v3802, %v3817
    %v3819 = vmul.f32 %v89, %v3818
    %v3820 = vadd.f32 %v3814, %v3819
    %v3821 = vlaneseq
    %v3822 = vshrl.u32 %v3821, 7
    %v3823 = vsub.s32 3, %v3822
    %v3824 = vrot.slane %v3802, %v3823
    %v3825 = vmul.f32 %v93, %v3824
    %v3826 = vadd.f32 %v3820, %v3825
    %v3827 = vlaneseq
    %v3828 = vshrl.u32 %v3827, 7
    %v3829 = vsub.s32 4, %v3828
    %v3830 = vrot.slane %v3802, %v3829
    %v3831 = vmul.f32 %v97, %v3830
    %v3832 = vadd.f32 %v3826, %v3831
    %v3833 = vlaneseq
    %v3834 = vshrl.u32 %v3833, 7
    %v3835 = vsub.s32 5, %v3834
    %v3836 = vrot.slane %v3802, %v3835
    %v3837 = vmul.f32 %v101, %v3836
    %v3838 = vadd.f32 %v3832, %v3837
    %v3839 = vlaneseq
    %v3840 = vshrl.u32 %v3839, 7
    %v3841 = vsub.s32 6, %v3840
    %v3842 = vrot.slane %v3802, %v3841
    %v3843 = vmul.f32 %v105, %v3842
    %v3844 = vadd.f32 %v3838, %v3843
    %v3845 = vlaneseq
    %v3846 = vshrl.u32 %v3845, 7
    %v3847 = vsub.s32 7, %v3846
    %v3848 = vrot.slane %v3802, %v3847
    %v3849 = vmul.f32 %v109, %v3848
    %v3850 = vadd.f32 %v3844, %v3849
    %v3851 = vadd.f32 %v3803, %v3850
    %v3852 = vtanh.pop %v3851
    %v3853 = vmul.f32 %v3852, 1.5707964
    %v3854 = vand.u32 2147483647, %v3853
    %vm3855 = vcmp.le.f32.partialorder %v3854, 0.7853982
    %vm3856 = vcmp.lt.s32.totalorder %v3853, 0
    %v3857 = vand.u32 %v3853, 2139095040
    %v3858 = vshrl.u32 %v3857, 23
    %v3859 = vsub.s32 %v3858, 127
    %v3860 = vand.u32 2147483647, %v3853
    %v3861 = vand.u32 %v3860, 8388607
    %v3862 = vor.u32 %v3861, 8388608
    %v3863 = vsub.s32 0, %v3862
    %v3864 = vadd.s32 %v3859, 1
    %vm3865 = vcmp.gt.s32.totalorder %v3864, 0
    %v3866 = vsel %vm3865, %v3864, 0
    %v3867 = vshrl.u32 %v3866, 5
    %v3868 = vand.u32 %v3866, 31
    %v3869 = vsub.s32 32, %v3868
    %v3870 = vshrl.u32 683565275, %v3869
    %v3871 = vshll.u32 683565275, %v3868
    %v3872 = vshrl.u32 2475754826, %v3869
    %v3873 = vor.u32 %v3871, %v3872
    %v3874 = vshll.u32 2475754826, %v3868
    %v3875 = vshrl.u32 2131351028, %v3869
    %v3876 = vor.u32 %v3874, %v3875
    %v3877 = vshll.u32 2131351028, %v3868
    %v3878 = vshrl.u32 2102212464, %v3869
    %v3879 = vor.u32 %v3877, %v3878
    %v3880 = vshll.u32 2102212464, %v3868
    %v3881 = vshrl.u32 920167782, %v3869
    %v3882 = vor.u32 %v3880, %v3881
    %v3883 = vshll.u32 920167782, %v3868
    %v3884 = vshrl.u32 1326507024, %v3869
    %v3885 = vor.u32 %v3883, %v3884
    %vm3886 = vcmp.lt.s32.totalorder %v3867, 1
    %vm3887 = vcmp.lt.s32.totalorder %v3867, 2
    %vm3888 = vcmp.lt.s32.totalorder %v3867, 3
    %vm3889 = vcmp.lt.s32.totalorder %v3867, 4
    %v3890 = vsel %vm3886, %v3870, %v3873
    %v3891 = vsel %vm3889, %v3879, 2102212464
    %v3892 = vsel %vm3888, %v3876, %v3891
    %v3893 = vsel %vm3887, %v3890, %v3892
    %v3894 = vsel %vm3886, %v3873, %v3876
    %v3895 = vsel %vm3889, %v3882, 920167782
    %v3896 = vsel %vm3888, %v3879, %v3895
    %v3897 = vsel %vm3887, %v3894, %v3896
    %v3898 = vsel %vm3886, %v3876, %v3879
    %v3899 = vsel %vm3889, %v3885, 1326507024
    %v3900 = vsel %vm3888, %v3882, %v3899
    %v3901 = vsel %vm3887, %v3898, %v3900
    %v3902 = vshll.u32 %v3862, 8
    %v3903 = vmul.u32.u64.compose %v3902, %v3901
    %v3904 = vextract.low.u32 %v3903
    %v3905 = vextract.high.u32 %v3903
    %v3906 = vmul.u32.u64.compose %v3902, %v3897
    %v3907 = vextract.low.u32 %v3906
    %v3908 = vextract.high.u32 %v3906
    %v3909 = vmul.u32 %v3902, %v3893
    %v3910 = vadd.s32 %v3905, %v3907
    %vm3911 = vc.u32 %v3905, %v3907
    %v3912 = vadd.s32 %v3908, 1
    %v3913 = vsel %vm3911, %v3912, %v3908
    %v3914 = vadd.s32 %v3909, %v3913
    %v3915 = vadd.s32 %v3914, 536870912
    %v3916 = vshrl.u32 %v3915, 30
    %v3917 = vshll.u32 %v3916, 30
    %v3918 = vsub.s32 %v3914, %v3917
    %vm3919 = vcmp.lt.s32.totalorder %v3918, 0
    %v3920 = vsub.s32 0, %v3918
    %v3921 = vsel %vm3919, %v3920, %v3918
    %v3922 = vclz %v3921
    %v3923 = vsub.s32 %v3922, 2
    %vm3924 = vcmp.gt.s32.totalorder 0, %v3923
    %v3925 = vsel %vm3924, 0, %v3923
    %v3926 = vsub.s32 32, %v3925
    %v3927 = vshll.u32 %v3918, %v3925
    %v3928 = vshrl.u32 %v3910, %v3926
    %v3929 = vor.u32 %v3927, %v3928
    %v3930 = vsub.s32 4294967266, %v3925
    %v3931 = vadd.s32 %v3930, 127
    %v3932 = vshll.u32 %v3931, 23
    %v3933 = vor.u32 4788187, %v3932
    %v3934 = vand.u32 2147483647, %v3933
    %v3936 = vcvt.s32.f32 %v3929
    %v3937 = vmul.f32 %v3936, %v3934
    %v3938 = vxor.u32 %v3937, 2147483648
    %v3939 = vsel %vm3856, %v3938, %v3937
    %v3940 = vsub.s32 4, %v3916
    %v3941 = vsel %vm3856, %v3940, %v3916
    %v3942 = vsel %vm3855, %v3853, %v3939
    %v3943 = vsel %vm3855, 0, %v3941
    %v3944 = vcosq.f32.pop %v3942
    %v3945 = vsinq.f32.pop %v3942
    %vm3946 = vweird.f32 %v3853
    %v3947 = vand.u32 %v3943, 3
    %vm3948 = vcmp.lt.s32.totalorder %v3947, 2
    %vm3949 = vcmp.eq.s32.totalorder %v3947, 0
    %v3950 = vxor.u32 %v3945, 2147483648
    %v3951 = vsel %vm3949, %v3944, %v3950
    %vm3952 = vcmp.eq.s32.totalorder %v3947, 2
    %v3953 = vxor.u32 %v3944, 2147483648
    %v3954 = vsel %vm3952, %v3953, %v3945
    %v3955 = vsel %vm3948, %v3951, %v3954
    %v3956 = vsel %vm3946, nan, %v3955
    %v3957 = vand.u32 2147483647, %v3853
    %vm3958 = vcmp.le.f32.partialorder %v3957, 0.7853982
    %vm3959 = vcmp.lt.s32.totalorder %v3853, 0
    %v3960 = vand.u32 %v3853, 2139095040
    %v3961 = vshrl.u32 %v3960, 23
    %v3962 = vsub.s32 %v3961, 127
    %v3963 = vand.u32 2147483647, %v3853
    %v3964 = vand.u32 %v3963, 8388607
    %v3965 = vor.u32 %v3964, 8388608
    %v3966 = vsub.s32 0, %v3965
    %v3967 = vadd.s32 %v3962, 1
    %vm3968 = vcmp.gt.s32.totalorder %v3967, 0
    %v3969 = vsel %vm3968, %v3967, 0
    %v3970 = vshrl.u32 %v3969, 5
    %v3971 = vand.u32 %v3969, 31
    %v3972 = vsub.s32 32, %v3971
    %v3973 = vshrl.u32 683565275, %v3972
    %v3974 = vshll.u32 683565275, %v3971
    %v3975 = vshrl.u32 2475754826, %v3972
    %v3976 = vor.u32 %v3974, %v3975
    %v3977 = vshll.u32 2475754826, %v3971
    %v3978 = vshrl.u32 2131351028, %v3972
    %v3979 = vor.u32 %v3977, %v3978
    %v3980 = vshll.u32 2131351028, %v3971
    %v3981 = vshrl.u32 2102212464, %v3972
    %v3982 = vor.u32 %v3980, %v3981
    %v3983 = vshll.u32 2102212464, %v3971
    %v3984 = vshrl.u32 920167782, %v3972
    %v3985 = vor.u32 %v3983, %v3984
    %v3986 = vshll.u32 920167782, %v3971
    %v3987 = vshrl.u32 1326507024, %v3972
    %v3988 = vor.u32 %v3986, %v3987
    %vm3989 = vcmp.lt.s32.totalorder %v3970, 1
    %vm3990 = vcmp.lt.s32.totalorder %v3970, 2
    %vm3991 = vcmp.lt.s32.totalorder %v3970, 3
    %vm3992 = vcmp.lt.s32.totalorder %v3970, 4
    %v3993 = vsel %vm3989, %v3973, %v3976
    %v3994 = vsel %vm3992, %v3982, 2102212464
    %v3995 = vsel %vm3991, %v3979, %v3994
    %v3996 = vsel %vm3990, %v3993, %v3995
    %v3997 = vsel %vm3989, %v3976, %v3979
    %v3998 = vsel %vm3992, %v3985, 920167782
    %v3999 = vsel %vm3991, %v3982, %v3998
    %v4000 = vsel %vm3990, %v3997, %v3999
    %v4001 = vsel %vm3989, %v3979, %v3982
    %v4002 = vsel %vm3992, %v3988, 1326507024
    %v4003 = vsel %vm3991, %v3985, %v4002
    %v4004 = vsel %vm3990, %v4001, %v4003
    %v4005 = vshll.u32 %v3965, 8
    %v4006 = vmul.u32.u64.compose %v4005, %v4004
    %v4007 = vextract.low.u32 %v4006
    %v4008 = vextract.high.u32 %v4006
    %v4009 = vmul.u32.u64.compose %v4005, %v4000
    %v4010 = vextract.low.u32 %v4009
    %v4011 = vextract.high.u32 %v4009
    %v4012 = vmul.u32 %v4005, %v3996
    %v4013 = vadd.s32 %v4008, %v4010
    %vm4014 = vc.u32 %v4008, %v4010
    %v4015 = vadd.s32 %v4011, 1
    %v4016 = vsel %vm4014, %v4015, %v4011
    %v4017 = vadd.s32 %v4012, %v4016
    %v4018 = vadd.s32 %v4017, 536870912
    %v4019 = vshrl.u32 %v4018, 30
    %v4020 = vshll.u32 %v4019, 30
    %v4021 = vsub.s32 %v4017, %v4020
    %vm4022 = vcmp.lt.s32.totalorder %v4021, 0
    %v4023 = vsub.s32 0, %v4021
    %v4024 = vsel %vm4022, %v4023, %v4021
    %v4025 = vclz %v4024
    %v4026 = vsub.s32 %v4025, 2
    %vm4027 = vcmp.gt.s32.totalorder 0, %v4026
    %v4028 = vsel %vm4027, 0, %v4026
    %v4029 = vsub.s32 32, %v4028
    %v4030 = vshll.u32 %v4021, %v4028
    %v4031 = vshrl.u32 %v4013, %v4029
    %v4032 = vor.u32 %v4030, %v4031
    %v4033 = vsub.s32 4294967266, %v4028
    %v4034 = vadd.s32 %v4033, 127
    %v4035 = vshll.u32 %v4034, 23
    %v4036 = vor.u32 4788187, %v4035
    %v4037 = vand.u32 2147483647, %v4036
    %v4039 = vcvt.s32.f32 %v4032
    %v4040 = vmul.f32 %v4039, %v4037
    %v4041 = vxor.u32 %v4040, 2147483648
    %v4042 = vsel %vm3959, %v4041, %v4040
    %v4043 = vsub.s32 4, %v4019
    %v4044 = vsel %vm3959, %v4043, %v4019
    %v4045 = vsel %vm3958, %v3853, %v4042
    %v4046 = vsel %vm3958, 0, %v4044
    %v4047 = vcosq.f32.pop %v4045
    %v4048 = vsinq.f32.pop %v4045
    %vm4049 = vweird.f32 %v3853
    %v4050 = vadd.s32 %v4046, 3
    %v4051 = vand.u32 %v4050, 3
    %vm4052 = vcmp.lt.s32.totalorder %v4051, 2
    %vm4053 = vcmp.eq.s32.totalorder %v4051, 0
    %v4054 = vxor.u32 %v4048, 2147483648
    %v4055 = vsel %vm4053, %v4047, %v4054
    %vm4056 = vcmp.eq.s32.totalorder %v4051, 2
    %v4057 = vxor.u32 %v4047, 2147483648
    %v4058 = vsel %vm4056, %v4057, %v4048
    %v4059 = vsel %vm4052, %v4055, %v4058
    %v4060 = vsel %vm4049, nan, %v4059
    %v4061 = vlaneseq
    %v4062 = vshrl.u32 %v4061, 7
    %v4063 = vsub.s32 0, %v4062
    %v4064 = vrot.slane %v4060, %v4063
    %v4065 = vmul.f32 %v4064, %v26
    %v4066 = vmul.f32 %v4064, %v31
    %v4067 = vlaneseq
    %v4068 = vshrl.u32 %v4067, 7
    %v4069 = vsub.s32 0, %v4068
    %v4070 = vrot.slane %v3956, %v4069
    %v4071 = vmul.f32 %v4070, %v57
    %v4072 = vmul.f32 %v4070, %v58
    %v4073 = vadd.f32 %v4065, %v4071
    %v4074 = vadd.f32 %v4066, %v4072
    %v4075 = vlaneseq
    %v4076 = vshrl.u32 %v4075, 7
    %v4077 = vsub.s32 1, %v4076
    %v4078 = vrot.slane %v4060, %v4077
    %v4079 = vmul.f32 %v4078, %v35
    %v4080 = vmul.f32 %v4078, %v39
    %v4081 = vlaneseq
    %v4082 = vshrl.u32 %v4081, 7
    %v4083 = vsub.s32 1, %v4082
    %v4084 = vrot.slane %v3956, %v4083
    %v4085 = vmul.f32 %v4084, %v59
    %v4086 = vmul.f32 %v4084, %v60
    %v4087 = vadd.f32 %v4079, %v4085
    %v4088 = vadd.f32 %v4080, %v4086
    %v4089 = vmul.f32 %v4073, %v4087
    %v4090 = vmul.f32 %v4074, %v4088
    %v4091 = vlaneseq
    %v4092 = vshrl.u32 %v4091, 7
    %v4093 = vsub.s32 2, %v4092
    %v4094 = vrot.slane %v4060, %v4093
    %v4095 = vmul.f32 %v4094, %v43
    %v4096 = vmul.f32 %v4094, %v47
    %v4097 = vlaneseq
    %v4098 = vshrl.u32 %v4097, 7
    %v4099 = vsub.s32 2, %v4098
    %v4100 = vrot.slane %v3956, %v4099
    %v4101 = vmul.f32 %v4100, %v61
    %v4102 = vmul.f32 %v4100, %v62
    %v4103 = vadd.f32 %v4095, %v4101
    %v4104 = vadd.f32 %v4096, %v4102
    %v4105 = vmul.f32 %v4089, %v4103
    %v4106 = vmul.f32 %v4090, %v4104
    %v4107 = vlaneseq
    %v4108 = vshrl.u32 %v4107, 7
    %v4109 = vsub.s32 3, %v4108
    %v4110 = vrot.slane %v4060, %v4109
    %v4111 = vmul.f32 %v4110, %v51
    %v4112 = vmul.f32 %v4110, %v55
    %v4113 = vlaneseq
    %v4114 = vshrl.u32 %v4113, 7
    %v4115 = vsub.s32 3, %v4114
    %v4116 = vrot.slane %v3956, %v4115
    %v4117 = vmul.f32 %v4116, %v63
    %v4118 = vmul.f32 %v4116, %v64
    %v4119 = vadd.f32 %v4111, %v4117
    %v4120 = vadd.f32 %v4112, %v4118
    %v4121 = vmul.f32 %v4105, %v4119
    %v4122 = vmul.f32 %v4106, %v4120
    %4123 = vmatprep.subr.mxu0 0.0
    %4124 = vmatpush1.msra.mxu0 %v4121
    %4125 = vmatprep.subr.mxu0 0.0
    %4126 = vmatpush1.msra.mxu0 %v4122
    %4127 = vmatprep.subr.mxu0 0.0
    %4128 = vmatpush1.msra.mxu0 0.0
    %4129 = vmatprep.subr.mxu0 0.0
    %4130 = vmatpush1.msra.mxu0 0.0
    %4131 = vmatprep.subr.mxu0 0.0
    %4132 = vmatpush1.msra.mxu0 0.0
    %4133 = vmatprep.subr.mxu0 0.0
    %4134 = vmatpush1.msra.mxu0 0.0
    %4135 = vmatprep.subr.mxu0 0.0
    %4136 = vmatpush1.msra.mxu0 0.0
    %4137 = vmatprep.subr.mxu0 0.0
    %4138 = vmatpush1.msra.mxu0 0.0
    %4139 = vmatprep.subr.mxu0 0.0
    %4140 = vmatpush1.msra.mxu0 0.0
    %4141 = vmatprep.subr.mxu0 0.0
    %4142 = vmatpush1.msra.mxu0 0.0
    %4143 = vmatprep.subr.mxu0 0.0
    %4144 = vmatpush1.msra.mxu0 0.0
    %4145 = vmatprep.subr.mxu0 0.0
    %4146 = vmatpush1.msra.mxu0 0.0
    %4147 = vmatprep.subr.mxu0 0.0
    %4148 = vmatpush1.msra.mxu0 0.0
    %4149 = vmatprep.subr.mxu0 0.0
    %4150 = vmatpush1.msra.mxu0 0.0
    %4151 = vmatprep.subr.mxu0 0.0
    %4152 = vmatpush1.msra.mxu0 0.0
    %4153 = vmatprep.subr.mxu0 0.0
    %4154 = vmatpush1.msra.mxu0 0.0
    %4155 = vmatprep.subr.mxu0 0.0
    %4156 = vmatpush1.msra.mxu0 0.0
    %4157 = vmatprep.subr.mxu0 0.0
    %4158 = vmatpush1.msra.mxu0 0.0
    %4159 = vmatprep.subr.mxu0 0.0
    %4160 = vmatpush1.msra.mxu0 0.0
    %4161 = vmatprep.subr.mxu0 0.0
    %4162 = vmatpush1.msra.mxu0 0.0
    %4163 = vmatprep.subr.mxu0 0.0
    %4164 = vmatpush1.msra.mxu0 0.0
    %4165 = vmatprep.subr.mxu0 0.0
    %4166 = vmatpush1.msra.mxu0 0.0
    %4167 = vmatprep.subr.mxu0 0.0
    %4168 = vmatpush1.msra.mxu0 0.0
    %4169 = vmatprep.subr.mxu0 0.0
    %4170 = vmatpush1.msra.mxu0 0.0
    %4171 = vmatprep.subr.mxu0 0.0
    %4172 = vmatpush1.msra.mxu0 0.0
    %4173 = vmatprep.subr.mxu0 0.0
    %4174 = vmatpush1.msra.mxu0 0.0
    %4175 = vmatprep.subr.mxu0 0.0
    %4176 = vmatpush1.msra.mxu0 0.0
    %4177 = vmatprep.subr.mxu0 0.0
    %4178 = vmatpush1.msra.mxu0 0.0
    %4179 = vmatprep.subr.mxu0 0.0
    %4180 = vmatpush1.msra.mxu0 0.0
    %4181 = vmatprep.subr.mxu0 0.0
    %4182 = vmatpush1.msra.mxu0 0.0
    %4183 = vmatprep.subr.mxu0 0.0
    %4184 = vmatpush1.msra.mxu0 0.0
    %4185 = vmatprep.subr.mxu0 0.0
    %4186 = vmatpush1.msra.mxu0 0.0
    %4187 = vmatprep.mubr.f32.mxu0 0.0
    %4188 = vmatmul.mubr.f32.gmra.mrb[0].mxu0 %v949
    %v4189 = vpop.f32.mrb[0].mxu0
    %v4190 = vadd.f32 0.0, %v4189
    %v4191 = vpop.f32.mrb[0].mxu0
    %4192 = vmatprep.mubr.f32.mxu0 0.0
    %4193 = vmatmul.mubr.f32.gmra.mrb[0].mxu0 %v952
    %v4194 = vpop.f32.mrb[0].mxu0
    %v4195 = vadd.f32 0.0, %v4194
    %v4196 = vpop.f32.mrb[0].mxu0
    %4197 = vmatprep.mubr.f32.mxu0 0.0
    %4198 = vmatmul.mubr.f32.gmra.mrb[0].mxu0 %v955
    %v4199 = vpop.f32.mrb[0].mxu0
    %v4200 = vadd.f32 0.0, %v4199
    %v4201 = vpop.f32.mrb[0].mxu0
    %4202 = vmatprep.mubr.f32.mxu0 0.0
    %4203 = vmatmul.mubr.f32.gmra.mrb[0].mxu0 %v958
    %v4204 = vpop.f32.mrb[0].mxu0
    %v4205 = vadd.f32 0.0, %v4204
    %v4206 = vpop.f32.mrb[0].mxu0
    %4207 = vdwg.mxu0
    %v4208 = vmul.f32 %v4190, %v4190
    %v4209 = vmul.f32 %v4195, %v4195
    %v4210 = vmul.f32 %v4200, %v4200
    %v4211 = vmul.f32 %v4205, %v4205
    %4212 = vmatprep.subr.mxu0 0.0
    %4213 = vmatpush1.msra.mxu0 %v4208
    %4214 = vmatprep.subr.mxu0 0.0
    %4215 = vmatpush1.msra.mxu0 %v4209
    %4216 = vmatprep.subr.mxu0 0.0
    %4217 = vmatpush1.msra.mxu0 %v4210
    %4218 = vmatprep.subr.mxu0 0.0
    %4219 = vmatpush1.msra.mxu0 %v4211
    %4220 = vmatprep.subr.mxu0 0.0
    %4221 = vmatpush1.msra.mxu0 0.0
    %4222 = vmatprep.subr.mxu0 0.0
    %4223 = vmatpush1.msra.mxu0 0.0
    %4224 = vmatprep.subr.mxu0 0.0
    %4225 = vmatpush1.msra.mxu0 0.0
    %4226 = vmatprep.subr.mxu0 0.0
    %4227 = vmatpush1.msra.mxu0 0.0
    %4228 = vmatprep.subr.mxu0 0.0
    %4229 = vmatpush1.msra.mxu0 0.0
    %4230 = vmatprep.subr.mxu0 0.0
    %4231 = vmatpush1.msra.mxu0 0.0
    %4232 = vmatprep.subr.mxu0 0.0
    %4233 = vmatpush1.msra.mxu0 0.0
    %4234 = vmatprep.subr.mxu0 0.0
    %4235 = vmatpush1.msra.mxu0 0.0
    %4236 = vmatprep.subr.mxu0 0.0
    %4237 = vmatpush1.msra.mxu0 0.0
    %4238 = vmatprep.subr.mxu0 0.0
    %4239 = vmatpush1.msra.mxu0 0.0
    %4240 = vmatprep.subr.mxu0 0.0
    %4241 = vmatpush1.msra.mxu0 0.0
    %4242 = vmatprep.subr.mxu0 0.0
    %4243 = vmatpush1.msra.mxu0 0.0
    %4244 = vmatprep.subr.mxu0 0.0
    %4245 = vmatpush1.msra.mxu0 0.0
    %4246 = vmatprep.subr.mxu0 0.0
    %4247 = vmatpush1.msra.mxu0 0.0
    %4248 = vmatprep.subr.mxu0 0.0
    %4249 = vmatpush1.msra.mxu0 0.0
    %4250 = vmatprep.subr.mxu0 0.0
    %4251 = vmatpush1.msra.mxu0 0.0
    %4252 = vmatprep.subr.mxu0 0.0
    %4253 = vmatpush1.msra.mxu0 0.0
    %4254 = vmatprep.subr.mxu0 0.0
    %4255 = vmatpush1.msra.mxu0 0.0
    %4256 = vmatprep.subr.mxu0 0.0
    %4257 = vmatpush1.msra.mxu0 0.0
    %4258 = vmatprep.subr.mxu0 0.0
    %4259 = vmatpush1.msra.mxu0 0.0
    %4260 = vmatprep.subr.mxu0 0.0
    %4261 = vmatpush1.msra.mxu0 0.0
    %4262 = vmatprep.subr.mxu0 0.0
    %4263 = vmatpush1.msra.mxu0 0.0
    %4264 = vmatprep.subr.mxu0 0.0
    %4265 = vmatpush1.msra.mxu0 0.0
    %4266 = vmatprep.subr.mxu0 0.0
    %4267 = vmatpush1.msra.mxu0 0.0
    %4268 = vmatprep.subr.mxu0 0.0
    %4269 = vmatpush1.msra.mxu0 0.0
    %4270 = vmatprep.subr.mxu0 0.0
    %4271 = vmatpush1.msra.mxu0 0.0
    %4272 = vmatprep.subr.mxu0 0.0
    %4273 = vmatpush1.msra.mxu0 0.0
    %4274 = vmatprep.subr.mxu0 0.0
    %4275 = vmatpush1.msra.mxu0 0.0
    %4276 = vmatprep.mubr.f32.mxu0 0.0
    %4277 = vmatmul.mubr.f32.gmra.mrb[0].mxu0 %v1051
    %v4278 = vpop.f32.mrb[0].mxu0
    %v4279 = vadd.f32 0.0, %v4278
    %v4280 = vpop.f32.mrb[0].mxu0
    %4281 = vmatprep.mubr.f32.mxu0 0.0
    %4282 = vmatmul.mubr.f32.gmra.mrb[0].mxu0 %v1054
    %v4283 = vpop.f32.mrb[0].mxu0
    %v4284 = vadd.f32 0.0, %v4283
    %v4285 = vpop.f32.mrb[0].mxu0
    %4286 = vmatprep.mubr.f32.mxu0 0.0
    %4287 = vmatmul.mubr.f32.gmra.mrb[0].mxu0 %v1057
    %v4288 = vpop.f32.mrb[0].mxu0
    %v4289 = vadd.f32 0.0, %v4288
    %v4290 = vpop.f32.mrb[0].mxu0
    %4291 = vmatprep.mubr.f32.mxu0 0.0
    %4292 = vmatmul.mubr.f32.gmra.mrb[0].mxu0 %v1060
    %v4293 = vpop.f32.mrb[0].mxu0
    %v4294 = vadd.f32 0.0, %v4293
    %v4295 = vpop.f32.mrb[0].mxu0
    %4296 = vdwg.mxu0
    %v4297 = vxor.u32 %v4279, 2147483648
    %v4298 = vxor.u32 %v4284, 2147483648
    %v4299 = vxor.u32 %v4289, 2147483648
    %v4300 = vxor.u32 %v4294, 2147483648
    %v4301 = vmul.f32 %v4297, 1.442695
    %v4302 = vpow.pop %v4301
    %v4303 = vmul.f32 %v4298, 1.442695
    %v4304 = vpow.pop %v4303
    %v4305 = vmul.f32 %v4299, 1.442695
    %v4306 = vpow.pop %v4305
    %v4307 = vmul.f32 %v4300, 1.442695
    %v4308 = vpow.pop %v4307
    %v4309 = vadd.f32 %v4302, 1.0
    %v4310 = vadd.f32 %v4304, 1.0
    %v4311 = vadd.f32 %v4306, 1.0
    %v4312 = vadd.f32 %v4308, 1.0
    %v4313 = vrcp.pop %v4309
    %v4314 = vmul.f32 1.0, %v4313
    %v4315 = vrcp.pop %v4310
    %v4316 = vmul.f32 1.0, %v4315
    %v4317 = vrcp.pop %v4311
    %v4318 = vmul.f32 1.0, %v4317
    %v4319 = vrcp.pop %v4312
    %v4320 = vmul.f32 1.0, %v4319
    %v4321 = vmul.f32 %v4320, 2.0
    %v4322 = vsub.f32 %v4321, 1.0
    %v4323 = vmul.f32 %v4316, %v3800
    %v4324 = vmul.f32 %v4314, %v4322
    %v4325 = vadd.f32 %v4323, %v4324
    %v4326 = vtanh.pop %v4325
    %v4327 = vmul.f32 %v4318, %v4326
    %4328 = vst [vmem:[#allocation3] sm:$0xff] %v4327
    // Predicated region
    $region22: #{tpu_custom_call.1} parent=1 // pred_check
      _
    $region23: #{tpu_custom_call.1} parent=1 // pred_check_branch
      %4330 = sbr.rel (0) target = $region25
    $region24: #{tpu_custom_call.1} parent=1 // pred_region
      %s4332 = ssub.s32 128, 128
      %4333 = vsyncadd [#allocation4], %s4332
      %s4335 = sshll.u32 [#allocation3], 4
      %s4336 = int_to_ptr.vmem [resolvable:$true] %s4335
      %4338 = dma.vmem_to_hbm [thread:$0]  %s4336, 128, %s5, [#allocation4]
    $region25: #{tpu_custom_call.1} parent=1 // pred_fallthru
      _
    // Predicated region
    $region26: #{tpu_custom_call.1} parent=1 // pred_check
      _
    $region27: #{tpu_custom_call.1} parent=1 // pred_check_branch
      %4340 = sbr.rel (0) target = $region29
    $region28: #{tpu_custom_call.1} parent=1 // pred_region
      %4341 = dma.done [#allocation4], 128
    $region29: #{tpu_custom_call.1} parent=1 // pred_fallthru
      _
    %4342 = vsyncpa [#allocation4], 1

</llo_original>
